<compile_context>
chip_gen: v6e
topology: v6e:2x2x1
jax: 0.10.0
libtpu: 0.0.40
codegen_flags: <defaults>
</compile_context>

<pallas_src>
import functools

import jax
import jax.numpy as jnp
from jax.experimental import pallas as pl
from jax.experimental.pallas import tpu as pltpu


def _sds(start, size, stride):
    """Dynamic slice helper: plain ds when stride == 1, strided ds otherwise."""
    return pl.ds(start, size) if stride == 1 else pl.ds(start, size, stride)


def _bottleneck_ir_kernel(*refs, H, W, Cin, D, stride, has_sc_conv):
    if has_sc_conv:
        (x_ref, bn1_s_ref, bn1_b_ref, w1_ref, alpha_ref, w2_ref,
         bn2_s_ref, bn2_b_ref, scw_ref, scs_ref, scb_ref,
         out_ref, pad1_ref, pad2_ref) = refs
    else:
        (x_ref, bn1_s_ref, bn1_b_ref, w1_ref, alpha_ref, w2_ref,
         bn2_s_ref, bn2_b_ref,
         out_ref, pad1_ref, pad2_ref) = refs
        scw_ref = scs_ref = scb_ref = None

    f32 = jnp.float32
    Ho = (H - 1) // stride + 1
    Wo = (W - 1) // stride + 1

    # ---- zero only the 1-pixel halo of the padded scratches; the interior is
    # fully overwritten every grid step.  Done per-step (cheap: 4 thin stores
    # per buffer) so the batch axis can be "parallel" without relying on a
    # program_id(0) == 0 init that a megacore shard might never execute.
    for ref, C in ((pad1_ref, Cin), (pad2_ref, D)):
        zrow = jnp.zeros((1, W + 2, C), f32)
        ref[pl.ds(0, 1), :, :] = zrow
        ref[pl.ds(H + 1, 1), :, :] = zrow
        zcol = jnp.zeros((H + 2, 1, C), f32)
        ref[:, pl.ds(0, 1), :] = zcol
        ref[:, pl.ds(W + 1, 1), :] = zcol

    # ---- BatchNorm2d(in_channel) (folded affine) -> padded scratch interior
    pad1_ref[pl.ds(1, H), pl.ds(1, W), :] = (
        x_ref[...] * bn1_s_ref[...] + bn1_b_ref[...])

    # ---- Conv3x3, stride 1, pad 1  +  PReLU(depth)
    # 9 whole-image matmuls: (H*W, Cin) x (Cin, D), accumulated in f32.
    acc1 = jnp.zeros((H * W, D), f32)
    for ky in range(3):
        for kx in range(3):
            slab = pad1_ref[pl.ds(ky, H), pl.ds(kx, W), :].reshape(H * W, Cin)
            acc1 = acc1 + jnp.dot(slab, w1_ref[ky, kx],
                                  preferred_element_type=f32)
    acc1 = jnp.where(acc1 > 0, acc1, acc1 * alpha_ref[...])   # per-channel PReLU
    pad2_ref[pl.ds(1, H), pl.ds(1, W), :] = acc1.reshape(H, W, D)

    # ---- Conv3x3, stride `stride`, pad 1  +  BN2
    # Strided window reads: only the Ho*Wo output pixels are ever computed.
    acc2 = jnp.zeros((Ho * Wo, D), f32)
    for ky in range(3):
        for kx in range(3):
            slab = pad2_ref[_sds(ky, Ho, stride), _sds(kx, Wo, stride), :]
            acc2 = acc2 + jnp.dot(slab.reshape(Ho * Wo, D), w2_ref[ky, kx],
                                  preferred_element_type=f32)
    res = acc2 * bn2_s_ref[...] + bn2_b_ref[...]

    # ---- shortcut: strided spatial subsample of x (+ Conv1x1 + BN if needed)
    x_sub = x_ref[_sds(0, Ho, stride), _sds(0, Wo, stride), :]
    x_sub = x_sub.reshape(Ho * Wo, Cin)
    if has_sc_conv:                                            # Conv1x1(stride) + BN
        sc = jnp.dot(x_sub, scw_ref[...], preferred_element_type=f32)
        sc = sc * scs_ref[...] + scb_ref[...]
    else:                                                      # MaxPool2d(1, stride)
        sc = x_sub

    # one lane-dense store per grid step
    out_ref[...] = (res + sc).reshape(Ho, Wo, D).astype(out_ref.dtype)


def bottleneck_ir_forward(x_nchw, params, *, stride):
    x = jnp.transpose(x_nchw, (0, 2, 3, 1)).astype(jnp.float32)   # NCHW -> NHWC
    N, H, W, Cin = x.shape
    D = params['w1'].shape[-1]
    has_sc_conv = 'sc_w' in params
    Ho = (H - 1) // stride + 1
    Wo = (W - 1) // stride + 1

    def row2d(v):
        return v.reshape(1, -1).astype(jnp.float32)

    operands = [x,
                row2d(params['bn1_s']), row2d(params['bn1_b']),
                params['w1'].astype(jnp.float32), row2d(params['alpha']),
                params['w2'].astype(jnp.float32),
                row2d(params['bn2_s']), row2d(params['bn2_b'])]
    if has_sc_conv:
        operands += [params['sc_w'].astype(jnp.float32),
                     row2d(params['sc_s']), row2d(params['sc_b'])]

    def full_spec(shape):
        nd = len(shape)
        return pl.BlockSpec(tuple(shape), lambda n, nd=nd: (0,) * nd)

    x_spec = pl.BlockSpec((None, H, W, Cin), lambda n: (n, 0, 0, 0))
    in_specs = [x_spec] + [full_spec(op.shape) for op in operands[1:]]
    out_spec = pl.BlockSpec((None, Ho, Wo, D), lambda n: (n, 0, 0, 0))
    out_shape = jax.ShapeDtypeStruct((N, Ho, Wo, D), jnp.float32)

    kernel = functools.partial(_bottleneck_ir_kernel, H=H, W=W, Cin=Cin, D=D,
                               stride=stride, has_sc_conv=has_sc_conv)

    out = pl.pallas_call(
        kernel,
        grid=(N,),
        in_specs=in_specs,
        out_specs=out_spec,
        out_shape=out_shape,
        scratch_shapes=[pltpu.VMEM((H + 2, W + 2, Cin), jnp.float32),
                        pltpu.VMEM((H + 2, W + 2, D), jnp.float32)],
        compiler_params=pltpu.CompilerParams(
            dimension_semantics=("parallel",)),
    )(*operands)
    return jnp.transpose(out, (0, 3, 1, 2))                      # NHWC -> NCHW


def init_params(key, in_channel, depth, *, eps=1e-5):
    ks = jax.random.split(key, 7)

    def bn(k, c):  # fold (gamma, beta, mean, var) into scale / bias
        kg, kb, km, kv = jax.random.split(k, 4)
        gamma = 1.0 + 0.2 * jax.random.normal(kg, (c,), jnp.float32)
        beta = 0.1 * jax.random.normal(kb, (c,), jnp.float32)
        mean = 0.1 * jax.random.normal(km, (c,), jnp.float32)
        var = 1.0 + 0.2 * jax.random.uniform(kv, (c,), jnp.float32)
        scale = gamma / jnp.sqrt(var + eps)
        return scale, beta - mean * scale

    p = {}
    p['bn1_s'], p['bn1_b'] = bn(ks[0], in_channel)
    p['w1'] = 0.15 * jax.random.normal(ks[1], (3, 3, in_channel, depth), jnp.float32)  # HWIO
    p['alpha'] = 0.25 + 0.1 * jax.random.uniform(ks[2], (depth,), jnp.float32)
    p['w2'] = 0.1 * jax.random.normal(ks[3], (3, 3, depth, depth), jnp.float32)        # HWIO
    p['bn2_s'], p['bn2_b'] = bn(ks[4], depth)
    if in_channel != depth:
        p['sc_w'] = 0.2 * jax.random.normal(ks[5], (in_channel, depth), jnp.float32)   # (Cin, D)
        p['sc_s'], p['sc_b'] = bn(ks[6], depth)
    return p


def ref_forward(x_nchw, p, *, stride):
    """Pure-JAX reference (NHWC convs) mirroring the PyTorch forward."""
    hp = jax.lax.Precision.HIGHEST
    dn = ('NHWC', 'HWIO', 'NHWC')
    x = jnp.transpose(x_nchw, (0, 2, 3, 1)).astype(jnp.float32)
    t = x * p['bn1_s'] + p['bn1_b']
    y = jax.lax.conv_general_dilated(t, p['w1'], (1, 1), ((1, 1), (1, 1)),
                                     dimension_numbers=dn, precision=hp)
    y = jnp.where(y > 0, y, y * p['alpha'])
    y = jax.lax.conv_general_dilated(y, p['w2'], (stride, stride), ((1, 1), (1, 1)),
                                     dimension_numbers=dn, precision=hp)
    res = y * p['bn2_s'] + p['bn2_b']
    if 'sc_w' in p:
        sc = jax.lax.conv_general_dilated(x, p['sc_w'][None, None], (stride, stride),
                                          ((0, 0), (0, 0)), dimension_numbers=dn,
                                          precision=hp)
        sc = sc * p['sc_s'] + p['sc_b']
    else:
        sc = x[:, ::stride, ::stride, :]     # MaxPool2d(kernel=1, stride)
    return jnp.transpose(res + sc, (0, 3, 1, 2))


if __name__ == "__main__":
    key = jax.random.PRNGKey(0)
    k_x1, k_p1, k_x2, k_p2 = jax.random.split(key, 4)

    # Case 1: in_channel != depth -> Conv1x1 + BN shortcut, stride 2.
    in_c, depth, stride = 4, 8, 2
    x1 = jax.random.normal(k_x1, (2, in_c, 16, 16), jnp.float32)
    p1 = init_params(k_p1, in_c, depth)
    y1 = jax.block_until_ready(bottleneck_ir_forward(x1, p1, stride=stride))
    r1 = ref_forward(x1, p1, stride=stride)
    assert y1.shape == (2, depth, 8, 8), y1.shape
    assert jnp.allclose(y1, r1, atol=2e-2, rtol=2e-2), float(jnp.max(jnp.abs(y1 - r1)))

    # Case 2: in_channel == depth -> MaxPool2d(1, stride) shortcut, stride 2.
    in_c2, depth2, stride2 = 8, 8, 2
    x2 = jax.random.normal(k_x2, (2, in_c2, 16, 16), jnp.float32)
    p2 = init_params(k_p2, in_c2, depth2)
    y2 = jax.block_until_ready(bottleneck_ir_forward(x2, p2, stride=stride2))
    r2 = ref_forward(x2, p2, stride=stride2)
    assert y2.shape == (2, depth2, 8, 8), y2.shape
    assert jnp.allclose(y2, r2, atol=2e-2, rtol=2e-2), float(jnp.max(jnp.abs(y2 - r2)))

    print("KERNEL_OK")
</pallas_src>

<mosaic_0001>
module attributes {stable_mosaic.version = 11 : i64} {
  func.func @_bottleneck_ir_kernel(%arg0: i32, %arg1: memref<1x16x16x4xf32, #tpu.memory_space<vmem>>, %arg2: memref<1x4xf32, #tpu.memory_space<vmem>>, %arg3: memref<1x4xf32, #tpu.memory_space<vmem>>, %arg4: memref<3x3x4x8xf32, #tpu.memory_space<vmem>>, %arg5: memref<1x8xf32, #tpu.memory_space<vmem>>, %arg6: memref<3x3x8x8xf32, #tpu.memory_space<vmem>>, %arg7: memref<1x8xf32, #tpu.memory_space<vmem>>, %arg8: memref<1x8xf32, #tpu.memory_space<vmem>>, %arg9: memref<4x8xf32, #tpu.memory_space<vmem>>, %arg10: memref<1x8xf32, #tpu.memory_space<vmem>>, %arg11: memref<1x8xf32, #tpu.memory_space<vmem>>, %arg12: memref<1x8x8x8xf32, #tpu.memory_space<vmem>>, %arg13: memref<18x18x4xf32, #tpu.memory_space<vmem>>, %arg14: memref<18x18x8xf32, #tpu.memory_space<vmem>>) attributes {dimension_semantics = [#tpu.dimension_semantics<parallel>], iteration_bounds = array<i64: 2>, scalar_prefetch = 0 : i64, scratch_operands = 2 : i64, tpu.core_type = #tpu.core_type<tc>, window_params = [{transform_indices = @transform_0, window_bounds = array<i64: 1, 16, 16, 4>}, {pipeline_mode = #tpu.pipeline_mode<synchronous>, transform_indices = @transform_1, window_bounds = array<i64: 1, 4>}, {pipeline_mode = #tpu.pipeline_mode<synchronous>, transform_indices = @transform_2, window_bounds = array<i64: 1, 4>}, {pipeline_mode = #tpu.pipeline_mode<synchronous>, transform_indices = @transform_3, window_bounds = array<i64: 3, 3, 4, 8>}, {pipeline_mode = #tpu.pipeline_mode<synchronous>, transform_indices = @transform_4, window_bounds = array<i64: 1, 8>}, {pipeline_mode = #tpu.pipeline_mode<synchronous>, transform_indices = @transform_5, window_bounds = array<i64: 3, 3, 8, 8>}, {pipeline_mode = #tpu.pipeline_mode<synchronous>, transform_indices = @transform_6, window_bounds = array<i64: 1, 8>}, {pipeline_mode = #tpu.pipeline_mode<synchronous>, transform_indices = @transform_7, window_bounds = array<i64: 1, 8>}, {pipeline_mode = #tpu.pipeline_mode<synchronous>, transform_indices = @transform_8, window_bounds = array<i64: 4, 8>}, {pipeline_mode = #tpu.pipeline_mode<synchronous>, transform_indices = @transform_9, window_bounds = array<i64: 1, 8>}, {pipeline_mode = #tpu.pipeline_mode<synchronous>, transform_indices = @transform_10, window_bounds = array<i64: 1, 8>}, {transform_indices = @transform_11, window_bounds = array<i64: 1, 8, 8, 8>}]} {
    %cst = arith.constant 0.000000e+00 : f32
    %0 = vector.broadcast %cst : f32 to vector<1x18x4xf32>
    %c0 = arith.constant 0 : index
    %c0_0 = arith.constant 0 : index
    %c0_1 = arith.constant 0 : index
    %1 = vector.load %arg13[%c0, %c0_0, %c0_1] : memref<18x18x4xf32, #tpu.memory_space<vmem>>, vector<1x18x4xf32>
    tpu.vector_store %arg13[%c0, %c0_0, %c0_1], %0 {strides = array<i32>} : memref<18x18x4xf32, #tpu.memory_space<vmem>>, vector<1x18x4xf32>,
    %c17 = arith.constant 17 : index
    %c0_2 = arith.constant 0 : index
    %c0_3 = arith.constant 0 : index
    %2 = vector.load %arg13[%c17, %c0_2, %c0_3] : memref<18x18x4xf32, #tpu.memory_space<vmem>>, vector<1x18x4xf32>
    tpu.vector_store %arg13[%c17, %c0_2, %c0_3], %0 {strides = array<i32>} : memref<18x18x4xf32, #tpu.memory_space<vmem>>, vector<1x18x4xf32>,
    %cst_4 = arith.constant 0.000000e+00 : f32
    %3 = vector.broadcast %cst_4 : f32 to vector<18x1x4xf32>
    %c0_5 = arith.constant 0 : index
    %c0_6 = arith.constant 0 : index
    %c0_7 = arith.constant 0 : index
    %4 = vector.load %arg13[%c0_5, %c0_6, %c0_7] : memref<18x18x4xf32, #tpu.memory_space<vmem>>, vector<18x1x4xf32>
    tpu.vector_store %arg13[%c0_5, %c0_6, %c0_7], %3 {strides = array<i32>} : memref<18x18x4xf32, #tpu.memory_space<vmem>>, vector<18x1x4xf32>,
    %c0_8 = arith.constant 0 : index
    %c17_9 = arith.constant 17 : index
    %c0_10 = arith.constant 0 : index
    %5 = vector.load %arg13[%c0_8, %c17_9, %c0_10] : memref<18x18x4xf32, #tpu.memory_space<vmem>>, vector<18x1x4xf32>
    tpu.vector_store %arg13[%c0_8, %c17_9, %c0_10], %3 {strides = array<i32>} : memref<18x18x4xf32, #tpu.memory_space<vmem>>, vector<18x1x4xf32>,
    %cst_11 = arith.constant 0.000000e+00 : f32
    %6 = vector.broadcast %cst_11 : f32 to vector<1x18x8xf32>
    %c0_12 = arith.constant 0 : index
    %c0_13 = arith.constant 0 : index
    %c0_14 = arith.constant 0 : index
    %7 = vector.load %arg14[%c0_12, %c0_13, %c0_14] : memref<18x18x8xf32, #tpu.memory_space<vmem>>, vector<1x18x8xf32>
    tpu.vector_store %arg14[%c0_12, %c0_13, %c0_14], %6 {strides = array<i32>} : memref<18x18x8xf32, #tpu.memory_space<vmem>>, vector<1x18x8xf32>,
    %c17_15 = arith.constant 17 : index
    %c0_16 = arith.constant 0 : index
    %c0_17 = arith.constant 0 : index
    %8 = vector.load %arg14[%c17_15, %c0_16, %c0_17] : memref<18x18x8xf32, #tpu.memory_space<vmem>>, vector<1x18x8xf32>
    tpu.vector_store %arg14[%c17_15, %c0_16, %c0_17], %6 {strides = array<i32>} : memref<18x18x8xf32, #tpu.memory_space<vmem>>, vector<1x18x8xf32>,
    %cst_18 = arith.constant 0.000000e+00 : f32
    %9 = vector.broadcast %cst_18 : f32 to vector<18x1x8xf32>
    %c0_19 = arith.constant 0 : index
    %c0_20 = arith.constant 0 : index
    %c0_21 = arith.constant 0 : index
    %10 = vector.load %arg14[%c0_19, %c0_20, %c0_21] : memref<18x18x8xf32, #tpu.memory_space<vmem>>, vector<18x1x8xf32>
    tpu.vector_store %arg14[%c0_19, %c0_20, %c0_21], %9 {strides = array<i32>} : memref<18x18x8xf32, #tpu.memory_space<vmem>>, vector<18x1x8xf32>,
    %c0_22 = arith.constant 0 : index
    %c17_23 = arith.constant 17 : index
    %c0_24 = arith.constant 0 : index
    %11 = vector.load %arg14[%c0_22, %c17_23, %c0_24] : memref<18x18x8xf32, #tpu.memory_space<vmem>>, vector<18x1x8xf32>
    tpu.vector_store %arg14[%c0_22, %c17_23, %c0_24], %9 {strides = array<i32>} : memref<18x18x8xf32, #tpu.memory_space<vmem>>, vector<18x1x8xf32>,
    %c0_25 = arith.constant 0 : index
    %c0_26 = arith.constant 0 : index
    %c0_27 = arith.constant 0 : index
    %c0_28 = arith.constant 0 : index
    %12 = vector.load %arg1[%c0_25, %c0_26, %c0_27, %c0_28] : memref<1x16x16x4xf32, #tpu.memory_space<vmem>>, vector<1x16x16x4xf32>
    %13 = vector.shape_cast %12 : vector<1x16x16x4xf32> to vector<16x16x4xf32>
    %c0_29 = arith.constant 0 : index
    %c0_30 = arith.constant 0 : index
    %14 = vector.load %arg2[%c0_29, %c0_30] : memref<1x4xf32, #tpu.memory_space<vmem>>, vector<1x4xf32>
    %15 = vector.shape_cast %14 : vector<1x4xf32> to vector<1x1x4xf32>
    %16 = vector.broadcast %15 : vector<1x1x4xf32> to vector<16x16x4xf32>
    %17 = arith.mulf %13, %16 : vector<16x16x4xf32>
    %c0_31 = arith.constant 0 : index
    %c0_32 = arith.constant 0 : index
    %18 = vector.load %arg3[%c0_31, %c0_32] : memref<1x4xf32, #tpu.memory_space<vmem>>, vector<1x4xf32>
    %19 = vector.shape_cast %18 : vector<1x4xf32> to vector<1x1x4xf32>
    %20 = vector.broadcast %19 : vector<1x1x4xf32> to vector<16x16x4xf32>
    %21 = arith.addf %17, %20 : vector<16x16x4xf32>
    %c1 = arith.constant 1 : index
    %c1_33 = arith.constant 1 : index
    %c0_34 = arith.constant 0 : index
    %22 = vector.load %arg13[%c1, %c1_33, %c0_34] : memref<18x18x4xf32, #tpu.memory_space<vmem>>, vector<16x16x4xf32>
    tpu.vector_store %arg13[%c1, %c1_33, %c0_34], %21 {strides = array<i32>} : memref<18x18x4xf32, #tpu.memory_space<vmem>>, vector<16x16x4xf32>,
    %cst_35 = arith.constant 0.000000e+00 : f32
    %23 = vector.broadcast %cst_35 : f32 to vector<256x8xf32>
    %c0_36 = arith.constant 0 : index
    %c0_37 = arith.constant 0 : index
    %c0_38 = arith.constant 0 : index
    %24 = vector.load %arg13[%c0_36, %c0_37, %c0_38] : memref<18x18x4xf32, #tpu.memory_space<vmem>>, vector<16x16x4xf32>
    %25 = vector.shape_cast %24 : vector<16x16x4xf32> to vector<256x4xf32>
    %c0_39 = arith.constant 0 : index
    %c0_40 = arith.constant 0 : index
    %c0_41 = arith.constant 0 : index
    %c0_42 = arith.constant 0 : index
    %26 = vector.load %arg4[%c0_39, %c0_40, %c0_41, %c0_42] : memref<3x3x4x8xf32, #tpu.memory_space<vmem>>, vector<1x1x4x8xf32>
    %27 = vector.shape_cast %26 : vector<1x1x4x8xf32> to vector<4x8xf32>
    %cst_43 = arith.constant dense<0.000000e+00> : vector<256x8xf32>
    %28 = tpu.matmul %25, %27, %cst_43 {dimension_numbers = #tpu.dot_dimension_numbers<[1], [0], [0], [1], [0, 0, 1, 1], [], []>} : vector<256x4xf32>, vector<4x8xf32>, vector<256x8xf32> -> vector<256x8xf32>
    %29 = arith.addf %23, %28 : vector<256x8xf32>
    %c0_44 = arith.constant 0 : index
    %c1_45 = arith.constant 1 : index
    %c0_46 = arith.constant 0 : index
    %30 = vector.load %arg13[%c0_44, %c1_45, %c0_46] : memref<18x18x4xf32, #tpu.memory_space<vmem>>, vector<16x16x4xf32>
    %31 = vector.shape_cast %30 : vector<16x16x4xf32> to vector<256x4xf32>
    %c0_47 = arith.constant 0 : index
    %c1_48 = arith.constant 1 : index
    %c0_49 = arith.constant 0 : index
    %c0_50 = arith.constant 0 : index
    %32 = vector.load %arg4[%c0_47, %c1_48, %c0_49, %c0_50] : memref<3x3x4x8xf32, #tpu.memory_space<vmem>>, vector<1x1x4x8xf32>
    %33 = vector.shape_cast %32 : vector<1x1x4x8xf32> to vector<4x8xf32>
    %cst_51 = arith.constant dense<0.000000e+00> : vector<256x8xf32>
    %34 = tpu.matmul %31, %33, %cst_51 {dimension_numbers = #tpu.dot_dimension_numbers<[1], [0], [0], [1], [0, 0, 1, 1], [], []>} : vector<256x4xf32>, vector<4x8xf32>, vector<256x8xf32> -> vector<256x8xf32>
    %35 = arith.addf %29, %34 : vector<256x8xf32>
    %c0_52 = arith.constant 0 : index
    %c2 = arith.constant 2 : index
    %c0_53 = arith.constant 0 : index
    %36 = vector.load %arg13[%c0_52, %c2, %c0_53] : memref<18x18x4xf32, #tpu.memory_space<vmem>>, vector<16x16x4xf32>
    %37 = vector.shape_cast %36 : vector<16x16x4xf32> to vector<256x4xf32>
    %c0_54 = arith.constant 0 : index
    %c2_55 = arith.constant 2 : index
    %c0_56 = arith.constant 0 : index
    %c0_57 = arith.constant 0 : index
    %38 = vector.load %arg4[%c0_54, %c2_55, %c0_56, %c0_57] : memref<3x3x4x8xf32, #tpu.memory_space<vmem>>, vector<1x1x4x8xf32>
    %39 = vector.shape_cast %38 : vector<1x1x4x8xf32> to vector<4x8xf32>
    %cst_58 = arith.constant dense<0.000000e+00> : vector<256x8xf32>
    %40 = tpu.matmul %37, %39, %cst_58 {dimension_numbers = #tpu.dot_dimension_numbers<[1], [0], [0], [1], [0, 0, 1, 1], [], []>} : vector<256x4xf32>, vector<4x8xf32>, vector<256x8xf32> -> vector<256x8xf32>
    %41 = arith.addf %35, %40 : vector<256x8xf32>
    %c1_59 = arith.constant 1 : index
    %c0_60 = arith.constant 0 : index
    %c0_61 = arith.constant 0 : index
    %42 = vector.load %arg13[%c1_59, %c0_60, %c0_61] : memref<18x18x4xf32, #tpu.memory_space<vmem>>, vector<16x16x4xf32>
    %43 = vector.shape_cast %42 : vector<16x16x4xf32> to vector<256x4xf32>
    %c1_62 = arith.constant 1 : index
    %c0_63 = arith.constant 0 : index
    %c0_64 = arith.constant 0 : index
    %c0_65 = arith.constant 0 : index
    %44 = vector.load %arg4[%c1_62, %c0_63, %c0_64, %c0_65] : memref<3x3x4x8xf32, #tpu.memory_space<vmem>>, vector<1x1x4x8xf32>
    %45 = vector.shape_cast %44 : vector<1x1x4x8xf32> to vector<4x8xf32>
    %cst_66 = arith.constant dense<0.000000e+00> : vector<256x8xf32>
    %46 = tpu.matmul %43, %45, %cst_66 {dimension_numbers = #tpu.dot_dimension_numbers<[1], [0], [0], [1], [0, 0, 1, 1], [], []>} : vector<256x4xf32>, vector<4x8xf32>, vector<256x8xf32> -> vector<256x8xf32>
    %47 = arith.addf %41, %46 : vector<256x8xf32>
    %c1_67 = arith.constant 1 : index
    %c1_68 = arith.constant 1 : index
    %c0_69 = arith.constant 0 : index
    %48 = vector.load %arg13[%c1_67, %c1_68, %c0_69] : memref<18x18x4xf32, #tpu.memory_space<vmem>>, vector<16x16x4xf32>
    %49 = vector.shape_cast %48 : vector<16x16x4xf32> to vector<256x4xf32>
    %c1_70 = arith.constant 1 : index
    %c1_71 = arith.constant 1 : index
    %c0_72 = arith.constant 0 : index
    %c0_73 = arith.constant 0 : index
    %50 = vector.load %arg4[%c1_70, %c1_71, %c0_72, %c0_73] : memref<3x3x4x8xf32, #tpu.memory_space<vmem>>, vector<1x1x4x8xf32>
    %51 = vector.shape_cast %50 : vector<1x1x4x8xf32> to vector<4x8xf32>
    %cst_74 = arith.constant dense<0.000000e+00> : vector<256x8xf32>
    %52 = tpu.matmul %49, %51, %cst_74 {dimension_numbers = #tpu.dot_dimension_numbers<[1], [0], [0], [1], [0, 0, 1, 1], [], []>} : vector<256x4xf32>, vector<4x8xf32>, vector<256x8xf32> -> vector<256x8xf32>
    %53 = arith.addf %47, %52 : vector<256x8xf32>
    %c1_75 = arith.constant 1 : index
    %c2_76 = arith.constant 2 : index
    %c0_77 = arith.constant 0 : index
    %54 = vector.load %arg13[%c1_75, %c2_76, %c0_77] : memref<18x18x4xf32, #tpu.memory_space<vmem>>, vector<16x16x4xf32>
    %55 = vector.shape_cast %54 : vector<16x16x4xf32> to vector<256x4xf32>
    %c1_78 = arith.constant 1 : index
    %c2_79 = arith.constant 2 : index
    %c0_80 = arith.constant 0 : index
    %c0_81 = arith.constant 0 : index
    %56 = vector.load %arg4[%c1_78, %c2_79, %c0_80, %c0_81] : memref<3x3x4x8xf32, #tpu.memory_space<vmem>>, vector<1x1x4x8xf32>
    %57 = vector.shape_cast %56 : vector<1x1x4x8xf32> to vector<4x8xf32>
    %cst_82 = arith.constant dense<0.000000e+00> : vector<256x8xf32>
    %58 = tpu.matmul %55, %57, %cst_82 {dimension_numbers = #tpu.dot_dimension_numbers<[1], [0], [0], [1], [0, 0, 1, 1], [], []>} : vector<256x4xf32>, vector<4x8xf32>, vector<256x8xf32> -> vector<256x8xf32>
    %59 = arith.addf %53, %58 : vector<256x8xf32>
    %c2_83 = arith.constant 2 : index
    %c0_84 = arith.constant 0 : index
    %c0_85 = arith.constant 0 : index
    %60 = vector.load %arg13[%c2_83, %c0_84, %c0_85] : memref<18x18x4xf32, #tpu.memory_space<vmem>>, vector<16x16x4xf32>
    %61 = vector.shape_cast %60 : vector<16x16x4xf32> to vector<256x4xf32>
    %c2_86 = arith.constant 2 : index
    %c0_87 = arith.constant 0 : index
    %c0_88 = arith.constant 0 : index
    %c0_89 = arith.constant 0 : index
    %62 = vector.load %arg4[%c2_86, %c0_87, %c0_88, %c0_89] : memref<3x3x4x8xf32, #tpu.memory_space<vmem>>, vector<1x1x4x8xf32>
    %63 = vector.shape_cast %62 : vector<1x1x4x8xf32> to vector<4x8xf32>
    %cst_90 = arith.constant dense<0.000000e+00> : vector<256x8xf32>
    %64 = tpu.matmul %61, %63, %cst_90 {dimension_numbers = #tpu.dot_dimension_numbers<[1], [0], [0], [1], [0, 0, 1, 1], [], []>} : vector<256x4xf32>, vector<4x8xf32>, vector<256x8xf32> -> vector<256x8xf32>
    %65 = arith.addf %59, %64 : vector<256x8xf32>
    %c2_91 = arith.constant 2 : index
    %c1_92 = arith.constant 1 : index
    %c0_93 = arith.constant 0 : index
    %66 = vector.load %arg13[%c2_91, %c1_92, %c0_93] : memref<18x18x4xf32, #tpu.memory_space<vmem>>, vector<16x16x4xf32>
    %67 = vector.shape_cast %66 : vector<16x16x4xf32> to vector<256x4xf32>
    %c2_94 = arith.constant 2 : index
    %c1_95 = arith.constant 1 : index
    %c0_96 = arith.constant 0 : index
    %c0_97 = arith.constant 0 : index
    %68 = vector.load %arg4[%c2_94, %c1_95, %c0_96, %c0_97] : memref<3x3x4x8xf32, #tpu.memory_space<vmem>>, vector<1x1x4x8xf32>
    %69 = vector.shape_cast %68 : vector<1x1x4x8xf32> to vector<4x8xf32>
    %cst_98 = arith.constant dense<0.000000e+00> : vector<256x8xf32>
    %70 = tpu.matmul %67, %69, %cst_98 {dimension_numbers = #tpu.dot_dimension_numbers<[1], [0], [0], [1], [0, 0, 1, 1], [], []>} : vector<256x4xf32>, vector<4x8xf32>, vector<256x8xf32> -> vector<256x8xf32>
    %71 = arith.addf %65, %70 : vector<256x8xf32>
    %c2_99 = arith.constant 2 : index
    %c2_100 = arith.constant 2 : index
    %c0_101 = arith.constant 0 : index
    %72 = vector.load %arg13[%c2_99, %c2_100, %c0_101] : memref<18x18x4xf32, #tpu.memory_space<vmem>>, vector<16x16x4xf32>
    %73 = vector.shape_cast %72 : vector<16x16x4xf32> to vector<256x4xf32>
    %c2_102 = arith.constant 2 : index
    %c2_103 = arith.constant 2 : index
    %c0_104 = arith.constant 0 : index
    %c0_105 = arith.constant 0 : index
    %74 = vector.load %arg4[%c2_102, %c2_103, %c0_104, %c0_105] : memref<3x3x4x8xf32, #tpu.memory_space<vmem>>, vector<1x1x4x8xf32>
    %75 = vector.shape_cast %74 : vector<1x1x4x8xf32> to vector<4x8xf32>
    %cst_106 = arith.constant dense<0.000000e+00> : vector<256x8xf32>
    %76 = tpu.matmul %73, %75, %cst_106 {dimension_numbers = #tpu.dot_dimension_numbers<[1], [0], [0], [1], [0, 0, 1, 1], [], []>} : vector<256x4xf32>, vector<4x8xf32>, vector<256x8xf32> -> vector<256x8xf32>
    %77 = arith.addf %71, %76 : vector<256x8xf32>
    %cst_107 = arith.constant 0.000000e+00 : f32
    %78 = vector.broadcast %cst_107 : f32 to vector<256x8xf32>
    %79 = arith.cmpf ogt, %77, %78 : vector<256x8xf32>
    %c0_108 = arith.constant 0 : index
    %c0_109 = arith.constant 0 : index
    %80 = vector.load %arg5[%c0_108, %c0_109] : memref<1x8xf32, #tpu.memory_space<vmem>>, vector<1x8xf32>
    %81 = vector.broadcast %80 : vector<1x8xf32> to vector<256x8xf32>
    %82 = arith.mulf %77, %81 : vector<256x8xf32>
    %83 = arith.select %79, %77, %82 : vector<256x8xi1>, vector<256x8xf32>
    %84 = vector.shape_cast %83 : vector<256x8xf32> to vector<16x16x8xf32>
    %c1_110 = arith.constant 1 : index
    %c1_111 = arith.constant 1 : index
    %c0_112 = arith.constant 0 : index
    %85 = vector.load %arg14[%c1_110, %c1_111, %c0_112] : memref<18x18x8xf32, #tpu.memory_space<vmem>>, vector<16x16x8xf32>
    tpu.vector_store %arg14[%c1_110, %c1_111, %c0_112], %84 {strides = array<i32>} : memref<18x18x8xf32, #tpu.memory_space<vmem>>, vector<16x16x8xf32>,
    %cst_113 = arith.constant 0.000000e+00 : f32
    %86 = vector.broadcast %cst_113 : f32 to vector<64x8xf32>
    %c0_114 = arith.constant 0 : index
    %c0_115 = arith.constant 0 : index
    %c0_116 = arith.constant 0 : index
    %87 = tpu.strided_load %arg14[%c0_114, %c0_115, %c0_116] {strides = array<i32: 2, 2, 1>} : memref<18x18x8xf32, #tpu.memory_space<vmem>>, vector<8x8x8xf32>
    %88 = vector.shape_cast %87 : vector<8x8x8xf32> to vector<64x8xf32>
    %c0_117 = arith.constant 0 : index
    %c0_118 = arith.constant 0 : index
    %c0_119 = arith.constant 0 : index
    %c0_120 = arith.constant 0 : index
    %89 = vector.load %arg6[%c0_117, %c0_118, %c0_119, %c0_120] : memref<3x3x8x8xf32, #tpu.memory_space<vmem>>, vector<1x1x8x8xf32>
    %90 = vector.shape_cast %89 : vector<1x1x8x8xf32> to vector<8x8xf32>
    %cst_121 = arith.constant dense<0.000000e+00> : vector<64x8xf32>
    %91 = tpu.matmul %88, %90, %cst_121 {dimension_numbers = #tpu.dot_dimension_numbers<[1], [0], [0], [1], [0, 0, 1, 1], [], []>} : vector<64x8xf32>, vector<8x8xf32>, vector<64x8xf32> -> vector<64x8xf32>
    %92 = arith.addf %86, %91 : vector<64x8xf32>
    %c0_122 = arith.constant 0 : index
    %c1_123 = arith.constant 1 : index
    %c0_124 = arith.constant 0 : index
    %93 = tpu.strided_load %arg14[%c0_122, %c1_123, %c0_124] {strides = array<i32: 2, 2, 1>} : memref<18x18x8xf32, #tpu.memory_space<vmem>>, vector<8x8x8xf32>
    %94 = vector.shape_cast %93 : vector<8x8x8xf32> to vector<64x8xf32>
    %c0_125 = arith.constant 0 : index
    %c1_126 = arith.constant 1 : index
    %c0_127 = arith.constant 0 : index
    %c0_128 = arith.constant 0 : index
    %95 = vector.load %arg6[%c0_125, %c1_126, %c0_127, %c0_128] : memref<3x3x8x8xf32, #tpu.memory_space<vmem>>, vector<1x1x8x8xf32>
    %96 = vector.shape_cast %95 : vector<1x1x8x8xf32> to vector<8x8xf32>
    %cst_129 = arith.constant dense<0.000000e+00> : vector<64x8xf32>
    %97 = tpu.matmul %94, %96, %cst_129 {dimension_numbers = #tpu.dot_dimension_numbers<[1], [0], [0], [1], [0, 0, 1, 1], [], []>} : vector<64x8xf32>, vector<8x8xf32>, vector<64x8xf32> -> vector<64x8xf32>
    %98 = arith.addf %92, %97 : vector<64x8xf32>
    %c0_130 = arith.constant 0 : index
    %c2_131 = arith.constant 2 : index
    %c0_132 = arith.constant 0 : index
    %99 = tpu.strided_load %arg14[%c0_130, %c2_131, %c0_132] {strides = array<i32: 2, 2, 1>} : memref<18x18x8xf32, #tpu.memory_space<vmem>>, vector<8x8x8xf32>
    %100 = vector.shape_cast %99 : vector<8x8x8xf32> to vector<64x8xf32>
    %c0_133 = arith.constant 0 : index
    %c2_134 = arith.constant 2 : index
    %c0_135 = arith.constant 0 : index
    %c0_136 = arith.constant 0 : index
    %101 = vector.load %arg6[%c0_133, %c2_134, %c0_135, %c0_136] : memref<3x3x8x8xf32, #tpu.memory_space<vmem>>, vector<1x1x8x8xf32>
    %102 = vector.shape_cast %101 : vector<1x1x8x8xf32> to vector<8x8xf32>
    %cst_137 = arith.constant dense<0.000000e+00> : vector<64x8xf32>
    %103 = tpu.matmul %100, %102, %cst_137 {dimension_numbers = #tpu.dot_dimension_numbers<[1], [0], [0], [1], [0, 0, 1, 1], [], []>} : vector<64x8xf32>, vector<8x8xf32>, vector<64x8xf32> -> vector<64x8xf32>
    %104 = arith.addf %98, %103 : vector<64x8xf32>
    %c1_138 = arith.constant 1 : index
    %c0_139 = arith.constant 0 : index
    %c0_140 = arith.constant 0 : index
    %105 = tpu.strided_load %arg14[%c1_138, %c0_139, %c0_140] {strides = array<i32: 2, 2, 1>} : memref<18x18x8xf32, #tpu.memory_space<vmem>>, vector<8x8x8xf32>
    %106 = vector.shape_cast %105 : vector<8x8x8xf32> to vector<64x8xf32>
    %c1_141 = arith.constant 1 : index
    %c0_142 = arith.constant 0 : index
    %c0_143 = arith.constant 0 : index
    %c0_144 = arith.constant 0 : index
    %107 = vector.load %arg6[%c1_141, %c0_142, %c0_143, %c0_144] : memref<3x3x8x8xf32, #tpu.memory_space<vmem>>, vector<1x1x8x8xf32>
    %108 = vector.shape_cast %107 : vector<1x1x8x8xf32> to vector<8x8xf32>
    %cst_145 = arith.constant dense<0.000000e+00> : vector<64x8xf32>
    %109 = tpu.matmul %106, %108, %cst_145 {dimension_numbers = #tpu.dot_dimension_numbers<[1], [0], [0], [1], [0, 0, 1, 1], [], []>} : vector<64x8xf32>, vector<8x8xf32>, vector<64x8xf32> -> vector<64x8xf32>
    %110 = arith.addf %104, %109 : vector<64x8xf32>
    %c1_146 = arith.constant 1 : index
    %c1_147 = arith.constant 1 : index
    %c0_148 = arith.constant 0 : index
    %111 = tpu.strided_load %arg14[%c1_146, %c1_147, %c0_148] {strides = array<i32: 2, 2, 1>} : memref<18x18x8xf32, #tpu.memory_space<vmem>>, vector<8x8x8xf32>
    %112 = vector.shape_cast %111 : vector<8x8x8xf32> to vector<64x8xf32>
    %c1_149 = arith.constant 1 : index
    %c1_150 = arith.constant 1 : index
    %c0_151 = arith.constant 0 : index
    %c0_152 = arith.constant 0 : index
    %113 = vector.load %arg6[%c1_149, %c1_150, %c0_151, %c0_152] : memref<3x3x8x8xf32, #tpu.memory_space<vmem>>, vector<1x1x8x8xf32>
    %114 = vector.shape_cast %113 : vector<1x1x8x8xf32> to vector<8x8xf32>
    %cst_153 = arith.constant dense<0.000000e+00> : vector<64x8xf32>
    %115 = tpu.matmul %112, %114, %cst_153 {dimension_numbers = #tpu.dot_dimension_numbers<[1], [0], [0], [1], [0, 0, 1, 1], [], []>} : vector<64x8xf32>, vector<8x8xf32>, vector<64x8xf32> -> vector<64x8xf32>
    %116 = arith.addf %110, %115 : vector<64x8xf32>
    %c1_154 = arith.constant 1 : index
    %c2_155 = arith.constant 2 : index
    %c0_156 = arith.constant 0 : index
    %117 = tpu.strided_load %arg14[%c1_154, %c2_155, %c0_156] {strides = array<i32: 2, 2, 1>} : memref<18x18x8xf32, #tpu.memory_space<vmem>>, vector<8x8x8xf32>
    %118 = vector.shape_cast %117 : vector<8x8x8xf32> to vector<64x8xf32>
    %c1_157 = arith.constant 1 : index
    %c2_158 = arith.constant 2 : index
    %c0_159 = arith.constant 0 : index
    %c0_160 = arith.constant 0 : index
    %119 = vector.load %arg6[%c1_157, %c2_158, %c0_159, %c0_160] : memref<3x3x8x8xf32, #tpu.memory_space<vmem>>, vector<1x1x8x8xf32>
    %120 = vector.shape_cast %119 : vector<1x1x8x8xf32> to vector<8x8xf32>
    %cst_161 = arith.constant dense<0.000000e+00> : vector<64x8xf32>
    %121 = tpu.matmul %118, %120, %cst_161 {dimension_numbers = #tpu.dot_dimension_numbers<[1], [0], [0], [1], [0, 0, 1, 1], [], []>} : vector<64x8xf32>, vector<8x8xf32>, vector<64x8xf32> -> vector<64x8xf32>
    %122 = arith.addf %116, %121 : vector<64x8xf32>
    %c2_162 = arith.constant 2 : index
    %c0_163 = arith.constant 0 : index
    %c0_164 = arith.constant 0 : index
    %123 = tpu.strided_load %arg14[%c2_162, %c0_163, %c0_164] {strides = array<i32: 2, 2, 1>} : memref<18x18x8xf32, #tpu.memory_space<vmem>>, vector<8x8x8xf32>
    %124 = vector.shape_cast %123 : vector<8x8x8xf32> to vector<64x8xf32>
    %c2_165 = arith.constant 2 : index
    %c0_166 = arith.constant 0 : index
    %c0_167 = arith.constant 0 : index
    %c0_168 = arith.constant 0 : index
    %125 = vector.load %arg6[%c2_165, %c0_166, %c0_167, %c0_168] : memref<3x3x8x8xf32, #tpu.memory_space<vmem>>, vector<1x1x8x8xf32>
    %126 = vector.shape_cast %125 : vector<1x1x8x8xf32> to vector<8x8xf32>
    %cst_169 = arith.constant dense<0.000000e+00> : vector<64x8xf32>
    %127 = tpu.matmul %124, %126, %cst_169 {dimension_numbers = #tpu.dot_dimension_numbers<[1], [0], [0], [1], [0, 0, 1, 1], [], []>} : vector<64x8xf32>, vector<8x8xf32>, vector<64x8xf32> -> vector<64x8xf32>
    %128 = arith.addf %122, %127 : vector<64x8xf32>
    %c2_170 = arith.constant 2 : index
    %c1_171 = arith.constant 1 : index
    %c0_172 = arith.constant 0 : index
    %129 = tpu.strided_load %arg14[%c2_170, %c1_171, %c0_172] {strides = array<i32: 2, 2, 1>} : memref<18x18x8xf32, #tpu.memory_space<vmem>>, vector<8x8x8xf32>
    %130 = vector.shape_cast %129 : vector<8x8x8xf32> to vector<64x8xf32>
    %c2_173 = arith.constant 2 : index
    %c1_174 = arith.constant 1 : index
    %c0_175 = arith.constant 0 : index
    %c0_176 = arith.constant 0 : index
    %131 = vector.load %arg6[%c2_173, %c1_174, %c0_175, %c0_176] : memref<3x3x8x8xf32, #tpu.memory_space<vmem>>, vector<1x1x8x8xf32>
    %132 = vector.shape_cast %131 : vector<1x1x8x8xf32> to vector<8x8xf32>
    %cst_177 = arith.constant dense<0.000000e+00> : vector<64x8xf32>
    %133 = tpu.matmul %130, %132, %cst_177 {dimension_numbers = #tpu.dot_dimension_numbers<[1], [0], [0], [1], [0, 0, 1, 1], [], []>} : vector<64x8xf32>, vector<8x8xf32>, vector<64x8xf32> -> vector<64x8xf32>
    %134 = arith.addf %128, %133 : vector<64x8xf32>
    %c2_178 = arith.constant 2 : index
    %c2_179 = arith.constant 2 : index
    %c0_180 = arith.constant 0 : index
    %135 = tpu.strided_load %arg14[%c2_178, %c2_179, %c0_180] {strides = array<i32: 2, 2, 1>} : memref<18x18x8xf32, #tpu.memory_space<vmem>>, vector<8x8x8xf32>
    %136 = vector.shape_cast %135 : vector<8x8x8xf32> to vector<64x8xf32>
    %c2_181 = arith.constant 2 : index
    %c2_182 = arith.constant 2 : index
    %c0_183 = arith.constant 0 : index
    %c0_184 = arith.constant 0 : index
    %137 = vector.load %arg6[%c2_181, %c2_182, %c0_183, %c0_184] : memref<3x3x8x8xf32, #tpu.memory_space<vmem>>, vector<1x1x8x8xf32>
    %138 = vector.shape_cast %137 : vector<1x1x8x8xf32> to vector<8x8xf32>
    %cst_185 = arith.constant dense<0.000000e+00> : vector<64x8xf32>
    %139 = tpu.matmul %136, %138, %cst_185 {dimension_numbers = #tpu.dot_dimension_numbers<[1], [0], [0], [1], [0, 0, 1, 1], [], []>} : vector<64x8xf32>, vector<8x8xf32>, vector<64x8xf32> -> vector<64x8xf32>
    %140 = arith.addf %134, %139 : vector<64x8xf32>
    %c0_186 = arith.constant 0 : index
    %c0_187 = arith.constant 0 : index
    %141 = vector.load %arg7[%c0_186, %c0_187] : memref<1x8xf32, #tpu.memory_space<vmem>>, vector<1x8xf32>
    %142 = vector.broadcast %141 : vector<1x8xf32> to vector<64x8xf32>
    %143 = arith.mulf %140, %142 : vector<64x8xf32>
    %c0_188 = arith.constant 0 : index
    %c0_189 = arith.constant 0 : index
    %144 = vector.load %arg8[%c0_188, %c0_189] : memref<1x8xf32, #tpu.memory_space<vmem>>, vector<1x8xf32>
    %145 = vector.broadcast %144 : vector<1x8xf32> to vector<64x8xf32>
    %146 = arith.addf %143, %145 : vector<64x8xf32>
    %c0_190 = arith.constant 0 : index
    %c0_191 = arith.constant 0 : index
    %c0_192 = arith.constant 0 : index
    %c0_193 = arith.constant 0 : index
    %147 = tpu.strided_load %arg1[%c0_190, %c0_191, %c0_192, %c0_193] {strides = array<i32: 1, 2, 2, 1>} : memref<1x16x16x4xf32, #tpu.memory_space<vmem>>, vector<1x8x8x4xf32>
    %148 = vector.shape_cast %147 : vector<1x8x8x4xf32> to vector<8x8x4xf32>
    %149 = vector.shape_cast %148 : vector<8x8x4xf32> to vector<64x4xf32>
    %c0_194 = arith.constant 0 : index
    %c0_195 = arith.constant 0 : index
    %150 = vector.load %arg9[%c0_194, %c0_195] : memref<4x8xf32, #tpu.memory_space<vmem>>, vector<4x8xf32>
    %cst_196 = arith.constant dense<0.000000e+00> : vector<64x8xf32>
    %151 = tpu.matmul %149, %150, %cst_196 {dimension_numbers = #tpu.dot_dimension_numbers<[1], [0], [0], [1], [0, 0, 1, 1], [], []>} : vector<64x4xf32>, vector<4x8xf32>, vector<64x8xf32> -> vector<64x8xf32>
    %c0_197 = arith.constant 0 : index
    %c0_198 = arith.constant 0 : index
    %152 = vector.load %arg10[%c0_197, %c0_198] : memref<1x8xf32, #tpu.memory_space<vmem>>, vector<1x8xf32>
    %153 = vector.broadcast %152 : vector<1x8xf32> to vector<64x8xf32>
    %154 = arith.mulf %151, %153 : vector<64x8xf32>
    %c0_199 = arith.constant 0 : index
    %c0_200 = arith.constant 0 : index
    %155 = vector.load %arg11[%c0_199, %c0_200] : memref<1x8xf32, #tpu.memory_space<vmem>>, vector<1x8xf32>
    %156 = vector.broadcast %155 : vector<1x8xf32> to vector<64x8xf32>
    %157 = arith.addf %154, %156 : vector<64x8xf32>
    %158 = arith.addf %146, %157 : vector<64x8xf32>
    %159 = vector.shape_cast %158 : vector<64x8xf32> to vector<8x8x8xf32>
    %c0_201 = arith.constant 0 : index
    %c0_202 = arith.constant 0 : index
    %c0_203 = arith.constant 0 : index
    %c0_204 = arith.constant 0 : index
    %160 = vector.load %arg12[%c0_201, %c0_202, %c0_203, %c0_204] : memref<1x8x8x8xf32, #tpu.memory_space<vmem>>, vector<1x8x8x8xf32>
    %161 = vector.shape_cast %160 : vector<1x8x8x8xf32> to vector<8x8x8xf32>
    %162 = vector.shape_cast %159 : vector<8x8x8xf32> to vector<1x8x8x8xf32>
    tpu.vector_store %arg12[%c0_201, %c0_202, %c0_203, %c0_204], %162 {strides = array<i32>} : memref<1x8x8x8xf32, #tpu.memory_space<vmem>>, vector<1x8x8x8xf32>,
    return
  }
  func.func @transform_0(%arg0: i32) -> (i32, i32, i32, i32) {
    %c0_i32 = arith.constant 0 : i32
    %c0_i32_0 = arith.constant 0 : i32
    %c0_i32_1 = arith.constant 0 : i32
    %c0_i32_2 = arith.constant 0 : i32
    return %arg0, %c0_i32, %c0_i32_0, %c0_i32_1 : i32, i32, i32, i32
  }
  func.func @transform_1(%arg0: i32) -> (i32, i32) {
    %c0_i32 = arith.constant 0 : i32
    %c0_i32_0 = arith.constant 0 : i32
    %c0_i32_1 = arith.constant 0 : i32
    return %c0_i32, %c0_i32_0 : i32, i32
  }
  func.func @transform_2(%arg0: i32) -> (i32, i32) {
    %c0_i32 = arith.constant 0 : i32
    %c0_i32_0 = arith.constant 0 : i32
    %c0_i32_1 = arith.constant 0 : i32
    return %c0_i32, %c0_i32_0 : i32, i32
  }
  func.func @transform_3(%arg0: i32) -> (i32, i32, i32, i32) {
    %c0_i32 = arith.constant 0 : i32
    %c0_i32_0 = arith.constant 0 : i32
    %c0_i32_1 = arith.constant 0 : i32
    %c0_i32_2 = arith.constant 0 : i32
    %c0_i32_3 = arith.constant 0 : i32
    return %c0_i32, %c0_i32_0, %c0_i32_1, %c0_i32_2 : i32, i32, i32, i32
  }
  func.func @transform_4(%arg0: i32) -> (i32, i32) {
    %c0_i32 = arith.constant 0 : i32
    %c0_i32_0 = arith.constant 0 : i32
    %c0_i32_1 = arith.constant 0 : i32
    return %c0_i32, %c0_i32_0 : i32, i32
  }
  func.func @transform_5(%arg0: i32) -> (i32, i32, i32, i32) {
    %c0_i32 = arith.constant 0 : i32
    %c0_i32_0 = arith.constant 0 : i32
    %c0_i32_1 = arith.constant 0 : i32
    %c0_i32_2 = arith.constant 0 : i32
    %c0_i32_3 = arith.constant 0 : i32
    return %c0_i32, %c0_i32_0, %c0_i32_1, %c0_i32_2 : i32, i32, i32, i32
  }
  func.func @transform_6(%arg0: i32) -> (i32, i32) {
    %c0_i32 = arith.constant 0 : i32
    %c0_i32_0 = arith.constant 0 : i32
    %c0_i32_1 = arith.constant 0 : i32
    return %c0_i32, %c0_i32_0 : i32, i32
  }
  func.func @transform_7(%arg0: i32) -> (i32, i32) {
    %c0_i32 = arith.constant 0 : i32
    %c0_i32_0 = arith.constant 0 : i32
    %c0_i32_1 = arith.constant 0 : i32
    return %c0_i32, %c0_i32_0 : i32, i32
  }
  func.func @transform_8(%arg0: i32) -> (i32, i32) {
    %c0_i32 = arith.constant 0 : i32
    %c0_i32_0 = arith.constant 0 : i32
    %c0_i32_1 = arith.constant 0 : i32
    return %c0_i32, %c0_i32_0 : i32, i32
  }
  func.func @transform_9(%arg0: i32) -> (i32, i32) {
    %c0_i32 = arith.constant 0 : i32
    %c0_i32_0 = arith.constant 0 : i32
    %c0_i32_1 = arith.constant 0 : i32
    return %c0_i32, %c0_i32_0 : i32, i32
  }
  func.func @transform_10(%arg0: i32) -> (i32, i32) {
    %c0_i32 = arith.constant 0 : i32
    %c0_i32_0 = arith.constant 0 : i32
    %c0_i32_1 = arith.constant 0 : i32
    return %c0_i32, %c0_i32_0 : i32, i32
  }
  func.func @transform_11(%arg0: i32) -> (i32, i32, i32, i32) {
    %c0_i32 = arith.constant 0 : i32
    %c0_i32_0 = arith.constant 0 : i32
    %c0_i32_1 = arith.constant 0 : i32
    %c0_i32_2 = arith.constant 0 : i32
    return %arg0, %c0_i32, %c0_i32_0, %c0_i32_1 : i32, i32, i32, i32
  }
}

</mosaic_0001>

<llo_original>
// kernel: tpu_custom_call.1
$region0: #{tpu_custom_call.1}
  #allocation0 [shape = 'u32[]', space=smem, size = 0x4, offset = 0x4, fixed_abs, tag = 'smem constant byte address 0x4 - core index']
  #allocation1 [shape = 'u32[144,128]{1,0:T(1,128)}', space=vmem, size = 0x12000, scoped, tag = 'internal scratch']
  #allocation2 [shape = 'f32[18,18,4]{2,1,0:T(8,128)}', space=vmem, size = 0x36000, scoped, tag = 'scratch operand']
  #allocation3 [shape = 'f32[18,18,8]{2,1,0:T(8,128)}', space=vmem, size = 0x36000, scoped, tag = 'scratch operand']
  %s0 = inlined_call_operand.vmem [shape: f32[2,16,16,4], index: 0, kind: input, shape index: {}]
  %s1 = inlined_call_operand.vmem [shape: f32[1,4], index: 1, kind: input, shape index: {}]
  %s2 = inlined_call_operand.vmem [shape: f32[1,4], index: 2, kind: input, shape index: {}]
  %s3 = inlined_call_operand.vmem [shape: f32[3,3,4,8], index: 3, kind: input, shape index: {}]
  %s4 = inlined_call_operand.vmem [shape: f32[1,8], index: 4, kind: input, shape index: {}]
  %s5 = inlined_call_operand.vmem [shape: f32[3,3,8,8], index: 5, kind: input, shape index: {}]
  %s6 = inlined_call_operand.vmem [shape: f32[1,8], index: 6, kind: input, shape index: {}]
  %s7 = inlined_call_operand.vmem [shape: f32[1,8], index: 7, kind: input, shape index: {}]
  %s8 = inlined_call_operand.vmem [shape: f32[4,8], index: 8, kind: input, shape index: {}]
  %s9 = inlined_call_operand.vmem [shape: f32[1,8], index: 9, kind: input, shape index: {}]
  %s10 = inlined_call_operand.vmem [shape: f32[1,8], index: 10, kind: input, shape index: {}]
  %s11 = inlined_call_operand.hbm [shape: f32[2,8,8,8], index: 11, kind: output, shape index: {}]
  %s12 = sld [smem:[#allocation0]]
  $region77: #{tpu_custom_call.1} parent=0
    _
  %s14 = ssub.s32 1, %s12
  %s15 = scalar_select 0, %s14, %s12
  $region1: #{tpu_custom_call.1} parent=0
    #allocation4 [shape = 'u8[65536]{0}', space=vmem, size = 0x10000, scoped, tag = 'output window, operand 0']
    #allocation5 [shape = 's32[2]{0}', space=sflag, size = 0x8, scoped, tag = 'scoped memory for tpu_custom_call.1']
    %16 = vsyncpa [#allocation5], 0
    %s17 = scalar_lea.sflag [#allocation5], 1
    %18 = vsyncpa %s17, 0
    loop: start=0, step=1, limit=4
    $region2: #{tpu_custom_call.1} parent=1 // loop_pre_header
      _
    $region3: #{tpu_custom_call.1} parent=1 // loop_header
      %s20 = sphi 0, %s24
      %p21 = scmp.ge.s32.totalorder %s20, 4
      %s30 = sphi 0, %s32
      %s33 = sphi 0, %s30
      %s34 = sphi 0, %s33
      %s50 = sphi 0, %s34
      %s54 = sphi 0, %s54
      %s56 = sphi 0, %s54
      %s57 = sphi 0, %s56
      %s71 = sphi 0, %s57
      %s75 = sphi 0, %s75
      %s77 = sphi 0, %s75
      %s78 = sphi 0, %s77
      %s92 = sphi 0, %s78
      %s96 = sphi 0, %s96
      %s98 = sphi 0, %s96
      %s99 = sphi 0, %s98
      %s113 = sphi 0, %s99
      %s117 = sphi 0, %s117
      %s119 = sphi 0, %s117
      %s120 = sphi 0, %s119
      %s134 = sphi 0, %s120
      %s138 = sphi 0, %s138
      %s140 = sphi 0, %s138
      %s141 = sphi 0, %s140
      %s155 = sphi 0, %s141
      %s159 = sphi 0, %s159
      %s161 = sphi 0, %s159
      %s162 = sphi 0, %s161
      %s176 = sphi 0, %s162
      %s180 = sphi 0, %s180
      %s182 = sphi 0, %s180
      %s183 = sphi 0, %s182
      %s197 = sphi 0, %s183
      %s201 = sphi 0, %s201
      %s203 = sphi 0, %s201
      %s204 = sphi 0, %s203
      %s218 = sphi 0, %s204
      %s222 = sphi 0, %s222
      %s224 = sphi 0, %s222
      %s225 = sphi 0, %s224
      %s239 = sphi 0, %s225
      %s243 = sphi 0, %s243
      %s245 = sphi 0, %s243
      %s246 = sphi 0, %s245
      %s260 = sphi 0, %s246
      %s266 = sphi 0, %s268
      %s269 = sphi 0, %s266
      %s270 = sphi 0, %s269
      %s286 = sphi 0, %s270
    $region4: #{tpu_custom_call.1} parent=1 // loop_header_branch
      %23 = sbr.rel (%p21) target = $region8
    $region5: #{tpu_custom_call.1} parent=1 // loop_body
      %s25 = ssub.s32 %s20, 1
      %s26 = ssub.s32 %s20, 2
      %s27 = sadd.s32 %s20, 1
      %s28 = ssub.s32 %s20, %s27
      %p29 = scmp.eq.s32.totalorder %s28, 0
      %s31 = sadd.s32 %s30, 1
      %s32 = scalar_select %p29, %s30, %s31
      %p35 = pneg %p29
      %p36 = scmp.eq.s32.totalorder %s20, 1
      %p37 = por %p35, %p36
      %p38 = scmp.ne.s32.totalorder %s30, %s33
      %p39 = scmp.eq.s32.totalorder %s20, 0
      %p40 = por %p38, %p39
      %p41 = scmp.ne.s32.totalorder %s30, %s33
      %p42 = scmp.eq.s32.totalorder %s25, 1
      %p43 = por %p41, %p42
      %p44 = scmp.ne.s32.totalorder %s33, %s34
      %p45 = scmp.eq.s32.totalorder %s25, 0
      %p46 = por %p44, %p45
      %p47 = scmp.ne.s32.totalorder %s33, %s34
      %p48 = scmp.eq.s32.totalorder %s26, 1
      %p49 = por %p47, %p48
      %p51 = scmp.ne.s32.totalorder %s34, %s50
      %p52 = scmp.eq.s32.totalorder %s26, 0
      %p53 = por %p51, %p52
      %s55 = sadd.s32 %s54, 1
      %p58 = scmp.eq.s32.totalorder %s20, 1
      %p59 = scmp.ne.s32.totalorder %s54, %s56
      %p60 = scmp.eq.s32.totalorder %s20, 0
      %p61 = por %p59, %p60
      %p62 = scmp.ne.s32.totalorder %s54, %s56
      %p63 = scmp.eq.s32.totalorder %s25, 1
      %p64 = por %p62, %p63
      %p65 = scmp.ne.s32.totalorder %s56, %s57
      %p66 = scmp.eq.s32.totalorder %s25, 0
      %p67 = por %p65, %p66
      %p68 = scmp.ne.s32.totalorder %s56, %s57
      %p69 = scmp.eq.s32.totalorder %s26, 1
      %p70 = por %p68, %p69
      %p72 = scmp.ne.s32.totalorder %s57, %s71
      %p73 = scmp.eq.s32.totalorder %s26, 0
      %p74 = por %p72, %p73
      %s76 = sadd.s32 %s75, 1
      %p79 = scmp.eq.s32.totalorder %s20, 1
      %p80 = scmp.ne.s32.totalorder %s75, %s77
      %p81 = scmp.eq.s32.totalorder %s20, 0
      %p82 = por %p80, %p81
      %p83 = scmp.ne.s32.totalorder %s75, %s77
      %p84 = scmp.eq.s32.totalorder %s25, 1
      %p85 = por %p83, %p84
      %p86 = scmp.ne.s32.totalorder %s77, %s78
      %p87 = scmp.eq.s32.totalorder %s25, 0
      %p88 = por %p86, %p87
      %p89 = scmp.ne.s32.totalorder %s77, %s78
      %p90 = scmp.eq.s32.totalorder %s26, 1
      %p91 = por %p89, %p90
      %p93 = scmp.ne.s32.totalorder %s78, %s92
      %p94 = scmp.eq.s32.totalorder %s26, 0
      %p95 = por %p93, %p94
      %s97 = sadd.s32 %s96, 1
      %p100 = scmp.eq.s32.totalorder %s20, 1
      %p101 = scmp.ne.s32.totalorder %s96, %s98
      %p102 = scmp.eq.s32.totalorder %s20, 0
      %p103 = por %p101, %p102
      %p104 = scmp.ne.s32.totalorder %s96, %s98
      %p105 = scmp.eq.s32.totalorder %s25, 1
      %p106 = por %p104, %p105
      %p107 = scmp.ne.s32.totalorder %s98, %s99
      %p108 = scmp.eq.s32.totalorder %s25, 0
      %p109 = por %p107, %p108
      %p110 = scmp.ne.s32.totalorder %s98, %s99
      %p111 = scmp.eq.s32.totalorder %s26, 1
      %p112 = por %p110, %p111
      %p114 = scmp.ne.s32.totalorder %s99, %s113
      %p115 = scmp.eq.s32.totalorder %s26, 0
      %p116 = por %p114, %p115
      %s118 = sadd.s32 %s117, 1
      %p121 = scmp.eq.s32.totalorder %s20, 1
      %p122 = scmp.ne.s32.totalorder %s117, %s119
      %p123 = scmp.eq.s32.totalorder %s20, 0
      %p124 = por %p122, %p123
      %p125 = scmp.ne.s32.totalorder %s117, %s119
      %p126 = scmp.eq.s32.totalorder %s25, 1
      %p127 = por %p125, %p126
      %p128 = scmp.ne.s32.totalorder %s119, %s120
      %p129 = scmp.eq.s32.totalorder %s25, 0
      %p130 = por %p128, %p129
      %p131 = scmp.ne.s32.totalorder %s119, %s120
      %p132 = scmp.eq.s32.totalorder %s26, 1
      %p133 = por %p131, %p132
      %p135 = scmp.ne.s32.totalorder %s120, %s134
      %p136 = scmp.eq.s32.totalorder %s26, 0
      %p137 = por %p135, %p136
      %s139 = sadd.s32 %s138, 1
      %p142 = scmp.eq.s32.totalorder %s20, 1
      %p143 = scmp.ne.s32.totalorder %s138, %s140
      %p144 = scmp.eq.s32.totalorder %s20, 0
      %p145 = por %p143, %p144
      %p146 = scmp.ne.s32.totalorder %s138, %s140
      %p147 = scmp.eq.s32.totalorder %s25, 1
      %p148 = por %p146, %p147
      %p149 = scmp.ne.s32.totalorder %s140, %s141
      %p150 = scmp.eq.s32.totalorder %s25, 0
      %p151 = por %p149, %p150
      %p152 = scmp.ne.s32.totalorder %s140, %s141
      %p153 = scmp.eq.s32.totalorder %s26, 1
      %p154 = por %p152, %p153
      %p156 = scmp.ne.s32.totalorder %s141, %s155
      %p157 = scmp.eq.s32.totalorder %s26, 0
      %p158 = por %p156, %p157
      %s160 = sadd.s32 %s159, 1
      %p163 = scmp.eq.s32.totalorder %s20, 1
      %p164 = scmp.ne.s32.totalorder %s159, %s161
      %p165 = scmp.eq.s32.totalorder %s20, 0
      %p166 = por %p164, %p165
      %p167 = scmp.ne.s32.totalorder %s159, %s161
      %p168 = scmp.eq.s32.totalorder %s25, 1
      %p169 = por %p167, %p168
      %p170 = scmp.ne.s32.totalorder %s161, %s162
      %p171 = scmp.eq.s32.totalorder %s25, 0
      %p172 = por %p170, %p171
      %p173 = scmp.ne.s32.totalorder %s161, %s162
      %p174 = scmp.eq.s32.totalorder %s26, 1
      %p175 = por %p173, %p174
      %p177 = scmp.ne.s32.totalorder %s162, %s176
      %p178 = scmp.eq.s32.totalorder %s26, 0
      %p179 = por %p177, %p178
      %s181 = sadd.s32 %s180, 1
      %p184 = scmp.eq.s32.totalorder %s20, 1
      %p185 = scmp.ne.s32.totalorder %s180, %s182
      %p186 = scmp.eq.s32.totalorder %s20, 0
      %p187 = por %p185, %p186
      %p188 = scmp.ne.s32.totalorder %s180, %s182
      %p189 = scmp.eq.s32.totalorder %s25, 1
      %p190 = por %p188, %p189
      %p191 = scmp.ne.s32.totalorder %s182, %s183
      %p192 = scmp.eq.s32.totalorder %s25, 0
      %p193 = por %p191, %p192
      %p194 = scmp.ne.s32.totalorder %s182, %s183
      %p195 = scmp.eq.s32.totalorder %s26, 1
      %p196 = por %p194, %p195
      %p198 = scmp.ne.s32.totalorder %s183, %s197
      %p199 = scmp.eq.s32.totalorder %s26, 0
      %p200 = por %p198, %p199
      %s202 = sadd.s32 %s201, 1
      %p205 = scmp.eq.s32.totalorder %s20, 1
      %p206 = scmp.ne.s32.totalorder %s201, %s203
      %p207 = scmp.eq.s32.totalorder %s20, 0
      %p208 = por %p206, %p207
      %p209 = scmp.ne.s32.totalorder %s201, %s203
      %p210 = scmp.eq.s32.totalorder %s25, 1
      %p211 = por %p209, %p210
      %p212 = scmp.ne.s32.totalorder %s203, %s204
      %p213 = scmp.eq.s32.totalorder %s25, 0
      %p214 = por %p212, %p213
      %p215 = scmp.ne.s32.totalorder %s203, %s204
      %p216 = scmp.eq.s32.totalorder %s26, 1
      %p217 = por %p215, %p216
      %p219 = scmp.ne.s32.totalorder %s204, %s218
      %p220 = scmp.eq.s32.totalorder %s26, 0
      %p221 = por %p219, %p220
      %s223 = sadd.s32 %s222, 1
      %p226 = scmp.eq.s32.totalorder %s20, 1
      %p227 = scmp.ne.s32.totalorder %s222, %s224
      %p228 = scmp.eq.s32.totalorder %s20, 0
      %p229 = por %p227, %p228
      %p230 = scmp.ne.s32.totalorder %s222, %s224
      %p231 = scmp.eq.s32.totalorder %s25, 1
      %p232 = por %p230, %p231
      %p233 = scmp.ne.s32.totalorder %s224, %s225
      %p234 = scmp.eq.s32.totalorder %s25, 0
      %p235 = por %p233, %p234
      %p236 = scmp.ne.s32.totalorder %s224, %s225
      %p237 = scmp.eq.s32.totalorder %s26, 1
      %p238 = por %p236, %p237
      %p240 = scmp.ne.s32.totalorder %s225, %s239
      %p241 = scmp.eq.s32.totalorder %s26, 0
      %p242 = por %p240, %p241
      %s244 = sadd.s32 %s243, 1
      %p247 = scmp.eq.s32.totalorder %s20, 1
      %p248 = scmp.ne.s32.totalorder %s243, %s245
      %p249 = scmp.eq.s32.totalorder %s20, 0
      %p250 = por %p248, %p249
      %p251 = scmp.ne.s32.totalorder %s243, %s245
      %p252 = scmp.eq.s32.totalorder %s25, 1
      %p253 = por %p251, %p252
      %p254 = scmp.ne.s32.totalorder %s245, %s246
      %p255 = scmp.eq.s32.totalorder %s25, 0
      %p256 = por %p254, %p255
      %p257 = scmp.ne.s32.totalorder %s245, %s246
      %p258 = scmp.eq.s32.totalorder %s26, 1
      %p259 = por %p257, %p258
      %p261 = scmp.ne.s32.totalorder %s246, %s260
      %p262 = scmp.eq.s32.totalorder %s26, 0
      %p263 = por %p261, %p262
      %s264 = ssub.s32 %s20, %s27
      %p265 = scmp.eq.s32.totalorder %s264, 0
      %s267 = sadd.s32 %s266, 1
      %s268 = scalar_select %p265, %s266, %s267
      %p271 = pneg %p265
      %p272 = scmp.eq.s32.totalorder %s20, 1
      %p273 = por %p271, %p272
      %p274 = scmp.ne.s32.totalorder %s266, %s269
      %p275 = scmp.eq.s32.totalorder %s20, 0
      %p276 = por %p274, %p275
      %p277 = scmp.ne.s32.totalorder %s266, %s269
      %p278 = scmp.eq.s32.totalorder %s25, 1
      %p279 = por %p277, %p278
      %p280 = scmp.ne.s32.totalorder %s269, %s270
      %p281 = scmp.eq.s32.totalorder %s25, 0
      %p282 = por %p280, %p281
      %p283 = scmp.ne.s32.totalorder %s269, %s270
      %p284 = scmp.eq.s32.totalorder %s26, 1
      %p285 = por %p283, %p284
      %p287 = scmp.ne.s32.totalorder %s270, %s286
      %p288 = scmp.eq.s32.totalorder %s26, 0
      %p289 = por %p287, %p288
      %p290 = scmp.le.s32.totalorder 1, %s20
      %p291 = scmp.lt.s32.totalorder %s20, 3
      %p292 = pnand %p290, %p291
      %p293 = pneg %p292
      // Predicated region
      $region9: #{tpu_custom_call.1} parent=5 // pred_check
        _
      $region10: #{tpu_custom_call.1} parent=5 // pred_check_branch
        %295 = sbr.rel (%p292) target = $region12
      $region11: #{tpu_custom_call.1} parent=5 // pred_region
        %s296 = ssub.s32 %s20, 1
        // Predicated region
        $region13: #{tpu_custom_call.1} parent=11 // pred_check
          %p297 = pneg %p67
        $region14: #{tpu_custom_call.1} parent=11 // pred_check_branch
          %299 = sbr.rel (%p297) target = $region16
        $region15: #{tpu_custom_call.1} parent=11 // pred_region
          _
        $region16: #{tpu_custom_call.1} parent=11 // pred_fallthru
          _
        // Predicated region
        $region17: #{tpu_custom_call.1} parent=11 // pred_check
          %p300 = pneg %p88
        $region18: #{tpu_custom_call.1} parent=11 // pred_check_branch
          %302 = sbr.rel (%p300) target = $region20
        $region19: #{tpu_custom_call.1} parent=11 // pred_region
          _
        $region20: #{tpu_custom_call.1} parent=11 // pred_fallthru
          _
        // Predicated region
        $region21: #{tpu_custom_call.1} parent=11 // pred_check
          %p303 = pneg %p109
        $region22: #{tpu_custom_call.1} parent=11 // pred_check_branch
          %305 = sbr.rel (%p303) target = $region24
        $region23: #{tpu_custom_call.1} parent=11 // pred_region
          _
        $region24: #{tpu_custom_call.1} parent=11 // pred_fallthru
          _
        // Predicated region
        $region25: #{tpu_custom_call.1} parent=11 // pred_check
          %p306 = pneg %p130
        $region26: #{tpu_custom_call.1} parent=11 // pred_check_branch
          %308 = sbr.rel (%p306) target = $region28
        $region27: #{tpu_custom_call.1} parent=11 // pred_region
          _
        $region28: #{tpu_custom_call.1} parent=11 // pred_fallthru
          _
        // Predicated region
        $region29: #{tpu_custom_call.1} parent=11 // pred_check
          %p309 = pneg %p151
        $region30: #{tpu_custom_call.1} parent=11 // pred_check_branch
          %311 = sbr.rel (%p309) target = $region32
        $region31: #{tpu_custom_call.1} parent=11 // pred_region
          _
        $region32: #{tpu_custom_call.1} parent=11 // pred_fallthru
          _
        // Predicated region
        $region33: #{tpu_custom_call.1} parent=11 // pred_check
          %p312 = pneg %p172
        $region34: #{tpu_custom_call.1} parent=11 // pred_check_branch
          %314 = sbr.rel (%p312) target = $region36
        $region35: #{tpu_custom_call.1} parent=11 // pred_region
          _
        $region36: #{tpu_custom_call.1} parent=11 // pred_fallthru
          _
        // Predicated region
        $region37: #{tpu_custom_call.1} parent=11 // pred_check
          %p315 = pneg %p193
        $region38: #{tpu_custom_call.1} parent=11 // pred_check_branch
          %317 = sbr.rel (%p315) target = $region40
        $region39: #{tpu_custom_call.1} parent=11 // pred_region
          _
        $region40: #{tpu_custom_call.1} parent=11 // pred_fallthru
          _
        // Predicated region
        $region41: #{tpu_custom_call.1} parent=11 // pred_check
          %p318 = pneg %p214
        $region42: #{tpu_custom_call.1} parent=11 // pred_check_branch
          %320 = sbr.rel (%p318) target = $region44
        $region43: #{tpu_custom_call.1} parent=11 // pred_region
          _
        $region44: #{tpu_custom_call.1} parent=11 // pred_fallthru
          _
        // Predicated region
        $region45: #{tpu_custom_call.1} parent=11 // pred_check
          %p321 = pneg %p235
        $region46: #{tpu_custom_call.1} parent=11 // pred_check_branch
          %323 = sbr.rel (%p321) target = $region48
        $region47: #{tpu_custom_call.1} parent=11 // pred_region
          _
        $region48: #{tpu_custom_call.1} parent=11 // pred_fallthru
          _
        // Predicated region
        $region49: #{tpu_custom_call.1} parent=11 // pred_check
          %p324 = pneg %p256
        $region50: #{tpu_custom_call.1} parent=11 // pred_check_branch
          %326 = sbr.rel (%p324) target = $region52
        $region51: #{tpu_custom_call.1} parent=11 // pred_region
          _
        $region52: #{tpu_custom_call.1} parent=11 // pred_fallthru
          _
      $region12: #{tpu_custom_call.1} parent=5 // pred_fallthru
        _
      %p327 = scmp.lt.s32.totalorder %s20, 2
      // Predicated region
      $region53: #{tpu_custom_call.1} parent=5 // pred_check
        %p328 = pneg %p327
      $region54: #{tpu_custom_call.1} parent=5 // pred_check_branch
        %330 = sbr.rel (%p328) target = $region56
      $region55: #{tpu_custom_call.1} parent=5 // pred_region
        // Predicated region
        $region57: #{tpu_custom_call.1} parent=55 // pred_check
          %p331 = pneg %p40
        $region58: #{tpu_custom_call.1} parent=55 // pred_check_branch
          %333 = sbr.rel (%p331) target = $region60
        $region59: #{tpu_custom_call.1} parent=55 // pred_region
          %p334 = scmp.lt.s32.totalorder %s20, 1
          %s335 = scalar_select %p334, %s20, 1
          %s336 = smul.addr %s335, 32
          %s337 = smul.addr %s336, 8
          %s338 = scalar_lea.vmem %s0, %s337
        $region60: #{tpu_custom_call.1} parent=55 // pred_fallthru
          _
      $region56: #{tpu_custom_call.1} parent=5 // pred_fallthru
        _
      %p339 = scmp.le.s32.totalorder 1, %s20
      %p340 = scmp.lt.s32.totalorder %s20, 3
      %p341 = pnand %p339, %p340
      %p342 = pneg %p341
      // Predicated region
      $region61: #{tpu_custom_call.1} parent=5 // pred_check
        _
      $region62: #{tpu_custom_call.1} parent=5 // pred_check_branch
        %344 = sbr.rel (%p341) target = $region64
      $region63: #{tpu_custom_call.1} parent=5 // pred_region
        %s345 = ssub.s32 %s20, 1
        %p346 = scmp.lt.s32.totalorder %s25, 1
        %s347 = scalar_select %p346, %s25, 1
        %s348 = smul.addr %s347, 32
        %s349 = smul.addr %s348, 8
        %s350 = scalar_lea.vmem %s0, %s349
        %p351 = pneg %p46
        %p352 = pneg %p43
        %p353 = pneg %p67
        %p354 = pneg %p64
        %p355 = pneg %p88
        %p356 = pneg %p85
        %p357 = pneg %p109
        %p358 = pneg %p106
        %p359 = pneg %p130
        %p360 = pneg %p127
        %p361 = pneg %p151
        %p362 = pneg %p148
        %p363 = pneg %p172
        %p364 = pneg %p169
        %p365 = pneg %p193
        %p366 = pneg %p190
        %p367 = pneg %p214
        %p368 = pneg %p211
        %p369 = pneg %p235
        %p370 = pneg %p232
        %p371 = pneg %p256
        %p372 = pneg %p253
        %p373 = pneg %p282
        %p374 = pneg %p279
        %s375 = sand.u32 %s269, 1
        %s376 = scalar_lea.sflag [#allocation5], %s375
        %s377 = sand.u32 %s269, 1
        %s378 = smul.addr %s377, 64
        %s379 = scalar_lea.vmem [#allocation4], %s378
        %p380 = scmp.lt.s32.totalorder %s25, 1
        %s381 = scalar_select %p380, %s25, 1
        %s382 = smul.addr %s381, 32
        %s383 = smul.addr %s382, 8
        %s384 = scalar_lea.vmem %s0, %s383
        %vm385 = vcmask 31744
        %386 = vst.msk [vmem:[#allocation2] sm:$0xff] %vm385, 0.0
        %387 = vst.msk [vmem:[#allocation2 + $0x8] sm:$0xff] %vm385, 0.0
        %vm388 = vcmask 25600
        %389 = vst.msk [vmem:[#allocation2 + $0x10] sm:$0x3] %vm388, 0.0
        %s390 = scalar_lea.vmem [#allocation2], 408
        %391 = vst.msk [vmem:[%s390] sm:$0xff] %vm385, 0.0
        %392 = vst.msk [vmem:[%s390 + $0x8] sm:$0xff] %vm385, 0.0
        %393 = vst.msk [vmem:[%s390 + $0x10] sm:$0x3] %vm388, 0.0
        %vm394 = vcmask 24576
        %395 = vst.msk [vmem:[#allocation2] sm:$0x1] %vm394, 0.0
        %396 = vst.msk [vmem:[#allocation2 + $0x18] sm:$0x1] %vm394, 0.0
        %397 = vst.msk [vmem:[#allocation2 + $0x30] sm:$0x1] %vm394, 0.0
        %398 = vst.msk [vmem:[#allocation2 + $0x48] sm:$0x1] %vm394, 0.0
        %399 = vst.msk [vmem:[#allocation2 + $0x60] sm:$0x1] %vm394, 0.0
        %400 = vst.msk [vmem:[#allocation2 + $0x78] sm:$0x1] %vm394, 0.0
        %401 = vst.msk [vmem:[#allocation2 + $0x90] sm:$0x1] %vm394, 0.0
        %402 = vst.msk [vmem:[#allocation2 + $0xa8] sm:$0x1] %vm394, 0.0
        %403 = vst.msk [vmem:[#allocation2 + $0xc0] sm:$0x1] %vm394, 0.0
        %404 = vst.msk [vmem:[#allocation2 + $0xd8] sm:$0x1] %vm394, 0.0
        %405 = vst.msk [vmem:[#allocation2 + $0xf0] sm:$0x1] %vm394, 0.0
        %406 = vst.msk [vmem:[#allocation2 + $0x108] sm:$0x1] %vm394, 0.0
        %407 = vst.msk [vmem:[#allocation2 + $0x120] sm:$0x1] %vm394, 0.0
        %408 = vst.msk [vmem:[#allocation2 + $0x138] sm:$0x1] %vm394, 0.0
        %409 = vst.msk [vmem:[#allocation2 + $0x150] sm:$0x1] %vm394, 0.0
        %410 = vst.msk [vmem:[#allocation2 + $0x168] sm:$0x1] %vm394, 0.0
        %411 = vst.msk [vmem:[#allocation2 + $0x180] sm:$0x1] %vm394, 0.0
        %412 = vst.msk [vmem:[#allocation2 + $0x198] sm:$0x1] %vm394, 0.0
        %413 = vst.msk [vmem:[#allocation2 + $0x11] sm:$0x1] %vm394, 0.0
        %414 = vst.msk [vmem:[#allocation2 + $0x29] sm:$0x1] %vm394, 0.0
        %415 = vst.msk [vmem:[#allocation2 + $0x41] sm:$0x1] %vm394, 0.0
        %416 = vst.msk [vmem:[#allocation2 + $0x59] sm:$0x1] %vm394, 0.0
        %417 = vst.msk [vmem:[#allocation2 + $0x71] sm:$0x1] %vm394, 0.0
        %418 = vst.msk [vmem:[#allocation2 + $0x89] sm:$0x1] %vm394, 0.0
        %419 = vst.msk [vmem:[#allocation2 + $0xa1] sm:$0x1] %vm394, 0.0
        %420 = vst.msk [vmem:[#allocation2 + $0xb9] sm:$0x1] %vm394, 0.0
        %421 = vst.msk [vmem:[#allocation2 + $0xd1] sm:$0x1] %vm394, 0.0
        %422 = vst.msk [vmem:[#allocation2 + $0xe9] sm:$0x1] %vm394, 0.0
        %423 = vst.msk [vmem:[#allocation2 + $0x101] sm:$0x1] %vm394, 0.0
        %424 = vst.msk [vmem:[#allocation2 + $0x119] sm:$0x1] %vm394, 0.0
        %425 = vst.msk [vmem:[#allocation2 + $0x131] sm:$0x1] %vm394, 0.0
        %426 = vst.msk [vmem:[#allocation2 + $0x149] sm:$0x1] %vm394, 0.0
        %427 = vst.msk [vmem:[#allocation2 + $0x161] sm:$0x1] %vm394, 0.0
        %428 = vst.msk [vmem:[#allocation2 + $0x179] sm:$0x1] %vm394, 0.0
        %429 = vst.msk [vmem:[#allocation2 + $0x191] sm:$0x1] %vm394, 0.0
        %430 = vst.msk [vmem:[#allocation2 + $0x1a9] sm:$0x1] %vm394, 0.0
        %vm431 = vcmask 64512
        %432 = vst.msk [vmem:[#allocation3] sm:$0xff] %vm431, 0.0
        %433 = vst.msk [vmem:[#allocation3 + $0x8] sm:$0xff] %vm431, 0.0
        %vm434 = vcmask 58368
        %435 = vst.msk [vmem:[#allocation3 + $0x10] sm:$0x3] %vm434, 0.0
        %s436 = scalar_lea.vmem [#allocation3], 408
        %437 = vst.msk [vmem:[%s436] sm:$0xff] %vm431, 0.0
        %438 = vst.msk [vmem:[%s436 + $0x8] sm:$0xff] %vm431, 0.0
        %439 = vst.msk [vmem:[%s436 + $0x10] sm:$0x3] %vm434, 0.0
        %vm440 = vcmask 57344
        %441 = vst.msk [vmem:[#allocation3] sm:$0x1] %vm440, 0.0
        %442 = vst.msk [vmem:[#allocation3 + $0x18] sm:$0x1] %vm440, 0.0
        %443 = vst.msk [vmem:[#allocation3 + $0x30] sm:$0x1] %vm440, 0.0
        %444 = vst.msk [vmem:[#allocation3 + $0x48] sm:$0x1] %vm440, 0.0
        %445 = vst.msk [vmem:[#allocation3 + $0x60] sm:$0x1] %vm440, 0.0
        %446 = vst.msk [vmem:[#allocation3 + $0x78] sm:$0x1] %vm440, 0.0
        %447 = vst.msk [vmem:[#allocation3 + $0x90] sm:$0x1] %vm440, 0.0
        %448 = vst.msk [vmem:[#allocation3 + $0xa8] sm:$0x1] %vm440, 0.0
        %449 = vst.msk [vmem:[#allocation3 + $0xc0] sm:$0x1] %vm440, 0.0
        %450 = vst.msk [vmem:[#allocation3 + $0xd8] sm:$0x1] %vm440, 0.0
        %451 = vst.msk [vmem:[#allocation3 + $0xf0] sm:$0x1] %vm440, 0.0
        %452 = vst.msk [vmem:[#allocation3 + $0x108] sm:$0x1] %vm440, 0.0
        %453 = vst.msk [vmem:[#allocation3 + $0x120] sm:$0x1] %vm440, 0.0
        %454 = vst.msk [vmem:[#allocation3 + $0x138] sm:$0x1] %vm440, 0.0
        %455 = vst.msk [vmem:[#allocation3 + $0x150] sm:$0x1] %vm440, 0.0
        %456 = vst.msk [vmem:[#allocation3 + $0x168] sm:$0x1] %vm440, 0.0
        %457 = vst.msk [vmem:[#allocation3 + $0x180] sm:$0x1] %vm440, 0.0
        %458 = vst.msk [vmem:[#allocation3 + $0x198] sm:$0x1] %vm440, 0.0
        %459 = vst.msk [vmem:[#allocation3 + $0x11] sm:$0x1] %vm440, 0.0
        %460 = vst.msk [vmem:[#allocation3 + $0x29] sm:$0x1] %vm440, 0.0
        %461 = vst.msk [vmem:[#allocation3 + $0x41] sm:$0x1] %vm440, 0.0
        %462 = vst.msk [vmem:[#allocation3 + $0x59] sm:$0x1] %vm440, 0.0
        %463 = vst.msk [vmem:[#allocation3 + $0x71] sm:$0x1] %vm440, 0.0
        %464 = vst.msk [vmem:[#allocation3 + $0x89] sm:$0x1] %vm440, 0.0
        %465 = vst.msk [vmem:[#allocation3 + $0xa1] sm:$0x1] %vm440, 0.0
        %466 = vst.msk [vmem:[#allocation3 + $0xb9] sm:$0x1] %vm440, 0.0
        %467 = vst.msk [vmem:[#allocation3 + $0xd1] sm:$0x1] %vm440, 0.0
        %468 = vst.msk [vmem:[#allocation3 + $0xe9] sm:$0x1] %vm440, 0.0
        %469 = vst.msk [vmem:[#allocation3 + $0x101] sm:$0x1] %vm440, 0.0
        %470 = vst.msk [vmem:[#allocation3 + $0x119] sm:$0x1] %vm440, 0.0
        %471 = vst.msk [vmem:[#allocation3 + $0x131] sm:$0x1] %vm440, 0.0
        %472 = vst.msk [vmem:[#allocation3 + $0x149] sm:$0x1] %vm440, 0.0
        %473 = vst.msk [vmem:[#allocation3 + $0x161] sm:$0x1] %vm440, 0.0
        %474 = vst.msk [vmem:[#allocation3 + $0x179] sm:$0x1] %vm440, 0.0
        %475 = vst.msk [vmem:[#allocation3 + $0x191] sm:$0x1] %vm440, 0.0
        %476 = vst.msk [vmem:[#allocation3 + $0x1a9] sm:$0x1] %vm440, 0.0
        %v477 = vld [vmem:[%s384] sm:$0xff]
        %v478 = vld [vmem:[%s384 + $0x8] sm:$0xff]
        %v479 = vld [vmem:[%s384 + $0x10] sm:$0xff]
        %v480 = vld [vmem:[%s384 + $0x18] sm:$0xff]
        %v481 = vld [vmem:[%s384 + $0x20] sm:$0xff]
        %v482 = vld [vmem:[%s384 + $0x28] sm:$0xff]
        %v483 = vld [vmem:[%s384 + $0x30] sm:$0xff]
        %v484 = vld [vmem:[%s384 + $0x38] sm:$0xff]
        %v485 = vld [vmem:[%s384 + $0x40] sm:$0xff]
        %v486 = vld [vmem:[%s384 + $0x48] sm:$0xff]
        %v487 = vld [vmem:[%s384 + $0x50] sm:$0xff]
        %v488 = vld [vmem:[%s384 + $0x58] sm:$0xff]
        %v489 = vld [vmem:[%s384 + $0x60] sm:$0xff]
        %v490 = vld [vmem:[%s384 + $0x68] sm:$0xff]
        %v491 = vld [vmem:[%s384 + $0x70] sm:$0xff]
        %v492 = vld [vmem:[%s384 + $0x78] sm:$0xff]
        %v493 = vld [vmem:[%s384 + $0x80] sm:$0xff]
        %v494 = vld [vmem:[%s384 + $0x88] sm:$0xff]
        %v495 = vld [vmem:[%s384 + $0x90] sm:$0xff]
        %v496 = vld [vmem:[%s384 + $0x98] sm:$0xff]
        %v497 = vld [vmem:[%s384 + $0xa0] sm:$0xff]
        %v498 = vld [vmem:[%s384 + $0xa8] sm:$0xff]
        %v499 = vld [vmem:[%s384 + $0xb0] sm:$0xff]
        %v500 = vld [vmem:[%s384 + $0xb8] sm:$0xff]
        %v501 = vld [vmem:[%s384 + $0xc0] sm:$0xff]
        %v502 = vld [vmem:[%s384 + $0xc8] sm:$0xff]
        %v503 = vld [vmem:[%s384 + $0xd0] sm:$0xff]
        %v504 = vld [vmem:[%s384 + $0xd8] sm:$0xff]
        %v505 = vld [vmem:[%s384 + $0xe0] sm:$0xff]
        %v506 = vld [vmem:[%s384 + $0xe8] sm:$0xff]
        %v507 = vld [vmem:[%s384 + $0xf0] sm:$0xff]
        %v508 = vld [vmem:[%s384 + $0xf8] sm:$0xff]
        %v509 = vld [vmem:[%s1] sm:$0x1]
        %v511 = vlaneseq
        %v512 = vshrl.u32 %v511, 7
        %v513 = vsub.s32 0, %v512
        %v514 = vrot.slane %v509, %v513
        %v516 = vmul.f32 %v477, %v514
        %v517 = vmul.f32 %v478, %v514
        %v518 = vmul.f32 %v479, %v514
        %v519 = vmul.f32 %v480, %v514
        %v520 = vmul.f32 %v481, %v514
        %v521 = vmul.f32 %v482, %v514
        %v522 = vmul.f32 %v483, %v514
        %v523 = vmul.f32 %v484, %v514
        %v524 = vmul.f32 %v485, %v514
        %v525 = vmul.f32 %v486, %v514
        %v526 = vmul.f32 %v487, %v514
        %v527 = vmul.f32 %v488, %v514
        %v528 = vmul.f32 %v489, %v514
        %v529 = vmul.f32 %v490, %v514
        %v530 = vmul.f32 %v491, %v514
        %v531 = vmul.f32 %v492, %v514
        %v532 = vmul.f32 %v493, %v514
        %v533 = vmul.f32 %v494, %v514
        %v534 = vmul.f32 %v495, %v514
        %v535 = vmul.f32 %v496, %v514
        %v536 = vmul.f32 %v497, %v514
        %v537 = vmul.f32 %v498, %v514
        %v538 = vmul.f32 %v499, %v514
        %v539 = vmul.f32 %v500, %v514
        %v540 = vmul.f32 %v501, %v514
        %v541 = vmul.f32 %v502, %v514
        %v542 = vmul.f32 %v503, %v514
        %v543 = vmul.f32 %v504, %v514
        %v544 = vmul.f32 %v505, %v514
        %v545 = vmul.f32 %v506, %v514
        %v546 = vmul.f32 %v507, %v514
        %v547 = vmul.f32 %v508, %v514
        %v548 = vld [vmem:[%s2] sm:$0x1]
        %v550 = vlaneseq
        %v551 = vshrl.u32 %v550, 7
        %v552 = vsub.s32 0, %v551
        %v553 = vrot.slane %v548, %v552
        %v555 = vadd.f32 %v516, %v553
        %v556 = vadd.f32 %v517, %v553
        %v557 = vadd.f32 %v518, %v553
        %v558 = vadd.f32 %v519, %v553
        %v559 = vadd.f32 %v520, %v553
        %v560 = vadd.f32 %v521, %v553
        %v561 = vadd.f32 %v522, %v553
        %v562 = vadd.f32 %v523, %v553
        %v563 = vadd.f32 %v524, %v553
        %v564 = vadd.f32 %v525, %v553
        %v565 = vadd.f32 %v526, %v553
        %v566 = vadd.f32 %v527, %v553
        %v567 = vadd.f32 %v528, %v553
        %v568 = vadd.f32 %v529, %v553
        %v569 = vadd.f32 %v530, %v553
        %v570 = vadd.f32 %v531, %v553
        %v571 = vadd.f32 %v532, %v553
        %v572 = vadd.f32 %v533, %v553
        %v573 = vadd.f32 %v534, %v553
        %v574 = vadd.f32 %v535, %v553
        %v575 = vadd.f32 %v536, %v553
        %v576 = vadd.f32 %v537, %v553
        %v577 = vadd.f32 %v538, %v553
        %v578 = vadd.f32 %v539, %v553
        %v579 = vadd.f32 %v540, %v553
        %v580 = vadd.f32 %v541, %v553
        %v581 = vadd.f32 %v542, %v553
        %v582 = vadd.f32 %v543, %v553
        %v583 = vadd.f32 %v544, %v553
        %v584 = vadd.f32 %v545, %v553
        %v585 = vadd.f32 %v546, %v553
        %v586 = vadd.f32 %v547, %v553
        %s587 = scalar_lea.vmem [#allocation2], 24
        %588 = vst.msk [vmem:[%s587 + $0x1] sm:$0xff] %vm385, %v555
        %589 = vst.msk [vmem:[%s587 + $0x9] sm:$0xff] %vm385, %v556
        %590 = vst.msk [vmem:[%s587 + $0x19] sm:$0xff] %vm385, %v557
        %591 = vst.msk [vmem:[%s587 + $0x21] sm:$0xff] %vm385, %v558
        %592 = vst.msk [vmem:[%s587 + $0x31] sm:$0xff] %vm385, %v559
        %593 = vst.msk [vmem:[%s587 + $0x39] sm:$0xff] %vm385, %v560
        %594 = vst.msk [vmem:[%s587 + $0x49] sm:$0xff] %vm385, %v561
        %595 = vst.msk [vmem:[%s587 + $0x51] sm:$0xff] %vm385, %v562
        %596 = vst.msk [vmem:[%s587 + $0x61] sm:$0xff] %vm385, %v563
        %597 = vst.msk [vmem:[%s587 + $0x69] sm:$0xff] %vm385, %v564
        %598 = vst.msk [vmem:[%s587 + $0x79] sm:$0xff] %vm385, %v565
        %599 = vst.msk [vmem:[%s587 + $0x81] sm:$0xff] %vm385, %v566
        %600 = vst.msk [vmem:[%s587 + $0x91] sm:$0xff] %vm385, %v567
        %601 = vst.msk [vmem:[%s587 + $0x99] sm:$0xff] %vm385, %v568
        %602 = vst.msk [vmem:[%s587 + $0xa9] sm:$0xff] %vm385, %v569
        %603 = vst.msk [vmem:[%s587 + $0xb1] sm:$0xff] %vm385, %v570
        %604 = vst.msk [vmem:[%s587 + $0xc1] sm:$0xff] %vm385, %v571
        %605 = vst.msk [vmem:[%s587 + $0xc9] sm:$0xff] %vm385, %v572
        %606 = vst.msk [vmem:[%s587 + $0xd9] sm:$0xff] %vm385, %v573
        %607 = vst.msk [vmem:[%s587 + $0xe1] sm:$0xff] %vm385, %v574
        %608 = vst.msk [vmem:[%s587 + $0xf1] sm:$0xff] %vm385, %v575
        %609 = vst.msk [vmem:[%s587 + $0xf9] sm:$0xff] %vm385, %v576
        %610 = vst.msk [vmem:[%s587 + $0x109] sm:$0xff] %vm385, %v577
        %611 = vst.msk [vmem:[%s587 + $0x111] sm:$0xff] %vm385, %v578
        %612 = vst.msk [vmem:[%s587 + $0x121] sm:$0xff] %vm385, %v579
        %613 = vst.msk [vmem:[%s587 + $0x129] sm:$0xff] %vm385, %v580
        %614 = vst.msk [vmem:[%s587 + $0x139] sm:$0xff] %vm385, %v581
        %615 = vst.msk [vmem:[%s587 + $0x141] sm:$0xff] %vm385, %v582
        %616 = vst.msk [vmem:[%s587 + $0x151] sm:$0xff] %vm385, %v583
        %617 = vst.msk [vmem:[%s587 + $0x159] sm:$0xff] %vm385, %v584
        %618 = vst.msk [vmem:[%s587 + $0x169] sm:$0xff] %vm385, %v585
        %619 = vst.msk [vmem:[%s587 + $0x171] sm:$0xff] %vm385, %v586
        %v620 = vld [vmem:[#allocation2] sm:$0xff]
        %v621 = vld [vmem:[#allocation2 + $0x8] sm:$0xff]
        %v622 = vld [vmem:[#allocation2 + $0x18] sm:$0xff]
        %v623 = vld [vmem:[#allocation2 + $0x20] sm:$0xff]
        %v624 = vld [vmem:[#allocation2 + $0x30] sm:$0xff]
        %v625 = vld [vmem:[#allocation2 + $0x38] sm:$0xff]
        %v626 = vld [vmem:[#allocation2 + $0x48] sm:$0xff]
        %v627 = vld [vmem:[#allocation2 + $0x50] sm:$0xff]
        %v628 = vld [vmem:[#allocation2 + $0x60] sm:$0xff]
        %v629 = vld [vmem:[#allocation2 + $0x68] sm:$0xff]
        %v630 = vld [vmem:[#allocation2 + $0x78] sm:$0xff]
        %v631 = vld [vmem:[#allocation2 + $0x80] sm:$0xff]
        %v632 = vld [vmem:[#allocation2 + $0x90] sm:$0xff]
        %v633 = vld [vmem:[#allocation2 + $0x98] sm:$0xff]
        %v634 = vld [vmem:[#allocation2 + $0xa8] sm:$0xff]
        %v635 = vld [vmem:[#allocation2 + $0xb0] sm:$0xff]
        %v636 = vld [vmem:[#allocation2 + $0xc0] sm:$0xff]
        %v637 = vld [vmem:[#allocation2 + $0xc8] sm:$0xff]
        %v638 = vld [vmem:[#allocation2 + $0xd8] sm:$0xff]
        %v639 = vld [vmem:[#allocation2 + $0xe0] sm:$0xff]
        %v640 = vld [vmem:[#allocation2 + $0xf0] sm:$0xff]
        %v641 = vld [vmem:[#allocation2 + $0xf8] sm:$0xff]
        %v642 = vld [vmem:[#allocation2 + $0x108] sm:$0xff]
        %v643 = vld [vmem:[#allocation2 + $0x110] sm:$0xff]
        %v644 = vld [vmem:[#allocation2 + $0x120] sm:$0xff]
        %v645 = vld [vmem:[#allocation2 + $0x128] sm:$0xff]
        %v646 = vld [vmem:[#allocation2 + $0x138] sm:$0xff]
        %v647 = vld [vmem:[#allocation2 + $0x140] sm:$0xff]
        %v648 = vld [vmem:[#allocation2 + $0x150] sm:$0xff]
        %v649 = vld [vmem:[#allocation2 + $0x158] sm:$0xff]
        %v650 = vld [vmem:[#allocation2 + $0x168] sm:$0xff]
        %v651 = vld [vmem:[#allocation2 + $0x170] sm:$0xff]
        %v652 = vld [vmem:[%s3] sm:$0xf]
        %v653 = vld [vmem:[#allocation2 + $0x1] sm:$0xff]
        %v654 = vld [vmem:[#allocation2 + $0x9] sm:$0xff]
        %v655 = vld [vmem:[#allocation2 + $0x19] sm:$0xff]
        %v656 = vld [vmem:[#allocation2 + $0x21] sm:$0xff]
        %v657 = vld [vmem:[#allocation2 + $0x31] sm:$0xff]
        %v658 = vld [vmem:[#allocation2 + $0x39] sm:$0xff]
        %v659 = vld [vmem:[#allocation2 + $0x49] sm:$0xff]
        %v660 = vld [vmem:[#allocation2 + $0x51] sm:$0xff]
        %v661 = vld [vmem:[#allocation2 + $0x61] sm:$0xff]
        %v662 = vld [vmem:[#allocation2 + $0x69] sm:$0xff]
        %v663 = vld [vmem:[#allocation2 + $0x79] sm:$0xff]
        %v664 = vld [vmem:[#allocation2 + $0x81] sm:$0xff]
        %v665 = vld [vmem:[#allocation2 + $0x91] sm:$0xff]
        %v666 = vld [vmem:[#allocation2 + $0x99] sm:$0xff]
        %v667 = vld [vmem:[#allocation2 + $0xa9] sm:$0xff]
        %v668 = vld [vmem:[#allocation2 + $0xb1] sm:$0xff]
        %v669 = vld [vmem:[#allocation2 + $0xc1] sm:$0xff]
        %v670 = vld [vmem:[#allocation2 + $0xc9] sm:$0xff]
        %v671 = vld [vmem:[#allocation2 + $0xd9] sm:$0xff]
        %v672 = vld [vmem:[#allocation2 + $0xe1] sm:$0xff]
        %v673 = vld [vmem:[#allocation2 + $0xf1] sm:$0xff]
        %v674 = vld [vmem:[#allocation2 + $0xf9] sm:$0xff]
        %v675 = vld [vmem:[#allocation2 + $0x109] sm:$0xff]
        %v676 = vld [vmem:[#allocation2 + $0x111] sm:$0xff]
        %v677 = vld [vmem:[#allocation2 + $0x121] sm:$0xff]
        %v678 = vld [vmem:[#allocation2 + $0x129] sm:$0xff]
        %v679 = vld [vmem:[#allocation2 + $0x139] sm:$0xff]
        %v680 = vld [vmem:[#allocation2 + $0x141] sm:$0xff]
        %v681 = vld [vmem:[#allocation2 + $0x151] sm:$0xff]
        %v682 = vld [vmem:[#allocation2 + $0x159] sm:$0xff]
        %v683 = vld [vmem:[#allocation2 + $0x169] sm:$0xff]
        %v684 = vld [vmem:[#allocation2 + $0x171] sm:$0xff]
        %s685 = scalar_lea.vmem %s3, 4
        %v686 = vld [vmem:[%s685] sm:$0xf]
        %v688 = vsel %vm385, %v653, 0
        %v691 = vsel %vm385, %v654, 0
        %v694 = vsel %vm385, %v655, 0
        %v697 = vsel %vm385, %v656, 0
        %v700 = vsel %vm385, %v657, 0
        %v703 = vsel %vm385, %v658, 0
        %v706 = vsel %vm385, %v659, 0
        %v709 = vsel %vm385, %v660, 0
        %v712 = vsel %vm385, %v661, 0
        %v715 = vsel %vm385, %v662, 0
        %v718 = vsel %vm385, %v663, 0
        %v721 = vsel %vm385, %v664, 0
        %v724 = vsel %vm385, %v665, 0
        %v727 = vsel %vm385, %v666, 0
        %v730 = vsel %vm385, %v667, 0
        %v733 = vsel %vm385, %v668, 0
        %v736 = vsel %vm385, %v669, 0
        %v739 = vsel %vm385, %v670, 0
        %v742 = vsel %vm385, %v671, 0
        %v745 = vsel %vm385, %v672, 0
        %v748 = vsel %vm385, %v673, 0
        %v751 = vsel %vm385, %v674, 0
        %v754 = vsel %vm385, %v675, 0
        %v757 = vsel %vm385, %v676, 0
        %v760 = vsel %vm385, %v677, 0
        %v763 = vsel %vm385, %v678, 0
        %v766 = vsel %vm385, %v679, 0
        %v769 = vsel %vm385, %v680, 0
        %v772 = vsel %vm385, %v681, 0
        %v775 = vsel %vm385, %v682, 0
        %v778 = vsel %vm385, %v683, 0
        %v781 = vsel %vm385, %v684, 0
        %vm783 = vcmask 1043456
        %v785 = vsel %vm783, %v686, 0
        %787 = vmatprep.subr.mxu0 0.0
        %788 = vmatpush1.msra.mxu0 0.0
        %789 = vmatprep.subr.mxu0 0.0
        %790 = vmatpush1.msra.mxu0 0.0
        %791 = vmatprep.subr.mxu0 0.0
        %792 = vmatpush1.msra.mxu0 0.0
        %793 = vmatprep.subr.mxu0 0.0
        %794 = vmatpush1.msra.mxu0 0.0
        %795 = vmatprep.subr.mxu0 0.0
        %796 = vmatpush1.msra.mxu0 0.0
        %797 = vmatprep.subr.mxu0 0.0
        %798 = vmatpush1.msra.mxu0 0.0
        %799 = vmatprep.subr.mxu0 0.0
        %800 = vmatpush1.msra.mxu0 0.0
        %801 = vmatprep.subr.mxu0 0.0
        %802 = vmatpush1.msra.mxu0 0.0
        %803 = vmatprep.subr.mxu0 0.0
        %804 = vmatpush1.msra.mxu0 0.0
        %805 = vmatprep.subr.mxu0 0.0
        %806 = vmatpush1.msra.mxu0 0.0
        %807 = vmatprep.subr.mxu0 0.0
        %808 = vmatpush1.msra.mxu0 0.0
        %809 = vmatprep.subr.mxu0 0.0
        %810 = vmatpush1.msra.mxu0 0.0
        %811 = vmatprep.subr.mxu0 0.0
        %812 = vmatpush1.msra.mxu0 0.0
        %813 = vmatprep.subr.mxu0 0.0
        %814 = vmatpush1.msra.mxu0 0.0
        %815 = vmatprep.subr.mxu0 0.0
        %816 = vmatpush1.msra.mxu0 0.0
        %817 = vmatprep.subr.mxu0 0.0
        %818 = vmatpush1.msra.mxu0 %v785
        %819 = vmatprep.subr.mxu0 0.0
        %820 = vmatpush2.msra.mxu0 0.0
        %821 = vmatprep.subr.mxu0 0.0
        %822 = vmatpush2.msra.mxu0 0.0
        %823 = vmatprep.subr.mxu0 0.0
        %824 = vmatpush2.msra.mxu0 0.0
        %825 = vmatprep.subr.mxu0 0.0
        %826 = vmatpush2.msra.mxu0 0.0
        %827 = vmatprep.subr.mxu0 0.0
        %828 = vmatpush2.msra.mxu0 0.0
        %829 = vmatprep.subr.mxu0 0.0
        %830 = vmatpush2.msra.mxu0 0.0
        %831 = vmatprep.subr.mxu0 0.0
        %832 = vmatpush2.msra.mxu0 0.0
        %833 = vmatprep.subr.mxu0 0.0
        %834 = vmatpush2.msra.mxu0 0.0
        %835 = vmatprep.subr.mxu0 0.0
        %836 = vmatpush2.msra.mxu0 0.0
        %837 = vmatprep.subr.mxu0 0.0
        %838 = vmatpush2.msra.mxu0 0.0
        %839 = vmatprep.subr.mxu0 0.0
        %840 = vmatpush2.msra.mxu0 0.0
        %841 = vmatprep.subr.mxu0 0.0
        %842 = vmatpush2.msra.mxu0 0.0
        %843 = vmatprep.subr.mxu0 0.0
        %844 = vmatpush2.msra.mxu0 0.0
        %845 = vmatprep.subr.mxu0 0.0
        %846 = vmatpush2.msra.mxu0 0.0
        %847 = vmatprep.subr.mxu0 0.0
        %848 = vmatpush2.msra.mxu0 0.0
        %849 = vmatprep.subr.mxu0 0.0
        %850 = vmatpush2.msra.mxu0 0.0
        %851 = vmatprep.mubr.f32.mxu0 0.0
        %852 = vmatmul.mubr.f32.gmra.mxu0 %v688
        %v853 = vpop.f32.mrf.mxu0
        %v854 = vadd.f32 0.0, %v853
        %v855 = vpop.f32.mrf.mxu0
        %856 = vmatprep.mubr.f32.mxu0 0.0
        %857 = vmatmul.mubr.f32.gmra.mxu0 %v691
        %v858 = vpop.f32.mrf.mxu0
        %v859 = vadd.f32 0.0, %v858
        %v860 = vpop.f32.mrf.mxu0
        %861 = vmatprep.mubr.f32.mxu0 0.0
        %862 = vmatmul.mubr.f32.gmra.mxu0 %v694
        %v863 = vpop.f32.mrf.mxu0
        %v864 = vadd.f32 0.0, %v863
        %v865 = vpop.f32.mrf.mxu0
        %866 = vmatprep.mubr.f32.mxu0 0.0
        %867 = vmatmul.mubr.f32.gmra.mxu0 %v697
        %v868 = vpop.f32.mrf.mxu0
        %v869 = vadd.f32 0.0, %v868
        %v870 = vpop.f32.mrf.mxu0
        %871 = vmatprep.mubr.f32.mxu0 0.0
        %872 = vmatmul.mubr.f32.gmra.mxu0 %v700
        %v873 = vpop.f32.mrf.mxu0
        %v874 = vadd.f32 0.0, %v873
        %v875 = vpop.f32.mrf.mxu0
        %876 = vmatprep.mubr.f32.mxu0 0.0
        %877 = vmatmul.mubr.f32.gmra.mxu0 %v703
        %v878 = vpop.f32.mrf.mxu0
        %v879 = vadd.f32 0.0, %v878
        %v880 = vpop.f32.mrf.mxu0
        %881 = vmatprep.mubr.f32.mxu0 0.0
        %882 = vmatmul.mubr.f32.gmra.mxu0 %v706
        %v883 = vpop.f32.mrf.mxu0
        %v884 = vadd.f32 0.0, %v883
        %v885 = vpop.f32.mrf.mxu0
        %886 = vmatprep.mubr.f32.mxu0 0.0
        %887 = vmatmul.mubr.f32.gmra.mxu0 %v709
        %v888 = vpop.f32.mrf.mxu0
        %v889 = vadd.f32 0.0, %v888
        %v890 = vpop.f32.mrf.mxu0
        %891 = vmatprep.mubr.f32.mxu0 0.0
        %892 = vmatmul.mubr.f32.gmra.mxu0 %v712
        %v893 = vpop.f32.mrf.mxu0
        %v894 = vadd.f32 0.0, %v893
        %v895 = vpop.f32.mrf.mxu0
        %896 = vmatprep.mubr.f32.mxu0 0.0
        %897 = vmatmul.mubr.f32.gmra.mxu0 %v715
        %v898 = vpop.f32.mrf.mxu0
        %v899 = vadd.f32 0.0, %v898
        %v900 = vpop.f32.mrf.mxu0
        %901 = vmatprep.mubr.f32.mxu0 0.0
        %902 = vmatmul.mubr.f32.gmra.mxu0 %v718
        %v903 = vpop.f32.mrf.mxu0
        %v904 = vadd.f32 0.0, %v903
        %v905 = vpop.f32.mrf.mxu0
        %906 = vmatprep.mubr.f32.mxu0 0.0
        %907 = vmatmul.mubr.f32.gmra.mxu0 %v721
        %v908 = vpop.f32.mrf.mxu0
        %v909 = vadd.f32 0.0, %v908
        %v910 = vpop.f32.mrf.mxu0
        %911 = vmatprep.mubr.f32.mxu0 0.0
        %912 = vmatmul.mubr.f32.gmra.mxu0 %v724
        %v913 = vpop.f32.mrf.mxu0
        %v914 = vadd.f32 0.0, %v913
        %v915 = vpop.f32.mrf.mxu0
        %916 = vmatprep.mubr.f32.mxu0 0.0
        %917 = vmatmul.mubr.f32.gmra.mxu0 %v727
        %v918 = vpop.f32.mrf.mxu0
        %v919 = vadd.f32 0.0, %v918
        %v920 = vpop.f32.mrf.mxu0
        %921 = vmatprep.mubr.f32.mxu0 0.0
        %922 = vmatmul.mubr.f32.gmra.mxu0 %v730
        %v923 = vpop.f32.mrf.mxu0
        %v924 = vadd.f32 0.0, %v923
        %v925 = vpop.f32.mrf.mxu0
        %926 = vmatprep.mubr.f32.mxu0 0.0
        %927 = vmatmul.mubr.f32.gmra.mxu0 %v733
        %v928 = vpop.f32.mrf.mxu0
        %v929 = vadd.f32 0.0, %v928
        %v930 = vpop.f32.mrf.mxu0
        %931 = vmatprep.mubr.f32.mxu0 0.0
        %932 = vmatmul.mubr.f32.gmra.mxu0 %v736
        %v933 = vpop.f32.mrf.mxu0
        %v934 = vadd.f32 0.0, %v933
        %v935 = vpop.f32.mrf.mxu0
        %936 = vmatprep.mubr.f32.mxu0 0.0
        %937 = vmatmul.mubr.f32.gmra.mxu0 %v739
        %v938 = vpop.f32.mrf.mxu0
        %v939 = vadd.f32 0.0, %v938
        %v940 = vpop.f32.mrf.mxu0
        %941 = vmatprep.mubr.f32.mxu0 0.0
        %942 = vmatmul.mubr.f32.gmra.mxu0 %v742
        %v943 = vpop.f32.mrf.mxu0
        %v944 = vadd.f32 0.0, %v943
        %v945 = vpop.f32.mrf.mxu0
        %946 = vmatprep.mubr.f32.mxu0 0.0
        %947 = vmatmul.mubr.f32.gmra.mxu0 %v745
        %v948 = vpop.f32.mrf.mxu0
        %v949 = vadd.f32 0.0, %v948
        %v950 = vpop.f32.mrf.mxu0
        %951 = vmatprep.mubr.f32.mxu0 0.0
        %952 = vmatmul.mubr.f32.gmra.mxu0 %v748
        %v953 = vpop.f32.mrf.mxu0
        %v954 = vadd.f32 0.0, %v953
        %v955 = vpop.f32.mrf.mxu0
        %956 = vmatprep.mubr.f32.mxu0 0.0
        %957 = vmatmul.mubr.f32.gmra.mxu0 %v751
        %v958 = vpop.f32.mrf.mxu0
        %v959 = vadd.f32 0.0, %v958
        %v960 = vpop.f32.mrf.mxu0
        %961 = vmatprep.mubr.f32.mxu0 0.0
        %962 = vmatmul.mubr.f32.gmra.mxu0 %v754
        %v963 = vpop.f32.mrf.mxu0
        %v964 = vadd.f32 0.0, %v963
        %v965 = vpop.f32.mrf.mxu0
        %966 = vmatprep.mubr.f32.mxu0 0.0
        %967 = vmatmul.mubr.f32.gmra.mxu0 %v757
        %v968 = vpop.f32.mrf.mxu0
        %v969 = vadd.f32 0.0, %v968
        %v970 = vpop.f32.mrf.mxu0
        %971 = vmatprep.mubr.f32.mxu0 0.0
        %972 = vmatmul.mubr.f32.gmra.mxu0 %v760
        %v973 = vpop.f32.mrf.mxu0
        %v974 = vadd.f32 0.0, %v973
        %v975 = vpop.f32.mrf.mxu0
        %976 = vmatprep.mubr.f32.mxu0 0.0
        %977 = vmatmul.mubr.f32.gmra.mxu0 %v763
        %v978 = vpop.f32.mrf.mxu0
        %v979 = vadd.f32 0.0, %v978
        %v980 = vpop.f32.mrf.mxu0
        %981 = vmatprep.mubr.f32.mxu0 0.0
        %982 = vmatmul.mubr.f32.gmra.mxu0 %v766
        %v983 = vpop.f32.mrf.mxu0
        %v984 = vadd.f32 0.0, %v983
        %v985 = vpop.f32.mrf.mxu0
        %986 = vmatprep.mubr.f32.mxu0 0.0
        %987 = vmatmul.mubr.f32.gmra.mxu0 %v769
        %v988 = vpop.f32.mrf.mxu0
        %v989 = vadd.f32 0.0, %v988
        %v990 = vpop.f32.mrf.mxu0
        %991 = vmatprep.mubr.f32.mxu0 0.0
        %992 = vmatmul.mubr.f32.gmra.mxu0 %v772
        %v993 = vpop.f32.mrf.mxu0
        %v994 = vadd.f32 0.0, %v993
        %v995 = vpop.f32.mrf.mxu0
        %996 = vmatprep.mubr.f32.mxu0 0.0
        %997 = vmatmul.mubr.f32.gmra.mxu0 %v775
        %v998 = vpop.f32.mrf.mxu0
        %v999 = vadd.f32 0.0, %v998
        %v1000 = vpop.f32.mrf.mxu0
        %1001 = vmatprep.mubr.f32.mxu0 0.0
        %1002 = vmatmul.mubr.f32.gmra.mxu0 %v778
        %v1003 = vpop.f32.mrf.mxu0
        %v1004 = vadd.f32 0.0, %v1003
        %v1005 = vpop.f32.mrf.mxu0
        %1006 = vmatprep.mubr.f32.mxu0 0.0
        %1007 = vmatmul.mubr.f32.gmra.mxu0 %v781
        %v1008 = vpop.f32.mrf.mxu0
        %v1009 = vadd.f32 0.0, %v1008
        %v1010 = vpop.f32.mrf.mxu0
        %1011 = vdwg.mxu0
        %v1013 = vsel %vm385, %v620, 0
        %v1016 = vsel %vm385, %v621, 0
        %v1019 = vsel %vm385, %v622, 0
        %v1022 = vsel %vm385, %v623, 0
        %v1025 = vsel %vm385, %v624, 0
        %v1028 = vsel %vm385, %v625, 0
        %v1031 = vsel %vm385, %v626, 0
        %v1034 = vsel %vm385, %v627, 0
        %v1037 = vsel %vm385, %v628, 0
        %v1040 = vsel %vm385, %v629, 0
        %v1043 = vsel %vm385, %v630, 0
        %v1046 = vsel %vm385, %v631, 0
        %v1049 = vsel %vm385, %v632, 0
        %v1052 = vsel %vm385, %v633, 0
        %v1055 = vsel %vm385, %v634, 0
        %v1058 = vsel %vm385, %v635, 0
        %v1061 = vsel %vm385, %v636, 0
        %v1064 = vsel %vm385, %v637, 0
        %v1067 = vsel %vm385, %v638, 0
        %v1070 = vsel %vm385, %v639, 0
        %v1073 = vsel %vm385, %v640, 0
        %v1076 = vsel %vm385, %v641, 0
        %v1079 = vsel %vm385, %v642, 0
        %v1082 = vsel %vm385, %v643, 0
        %v1085 = vsel %vm385, %v644, 0
        %v1088 = vsel %vm385, %v645, 0
        %v1091 = vsel %vm385, %v646, 0
        %v1094 = vsel %vm385, %v647, 0
        %v1097 = vsel %vm385, %v648, 0
        %v1100 = vsel %vm385, %v649, 0
        %v1103 = vsel %vm385, %v650, 0
        %v1106 = vsel %vm385, %v651, 0
        %v1109 = vsel %vm783, %v652, 0
        %1111 = vmatprep.subr.mxu0 0.0
        %1112 = vmatpush1.msra.mxu0 0.0
        %1113 = vmatprep.subr.mxu0 0.0
        %1114 = vmatpush1.msra.mxu0 0.0
        %1115 = vmatprep.subr.mxu0 0.0
        %1116 = vmatpush1.msra.mxu0 0.0
        %1117 = vmatprep.subr.mxu0 0.0
        %1118 = vmatpush1.msra.mxu0 0.0
        %1119 = vmatprep.subr.mxu0 0.0
        %1120 = vmatpush1.msra.mxu0 0.0
        %1121 = vmatprep.subr.mxu0 0.0
        %1122 = vmatpush1.msra.mxu0 0.0
        %1123 = vmatprep.subr.mxu0 0.0
        %1124 = vmatpush1.msra.mxu0 0.0
        %1125 = vmatprep.subr.mxu0 0.0
        %1126 = vmatpush1.msra.mxu0 0.0
        %1127 = vmatprep.subr.mxu0 0.0
        %1128 = vmatpush1.msra.mxu0 0.0
        %1129 = vmatprep.subr.mxu0 0.0
        %1130 = vmatpush1.msra.mxu0 0.0
        %1131 = vmatprep.subr.mxu0 0.0
        %1132 = vmatpush1.msra.mxu0 0.0
        %1133 = vmatprep.subr.mxu0 0.0
        %1134 = vmatpush1.msra.mxu0 0.0
        %1135 = vmatprep.subr.mxu0 0.0
        %1136 = vmatpush1.msra.mxu0 0.0
        %1137 = vmatprep.subr.mxu0 0.0
        %1138 = vmatpush1.msra.mxu0 0.0
        %1139 = vmatprep.subr.mxu0 0.0
        %1140 = vmatpush1.msra.mxu0 0.0
        %1141 = vmatprep.subr.mxu0 0.0
        %1142 = vmatpush1.msra.mxu0 %v1109
        %1143 = vmatprep.subr.mxu0 0.0
        %1144 = vmatpush2.msra.mxu0 0.0
        %1145 = vmatprep.subr.mxu0 0.0
        %1146 = vmatpush2.msra.mxu0 0.0
        %1147 = vmatprep.subr.mxu0 0.0
        %1148 = vmatpush2.msra.mxu0 0.0
        %1149 = vmatprep.subr.mxu0 0.0
        %1150 = vmatpush2.msra.mxu0 0.0
        %1151 = vmatprep.subr.mxu0 0.0
        %1152 = vmatpush2.msra.mxu0 0.0
        %1153 = vmatprep.subr.mxu0 0.0
        %1154 = vmatpush2.msra.mxu0 0.0
        %1155 = vmatprep.subr.mxu0 0.0
        %1156 = vmatpush2.msra.mxu0 0.0
        %1157 = vmatprep.subr.mxu0 0.0
        %1158 = vmatpush2.msra.mxu0 0.0
        %1159 = vmatprep.subr.mxu0 0.0
        %1160 = vmatpush2.msra.mxu0 0.0
        %1161 = vmatprep.subr.mxu0 0.0
        %1162 = vmatpush2.msra.mxu0 0.0
        %1163 = vmatprep.subr.mxu0 0.0
        %1164 = vmatpush2.msra.mxu0 0.0
        %1165 = vmatprep.subr.mxu0 0.0
        %1166 = vmatpush2.msra.mxu0 0.0
        %1167 = vmatprep.subr.mxu0 0.0
        %1168 = vmatpush2.msra.mxu0 0.0
        %1169 = vmatprep.subr.mxu0 0.0
        %1170 = vmatpush2.msra.mxu0 0.0
        %1171 = vmatprep.subr.mxu0 0.0
        %1172 = vmatpush2.msra.mxu0 0.0
        %1173 = vmatprep.subr.mxu0 0.0
        %1174 = vmatpush2.msra.mxu0 0.0
        %1175 = vmatprep.mubr.f32.mxu0 0.0
        %1176 = vmatmul.mubr.f32.gmra.mxu0 %v1013
        %v1177 = vpop.f32.mrf.mxu0
        %v1178 = vadd.f32 %v854, %v1177
        %v1179 = vpop.f32.mrf.mxu0
        %1180 = vmatprep.mubr.f32.mxu0 0.0
        %1181 = vmatmul.mubr.f32.gmra.mxu0 %v1016
        %v1182 = vpop.f32.mrf.mxu0
        %v1183 = vadd.f32 %v859, %v1182
        %v1184 = vpop.f32.mrf.mxu0
        %1185 = vmatprep.mubr.f32.mxu0 0.0
        %1186 = vmatmul.mubr.f32.gmra.mxu0 %v1019
        %v1187 = vpop.f32.mrf.mxu0
        %v1188 = vadd.f32 %v864, %v1187
        %v1189 = vpop.f32.mrf.mxu0
        %1190 = vmatprep.mubr.f32.mxu0 0.0
        %1191 = vmatmul.mubr.f32.gmra.mxu0 %v1022
        %v1192 = vpop.f32.mrf.mxu0
        %v1193 = vadd.f32 %v869, %v1192
        %v1194 = vpop.f32.mrf.mxu0
        %1195 = vmatprep.mubr.f32.mxu0 0.0
        %1196 = vmatmul.mubr.f32.gmra.mxu0 %v1025
        %v1197 = vpop.f32.mrf.mxu0
        %v1198 = vadd.f32 %v874, %v1197
        %v1199 = vpop.f32.mrf.mxu0
        %1200 = vmatprep.mubr.f32.mxu0 0.0
        %1201 = vmatmul.mubr.f32.gmra.mxu0 %v1028
        %v1202 = vpop.f32.mrf.mxu0
        %v1203 = vadd.f32 %v879, %v1202
        %v1204 = vpop.f32.mrf.mxu0
        %1205 = vmatprep.mubr.f32.mxu0 0.0
        %1206 = vmatmul.mubr.f32.gmra.mxu0 %v1031
        %v1207 = vpop.f32.mrf.mxu0
        %v1208 = vadd.f32 %v884, %v1207
        %v1209 = vpop.f32.mrf.mxu0
        %1210 = vmatprep.mubr.f32.mxu0 0.0
        %1211 = vmatmul.mubr.f32.gmra.mxu0 %v1034
        %v1212 = vpop.f32.mrf.mxu0
        %v1213 = vadd.f32 %v889, %v1212
        %v1214 = vpop.f32.mrf.mxu0
        %1215 = vmatprep.mubr.f32.mxu0 0.0
        %1216 = vmatmul.mubr.f32.gmra.mxu0 %v1037
        %v1217 = vpop.f32.mrf.mxu0
        %v1218 = vadd.f32 %v894, %v1217
        %v1219 = vpop.f32.mrf.mxu0
        %1220 = vmatprep.mubr.f32.mxu0 0.0
        %1221 = vmatmul.mubr.f32.gmra.mxu0 %v1040
        %v1222 = vpop.f32.mrf.mxu0
        %v1223 = vadd.f32 %v899, %v1222
        %v1224 = vpop.f32.mrf.mxu0
        %1225 = vmatprep.mubr.f32.mxu0 0.0
        %1226 = vmatmul.mubr.f32.gmra.mxu0 %v1043
        %v1227 = vpop.f32.mrf.mxu0
        %v1228 = vadd.f32 %v904, %v1227
        %v1229 = vpop.f32.mrf.mxu0
        %1230 = vmatprep.mubr.f32.mxu0 0.0
        %1231 = vmatmul.mubr.f32.gmra.mxu0 %v1046
        %v1232 = vpop.f32.mrf.mxu0
        %v1233 = vadd.f32 %v909, %v1232
        %v1234 = vpop.f32.mrf.mxu0
        %1235 = vmatprep.mubr.f32.mxu0 0.0
        %1236 = vmatmul.mubr.f32.gmra.mxu0 %v1049
        %v1237 = vpop.f32.mrf.mxu0
        %v1238 = vadd.f32 %v914, %v1237
        %v1239 = vpop.f32.mrf.mxu0
        %1240 = vmatprep.mubr.f32.mxu0 0.0
        %1241 = vmatmul.mubr.f32.gmra.mxu0 %v1052
        %v1242 = vpop.f32.mrf.mxu0
        %v1243 = vadd.f32 %v919, %v1242
        %v1244 = vpop.f32.mrf.mxu0
        %1245 = vmatprep.mubr.f32.mxu0 0.0
        %1246 = vmatmul.mubr.f32.gmra.mxu0 %v1055
        %v1247 = vpop.f32.mrf.mxu0
        %v1248 = vadd.f32 %v924, %v1247
        %v1249 = vpop.f32.mrf.mxu0
        %1250 = vmatprep.mubr.f32.mxu0 0.0
        %1251 = vmatmul.mubr.f32.gmra.mxu0 %v1058
        %v1252 = vpop.f32.mrf.mxu0
        %v1253 = vadd.f32 %v929, %v1252
        %v1254 = vpop.f32.mrf.mxu0
        %1255 = vmatprep.mubr.f32.mxu0 0.0
        %1256 = vmatmul.mubr.f32.gmra.mxu0 %v1061
        %v1257 = vpop.f32.mrf.mxu0
        %v1258 = vadd.f32 %v934, %v1257
        %v1259 = vpop.f32.mrf.mxu0
        %1260 = vmatprep.mubr.f32.mxu0 0.0
        %1261 = vmatmul.mubr.f32.gmra.mxu0 %v1064
        %v1262 = vpop.f32.mrf.mxu0
        %v1263 = vadd.f32 %v939, %v1262
        %v1264 = vpop.f32.mrf.mxu0
        %1265 = vmatprep.mubr.f32.mxu0 0.0
        %1266 = vmatmul.mubr.f32.gmra.mxu0 %v1067
        %v1267 = vpop.f32.mrf.mxu0
        %v1268 = vadd.f32 %v944, %v1267
        %v1269 = vpop.f32.mrf.mxu0
        %1270 = vmatprep.mubr.f32.mxu0 0.0
        %1271 = vmatmul.mubr.f32.gmra.mxu0 %v1070
        %v1272 = vpop.f32.mrf.mxu0
        %v1273 = vadd.f32 %v949, %v1272
        %v1274 = vpop.f32.mrf.mxu0
        %1275 = vmatprep.mubr.f32.mxu0 0.0
        %1276 = vmatmul.mubr.f32.gmra.mxu0 %v1073
        %v1277 = vpop.f32.mrf.mxu0
        %v1278 = vadd.f32 %v954, %v1277
        %v1279 = vpop.f32.mrf.mxu0
        %1280 = vmatprep.mubr.f32.mxu0 0.0
        %1281 = vmatmul.mubr.f32.gmra.mxu0 %v1076
        %v1282 = vpop.f32.mrf.mxu0
        %v1283 = vadd.f32 %v959, %v1282
        %v1284 = vpop.f32.mrf.mxu0
        %1285 = vmatprep.mubr.f32.mxu0 0.0
        %1286 = vmatmul.mubr.f32.gmra.mxu0 %v1079
        %v1287 = vpop.f32.mrf.mxu0
        %v1288 = vadd.f32 %v964, %v1287
        %v1289 = vpop.f32.mrf.mxu0
        %1290 = vmatprep.mubr.f32.mxu0 0.0
        %1291 = vmatmul.mubr.f32.gmra.mxu0 %v1082
        %v1292 = vpop.f32.mrf.mxu0
        %v1293 = vadd.f32 %v969, %v1292
        %v1294 = vpop.f32.mrf.mxu0
        %1295 = vmatprep.mubr.f32.mxu0 0.0
        %1296 = vmatmul.mubr.f32.gmra.mxu0 %v1085
        %v1297 = vpop.f32.mrf.mxu0
        %v1298 = vadd.f32 %v974, %v1297
        %v1299 = vpop.f32.mrf.mxu0
        %1300 = vmatprep.mubr.f32.mxu0 0.0
        %1301 = vmatmul.mubr.f32.gmra.mxu0 %v1088
        %v1302 = vpop.f32.mrf.mxu0
        %v1303 = vadd.f32 %v979, %v1302
        %v1304 = vpop.f32.mrf.mxu0
        %1305 = vmatprep.mubr.f32.mxu0 0.0
        %1306 = vmatmul.mubr.f32.gmra.mxu0 %v1091
        %v1307 = vpop.f32.mrf.mxu0
        %v1308 = vadd.f32 %v984, %v1307
        %v1309 = vpop.f32.mrf.mxu0
        %1310 = vmatprep.mubr.f32.mxu0 0.0
        %1311 = vmatmul.mubr.f32.gmra.mxu0 %v1094
        %v1312 = vpop.f32.mrf.mxu0
        %v1313 = vadd.f32 %v989, %v1312
        %v1314 = vpop.f32.mrf.mxu0
        %1315 = vmatprep.mubr.f32.mxu0 0.0
        %1316 = vmatmul.mubr.f32.gmra.mxu0 %v1097
        %v1317 = vpop.f32.mrf.mxu0
        %v1318 = vadd.f32 %v994, %v1317
        %v1319 = vpop.f32.mrf.mxu0
        %1320 = vmatprep.mubr.f32.mxu0 0.0
        %1321 = vmatmul.mubr.f32.gmra.mxu0 %v1100
        %v1322 = vpop.f32.mrf.mxu0
        %v1323 = vadd.f32 %v999, %v1322
        %v1324 = vpop.f32.mrf.mxu0
        %1325 = vmatprep.mubr.f32.mxu0 0.0
        %1326 = vmatmul.mubr.f32.gmra.mxu0 %v1103
        %v1327 = vpop.f32.mrf.mxu0
        %v1328 = vadd.f32 %v1004, %v1327
        %v1329 = vpop.f32.mrf.mxu0
        %1330 = vmatprep.mubr.f32.mxu0 0.0
        %1331 = vmatmul.mubr.f32.gmra.mxu0 %v1106
        %v1332 = vpop.f32.mrf.mxu0
        %v1333 = vadd.f32 %v1009, %v1332
        %v1334 = vpop.f32.mrf.mxu0
        %1335 = vdwg.mxu0
        %v1336 = vld [vmem:[#allocation2 + $0x2] sm:$0xff]
        %v1337 = vld [vmem:[#allocation2 + $0xa] sm:$0xff]
        %v1338 = vld [vmem:[#allocation2 + $0x1a] sm:$0xff]
        %v1339 = vld [vmem:[#allocation2 + $0x22] sm:$0xff]
        %v1340 = vld [vmem:[#allocation2 + $0x32] sm:$0xff]
        %v1341 = vld [vmem:[#allocation2 + $0x3a] sm:$0xff]
        %v1342 = vld [vmem:[#allocation2 + $0x4a] sm:$0xff]
        %v1343 = vld [vmem:[#allocation2 + $0x52] sm:$0xff]
        %v1344 = vld [vmem:[#allocation2 + $0x62] sm:$0xff]
        %v1345 = vld [vmem:[#allocation2 + $0x6a] sm:$0xff]
        %v1346 = vld [vmem:[#allocation2 + $0x7a] sm:$0xff]
        %v1347 = vld [vmem:[#allocation2 + $0x82] sm:$0xff]
        %v1348 = vld [vmem:[#allocation2 + $0x92] sm:$0xff]
        %v1349 = vld [vmem:[#allocation2 + $0x9a] sm:$0xff]
        %v1350 = vld [vmem:[#allocation2 + $0xaa] sm:$0xff]
        %v1351 = vld [vmem:[#allocation2 + $0xb2] sm:$0xff]
        %v1352 = vld [vmem:[#allocation2 + $0xc2] sm:$0xff]
        %v1353 = vld [vmem:[#allocation2 + $0xca] sm:$0xff]
        %v1354 = vld [vmem:[#allocation2 + $0xda] sm:$0xff]
        %v1355 = vld [vmem:[#allocation2 + $0xe2] sm:$0xff]
        %v1356 = vld [vmem:[#allocation2 + $0xf2] sm:$0xff]
        %v1357 = vld [vmem:[#allocation2 + $0xfa] sm:$0xff]
        %v1358 = vld [vmem:[#allocation2 + $0x10a] sm:$0xff]
        %v1359 = vld [vmem:[#allocation2 + $0x112] sm:$0xff]
        %v1360 = vld [vmem:[#allocation2 + $0x122] sm:$0xff]
        %v1361 = vld [vmem:[#allocation2 + $0x12a] sm:$0xff]
        %v1362 = vld [vmem:[#allocation2 + $0x13a] sm:$0xff]
        %v1363 = vld [vmem:[#allocation2 + $0x142] sm:$0xff]
        %v1364 = vld [vmem:[#allocation2 + $0x152] sm:$0xff]
        %v1365 = vld [vmem:[#allocation2 + $0x15a] sm:$0xff]
        %v1366 = vld [vmem:[#allocation2 + $0x16a] sm:$0xff]
        %v1367 = vld [vmem:[#allocation2 + $0x172] sm:$0xff]
        %s1368 = scalar_lea.vmem %s3, 8
        %v1369 = vld [vmem:[%s1368] sm:$0xf]
        %v1371 = vsel %vm385, %v1336, 0
        %v1374 = vsel %vm385, %v1337, 0
        %v1377 = vsel %vm385, %v1338, 0
        %v1380 = vsel %vm385, %v1339, 0
        %v1383 = vsel %vm385, %v1340, 0
        %v1386 = vsel %vm385, %v1341, 0
        %v1389 = vsel %vm385, %v1342, 0
        %v1392 = vsel %vm385, %v1343, 0
        %v1395 = vsel %vm385, %v1344, 0
        %v1398 = vsel %vm385, %v1345, 0
        %v1401 = vsel %vm385, %v1346, 0
        %v1404 = vsel %vm385, %v1347, 0
        %v1407 = vsel %vm385, %v1348, 0
        %v1410 = vsel %vm385, %v1349, 0
        %v1413 = vsel %vm385, %v1350, 0
        %v1416 = vsel %vm385, %v1351, 0
        %v1419 = vsel %vm385, %v1352, 0
        %v1422 = vsel %vm385, %v1353, 0
        %v1425 = vsel %vm385, %v1354, 0
        %v1428 = vsel %vm385, %v1355, 0
        %v1431 = vsel %vm385, %v1356, 0
        %v1434 = vsel %vm385, %v1357, 0
        %v1437 = vsel %vm385, %v1358, 0
        %v1440 = vsel %vm385, %v1359, 0
        %v1443 = vsel %vm385, %v1360, 0
        %v1446 = vsel %vm385, %v1361, 0
        %v1449 = vsel %vm385, %v1362, 0
        %v1452 = vsel %vm385, %v1363, 0
        %v1455 = vsel %vm385, %v1364, 0
        %v1458 = vsel %vm385, %v1365, 0
        %v1461 = vsel %vm385, %v1366, 0
        %v1464 = vsel %vm385, %v1367, 0
        %v1467 = vsel %vm783, %v1369, 0
        %1469 = vmatprep.subr.mxu0 0.0
        %1470 = vmatpush1.msra.mxu0 0.0
        %1471 = vmatprep.subr.mxu0 0.0
        %1472 = vmatpush1.msra.mxu0 0.0
        %1473 = vmatprep.subr.mxu0 0.0
        %1474 = vmatpush1.msra.mxu0 0.0
        %1475 = vmatprep.subr.mxu0 0.0
        %1476 = vmatpush1.msra.mxu0 0.0
        %1477 = vmatprep.subr.mxu0 0.0
        %1478 = vmatpush1.msra.mxu0 0.0
        %1479 = vmatprep.subr.mxu0 0.0
        %1480 = vmatpush1.msra.mxu0 0.0
        %1481 = vmatprep.subr.mxu0 0.0
        %1482 = vmatpush1.msra.mxu0 0.0
        %1483 = vmatprep.subr.mxu0 0.0
        %1484 = vmatpush1.msra.mxu0 0.0
        %1485 = vmatprep.subr.mxu0 0.0
        %1486 = vmatpush1.msra.mxu0 0.0
        %1487 = vmatprep.subr.mxu0 0.0
        %1488 = vmatpush1.msra.mxu0 0.0
        %1489 = vmatprep.subr.mxu0 0.0
        %1490 = vmatpush1.msra.mxu0 0.0
        %1491 = vmatprep.subr.mxu0 0.0
        %1492 = vmatpush1.msra.mxu0 0.0
        %1493 = vmatprep.subr.mxu0 0.0
        %1494 = vmatpush1.msra.mxu0 0.0
        %1495 = vmatprep.subr.mxu0 0.0
        %1496 = vmatpush1.msra.mxu0 0.0
        %1497 = vmatprep.subr.mxu0 0.0
        %1498 = vmatpush1.msra.mxu0 0.0
        %1499 = vmatprep.subr.mxu0 0.0
        %1500 = vmatpush1.msra.mxu0 %v1467
        %1501 = vmatprep.subr.mxu0 0.0
        %1502 = vmatpush2.msra.mxu0 0.0
        %1503 = vmatprep.subr.mxu0 0.0
        %1504 = vmatpush2.msra.mxu0 0.0
        %1505 = vmatprep.subr.mxu0 0.0
        %1506 = vmatpush2.msra.mxu0 0.0
        %1507 = vmatprep.subr.mxu0 0.0
        %1508 = vmatpush2.msra.mxu0 0.0
        %1509 = vmatprep.subr.mxu0 0.0
        %1510 = vmatpush2.msra.mxu0 0.0
        %1511 = vmatprep.subr.mxu0 0.0
        %1512 = vmatpush2.msra.mxu0 0.0
        %1513 = vmatprep.subr.mxu0 0.0
        %1514 = vmatpush2.msra.mxu0 0.0
        %1515 = vmatprep.subr.mxu0 0.0
        %1516 = vmatpush2.msra.mxu0 0.0
        %1517 = vmatprep.subr.mxu0 0.0
        %1518 = vmatpush2.msra.mxu0 0.0
        %1519 = vmatprep.subr.mxu0 0.0
        %1520 = vmatpush2.msra.mxu0 0.0
        %1521 = vmatprep.subr.mxu0 0.0
        %1522 = vmatpush2.msra.mxu0 0.0
        %1523 = vmatprep.subr.mxu0 0.0
        %1524 = vmatpush2.msra.mxu0 0.0
        %1525 = vmatprep.subr.mxu0 0.0
        %1526 = vmatpush2.msra.mxu0 0.0
        %1527 = vmatprep.subr.mxu0 0.0
        %1528 = vmatpush2.msra.mxu0 0.0
        %1529 = vmatprep.subr.mxu0 0.0
        %1530 = vmatpush2.msra.mxu0 0.0
        %1531 = vmatprep.subr.mxu0 0.0
        %1532 = vmatpush2.msra.mxu0 0.0
        %1533 = vmatprep.mubr.f32.mxu0 0.0
        %1534 = vmatmul.mubr.f32.gmra.mxu0 %v1371
        %v1535 = vpop.f32.mrf.mxu0
        %v1536 = vadd.f32 0.0, %v1535
        %v1537 = vpop.f32.mrf.mxu0
        %1538 = vmatprep.mubr.f32.mxu0 0.0
        %1539 = vmatmul.mubr.f32.gmra.mxu0 %v1374
        %v1540 = vpop.f32.mrf.mxu0
        %v1541 = vadd.f32 0.0, %v1540
        %v1542 = vpop.f32.mrf.mxu0
        %1543 = vmatprep.mubr.f32.mxu0 0.0
        %1544 = vmatmul.mubr.f32.gmra.mxu0 %v1377
        %v1545 = vpop.f32.mrf.mxu0
        %v1546 = vadd.f32 0.0, %v1545
        %v1547 = vpop.f32.mrf.mxu0
        %1548 = vmatprep.mubr.f32.mxu0 0.0
        %1549 = vmatmul.mubr.f32.gmra.mxu0 %v1380
        %v1550 = vpop.f32.mrf.mxu0
        %v1551 = vadd.f32 0.0, %v1550
        %v1552 = vpop.f32.mrf.mxu0
        %1553 = vmatprep.mubr.f32.mxu0 0.0
        %1554 = vmatmul.mubr.f32.gmra.mxu0 %v1383
        %v1555 = vpop.f32.mrf.mxu0
        %v1556 = vadd.f32 0.0, %v1555
        %v1557 = vpop.f32.mrf.mxu0
        %1558 = vmatprep.mubr.f32.mxu0 0.0
        %1559 = vmatmul.mubr.f32.gmra.mxu0 %v1386
        %v1560 = vpop.f32.mrf.mxu0
        %v1561 = vadd.f32 0.0, %v1560
        %v1562 = vpop.f32.mrf.mxu0
        %1563 = vmatprep.mubr.f32.mxu0 0.0
        %1564 = vmatmul.mubr.f32.gmra.mxu0 %v1389
        %v1565 = vpop.f32.mrf.mxu0
        %v1566 = vadd.f32 0.0, %v1565
        %v1567 = vpop.f32.mrf.mxu0
        %1568 = vmatprep.mubr.f32.mxu0 0.0
        %1569 = vmatmul.mubr.f32.gmra.mxu0 %v1392
        %v1570 = vpop.f32.mrf.mxu0
        %v1571 = vadd.f32 0.0, %v1570
        %v1572 = vpop.f32.mrf.mxu0
        %1573 = vmatprep.mubr.f32.mxu0 0.0
        %1574 = vmatmul.mubr.f32.gmra.mxu0 %v1395
        %v1575 = vpop.f32.mrf.mxu0
        %v1576 = vadd.f32 0.0, %v1575
        %v1577 = vpop.f32.mrf.mxu0
        %1578 = vmatprep.mubr.f32.mxu0 0.0
        %1579 = vmatmul.mubr.f32.gmra.mxu0 %v1398
        %v1580 = vpop.f32.mrf.mxu0
        %v1581 = vadd.f32 0.0, %v1580
        %v1582 = vpop.f32.mrf.mxu0
        %1583 = vmatprep.mubr.f32.mxu0 0.0
        %1584 = vmatmul.mubr.f32.gmra.mxu0 %v1401
        %v1585 = vpop.f32.mrf.mxu0
        %v1586 = vadd.f32 0.0, %v1585
        %v1587 = vpop.f32.mrf.mxu0
        %1588 = vmatprep.mubr.f32.mxu0 0.0
        %1589 = vmatmul.mubr.f32.gmra.mxu0 %v1404
        %v1590 = vpop.f32.mrf.mxu0
        %v1591 = vadd.f32 0.0, %v1590
        %v1592 = vpop.f32.mrf.mxu0
        %1593 = vmatprep.mubr.f32.mxu0 0.0
        %1594 = vmatmul.mubr.f32.gmra.mxu0 %v1407
        %v1595 = vpop.f32.mrf.mxu0
        %v1596 = vadd.f32 0.0, %v1595
        %v1597 = vpop.f32.mrf.mxu0
        %1598 = vmatprep.mubr.f32.mxu0 0.0
        %1599 = vmatmul.mubr.f32.gmra.mxu0 %v1410
        %v1600 = vpop.f32.mrf.mxu0
        %v1601 = vadd.f32 0.0, %v1600
        %v1602 = vpop.f32.mrf.mxu0
        %1603 = vmatprep.mubr.f32.mxu0 0.0
        %1604 = vmatmul.mubr.f32.gmra.mxu0 %v1413
        %v1605 = vpop.f32.mrf.mxu0
        %v1606 = vadd.f32 0.0, %v1605
        %v1607 = vpop.f32.mrf.mxu0
        %1608 = vmatprep.mubr.f32.mxu0 0.0
        %1609 = vmatmul.mubr.f32.gmra.mxu0 %v1416
        %v1610 = vpop.f32.mrf.mxu0
        %v1611 = vadd.f32 0.0, %v1610
        %v1612 = vpop.f32.mrf.mxu0
        %1613 = vmatprep.mubr.f32.mxu0 0.0
        %1614 = vmatmul.mubr.f32.gmra.mxu0 %v1419
        %v1615 = vpop.f32.mrf.mxu0
        %v1616 = vadd.f32 0.0, %v1615
        %v1617 = vpop.f32.mrf.mxu0
        %1618 = vmatprep.mubr.f32.mxu0 0.0
        %1619 = vmatmul.mubr.f32.gmra.mxu0 %v1422
        %v1620 = vpop.f32.mrf.mxu0
        %v1621 = vadd.f32 0.0, %v1620
        %v1622 = vpop.f32.mrf.mxu0
        %1623 = vmatprep.mubr.f32.mxu0 0.0
        %1624 = vmatmul.mubr.f32.gmra.mxu0 %v1425
        %v1625 = vpop.f32.mrf.mxu0
        %v1626 = vadd.f32 0.0, %v1625
        %v1627 = vpop.f32.mrf.mxu0
        %1628 = vmatprep.mubr.f32.mxu0 0.0
        %1629 = vmatmul.mubr.f32.gmra.mxu0 %v1428
        %v1630 = vpop.f32.mrf.mxu0
        %v1631 = vadd.f32 0.0, %v1630
        %v1632 = vpop.f32.mrf.mxu0
        %1633 = vmatprep.mubr.f32.mxu0 0.0
        %1634 = vmatmul.mubr.f32.gmra.mxu0 %v1431
        %v1635 = vpop.f32.mrf.mxu0
        %v1636 = vadd.f32 0.0, %v1635
        %v1637 = vpop.f32.mrf.mxu0
        %1638 = vmatprep.mubr.f32.mxu0 0.0
        %1639 = vmatmul.mubr.f32.gmra.mxu0 %v1434
        %v1640 = vpop.f32.mrf.mxu0
        %v1641 = vadd.f32 0.0, %v1640
        %v1642 = vpop.f32.mrf.mxu0
        %1643 = vmatprep.mubr.f32.mxu0 0.0
        %1644 = vmatmul.mubr.f32.gmra.mxu0 %v1437
        %v1645 = vpop.f32.mrf.mxu0
        %v1646 = vadd.f32 0.0, %v1645
        %v1647 = vpop.f32.mrf.mxu0
        %1648 = vmatprep.mubr.f32.mxu0 0.0
        %1649 = vmatmul.mubr.f32.gmra.mxu0 %v1440
        %v1650 = vpop.f32.mrf.mxu0
        %v1651 = vadd.f32 0.0, %v1650
        %v1652 = vpop.f32.mrf.mxu0
        %1653 = vmatprep.mubr.f32.mxu0 0.0
        %1654 = vmatmul.mubr.f32.gmra.mxu0 %v1443
        %v1655 = vpop.f32.mrf.mxu0
        %v1656 = vadd.f32 0.0, %v1655
        %v1657 = vpop.f32.mrf.mxu0
        %1658 = vmatprep.mubr.f32.mxu0 0.0
        %1659 = vmatmul.mubr.f32.gmra.mxu0 %v1446
        %v1660 = vpop.f32.mrf.mxu0
        %v1661 = vadd.f32 0.0, %v1660
        %v1662 = vpop.f32.mrf.mxu0
        %1663 = vmatprep.mubr.f32.mxu0 0.0
        %1664 = vmatmul.mubr.f32.gmra.mxu0 %v1449
        %v1665 = vpop.f32.mrf.mxu0
        %v1666 = vadd.f32 0.0, %v1665
        %v1667 = vpop.f32.mrf.mxu0
        %1668 = vmatprep.mubr.f32.mxu0 0.0
        %1669 = vmatmul.mubr.f32.gmra.mxu0 %v1452
        %v1670 = vpop.f32.mrf.mxu0
        %v1671 = vadd.f32 0.0, %v1670
        %v1672 = vpop.f32.mrf.mxu0
        %1673 = vmatprep.mubr.f32.mxu0 0.0
        %1674 = vmatmul.mubr.f32.gmra.mxu0 %v1455
        %v1675 = vpop.f32.mrf.mxu0
        %v1676 = vadd.f32 0.0, %v1675
        %v1677 = vpop.f32.mrf.mxu0
        %1678 = vmatprep.mubr.f32.mxu0 0.0
        %1679 = vmatmul.mubr.f32.gmra.mxu0 %v1458
        %v1680 = vpop.f32.mrf.mxu0
        %v1681 = vadd.f32 0.0, %v1680
        %v1682 = vpop.f32.mrf.mxu0
        %1683 = vmatprep.mubr.f32.mxu0 0.0
        %1684 = vmatmul.mubr.f32.gmra.mxu0 %v1461
        %v1685 = vpop.f32.mrf.mxu0
        %v1686 = vadd.f32 0.0, %v1685
        %v1687 = vpop.f32.mrf.mxu0
        %1688 = vmatprep.mubr.f32.mxu0 0.0
        %1689 = vmatmul.mubr.f32.gmra.mxu0 %v1464
        %v1690 = vpop.f32.mrf.mxu0
        %v1691 = vadd.f32 0.0, %v1690
        %v1692 = vpop.f32.mrf.mxu0
        %1693 = vdwg.mxu0
        %v1694 = vadd.f32 %v1178, %v1536
        %v1695 = vadd.f32 %v1183, %v1541
        %v1696 = vadd.f32 %v1188, %v1546
        %v1697 = vadd.f32 %v1193, %v1551
        %v1698 = vadd.f32 %v1198, %v1556
        %v1699 = vadd.f32 %v1203, %v1561
        %v1700 = vadd.f32 %v1208, %v1566
        %v1701 = vadd.f32 %v1213, %v1571
        %v1702 = vadd.f32 %v1218, %v1576
        %v1703 = vadd.f32 %v1223, %v1581
        %v1704 = vadd.f32 %v1228, %v1586
        %v1705 = vadd.f32 %v1233, %v1591
        %v1706 = vadd.f32 %v1238, %v1596
        %v1707 = vadd.f32 %v1243, %v1601
        %v1708 = vadd.f32 %v1248, %v1606
        %v1709 = vadd.f32 %v1253, %v1611
        %v1710 = vadd.f32 %v1258, %v1616
        %v1711 = vadd.f32 %v1263, %v1621
        %v1712 = vadd.f32 %v1268, %v1626
        %v1713 = vadd.f32 %v1273, %v1631
        %v1714 = vadd.f32 %v1278, %v1636
        %v1715 = vadd.f32 %v1283, %v1641
        %v1716 = vadd.f32 %v1288, %v1646
        %v1717 = vadd.f32 %v1293, %v1651
        %v1718 = vadd.f32 %v1298, %v1656
        %v1719 = vadd.f32 %v1303, %v1661
        %v1720 = vadd.f32 %v1308, %v1666
        %v1721 = vadd.f32 %v1313, %v1671
        %v1722 = vadd.f32 %v1318, %v1676
        %v1723 = vadd.f32 %v1323, %v1681
        %v1724 = vadd.f32 %v1328, %v1686
        %v1725 = vadd.f32 %v1333, %v1691
        %v1726 = vld [vmem:[%s587] sm:$0xff]
        %v1727 = vld [vmem:[%s587 + $0x8] sm:$0xff]
        %v1728 = vld [vmem:[%s587 + $0x18] sm:$0xff]
        %v1729 = vld [vmem:[%s587 + $0x20] sm:$0xff]
        %v1730 = vld [vmem:[%s587 + $0x30] sm:$0xff]
        %v1731 = vld [vmem:[%s587 + $0x38] sm:$0xff]
        %v1732 = vld [vmem:[%s587 + $0x48] sm:$0xff]
        %v1733 = vld [vmem:[%s587 + $0x50] sm:$0xff]
        %v1734 = vld [vmem:[%s587 + $0x60] sm:$0xff]
        %v1735 = vld [vmem:[%s587 + $0x68] sm:$0xff]
        %v1736 = vld [vmem:[%s587 + $0x78] sm:$0xff]
        %v1737 = vld [vmem:[%s587 + $0x80] sm:$0xff]
        %v1738 = vld [vmem:[%s587 + $0x90] sm:$0xff]
        %v1739 = vld [vmem:[%s587 + $0x98] sm:$0xff]
        %v1740 = vld [vmem:[%s587 + $0xa8] sm:$0xff]
        %v1741 = vld [vmem:[%s587 + $0xb0] sm:$0xff]
        %v1742 = vld [vmem:[%s587 + $0xc0] sm:$0xff]
        %v1743 = vld [vmem:[%s587 + $0xc8] sm:$0xff]
        %v1744 = vld [vmem:[%s587 + $0xd8] sm:$0xff]
        %v1745 = vld [vmem:[%s587 + $0xe0] sm:$0xff]
        %v1746 = vld [vmem:[%s587 + $0xf0] sm:$0xff]
        %v1747 = vld [vmem:[%s587 + $0xf8] sm:$0xff]
        %v1748 = vld [vmem:[%s587 + $0x108] sm:$0xff]
        %v1749 = vld [vmem:[%s587 + $0x110] sm:$0xff]
        %v1750 = vld [vmem:[%s587 + $0x120] sm:$0xff]
        %v1751 = vld [vmem:[%s587 + $0x128] sm:$0xff]
        %v1752 = vld [vmem:[%s587 + $0x138] sm:$0xff]
        %v1753 = vld [vmem:[%s587 + $0x140] sm:$0xff]
        %v1754 = vld [vmem:[%s587 + $0x150] sm:$0xff]
        %v1755 = vld [vmem:[%s587 + $0x158] sm:$0xff]
        %v1756 = vld [vmem:[%s587 + $0x168] sm:$0xff]
        %v1757 = vld [vmem:[%s587 + $0x170] sm:$0xff]
        %s1758 = scalar_lea.vmem %s3, 12
        %v1759 = vld [vmem:[%s1758] sm:$0xf]
        %v1761 = vsel %vm385, %v1726, 0
        %v1764 = vsel %vm385, %v1727, 0
        %v1767 = vsel %vm385, %v1728, 0
        %v1770 = vsel %vm385, %v1729, 0
        %v1773 = vsel %vm385, %v1730, 0
        %v1776 = vsel %vm385, %v1731, 0
        %v1779 = vsel %vm385, %v1732, 0
        %v1782 = vsel %vm385, %v1733, 0
        %v1785 = vsel %vm385, %v1734, 0
        %v1788 = vsel %vm385, %v1735, 0
        %v1791 = vsel %vm385, %v1736, 0
        %v1794 = vsel %vm385, %v1737, 0
        %v1797 = vsel %vm385, %v1738, 0
        %v1800 = vsel %vm385, %v1739, 0
        %v1803 = vsel %vm385, %v1740, 0
        %v1806 = vsel %vm385, %v1741, 0
        %v1809 = vsel %vm385, %v1742, 0
        %v1812 = vsel %vm385, %v1743, 0
        %v1815 = vsel %vm385, %v1744, 0
        %v1818 = vsel %vm385, %v1745, 0
        %v1821 = vsel %vm385, %v1746, 0
        %v1824 = vsel %vm385, %v1747, 0
        %v1827 = vsel %vm385, %v1748, 0
        %v1830 = vsel %vm385, %v1749, 0
        %v1833 = vsel %vm385, %v1750, 0
        %v1836 = vsel %vm385, %v1751, 0
        %v1839 = vsel %vm385, %v1752, 0
        %v1842 = vsel %vm385, %v1753, 0
        %v1845 = vsel %vm385, %v1754, 0
        %v1848 = vsel %vm385, %v1755, 0
        %v1851 = vsel %vm385, %v1756, 0
        %v1854 = vsel %vm385, %v1757, 0
        %v1857 = vsel %vm783, %v1759, 0
        %1859 = vmatprep.subr.mxu0 0.0
        %1860 = vmatpush1.msra.mxu0 0.0
        %1861 = vmatprep.subr.mxu0 0.0
        %1862 = vmatpush1.msra.mxu0 0.0
        %1863 = vmatprep.subr.mxu0 0.0
        %1864 = vmatpush1.msra.mxu0 0.0
        %1865 = vmatprep.subr.mxu0 0.0
        %1866 = vmatpush1.msra.mxu0 0.0
        %1867 = vmatprep.subr.mxu0 0.0
        %1868 = vmatpush1.msra.mxu0 0.0
        %1869 = vmatprep.subr.mxu0 0.0
        %1870 = vmatpush1.msra.mxu0 0.0
        %1871 = vmatprep.subr.mxu0 0.0
        %1872 = vmatpush1.msra.mxu0 0.0
        %1873 = vmatprep.subr.mxu0 0.0
        %1874 = vmatpush1.msra.mxu0 0.0
        %1875 = vmatprep.subr.mxu0 0.0
        %1876 = vmatpush1.msra.mxu0 0.0
        %1877 = vmatprep.subr.mxu0 0.0
        %1878 = vmatpush1.msra.mxu0 0.0
        %1879 = vmatprep.subr.mxu0 0.0
        %1880 = vmatpush1.msra.mxu0 0.0
        %1881 = vmatprep.subr.mxu0 0.0
        %1882 = vmatpush1.msra.mxu0 0.0
        %1883 = vmatprep.subr.mxu0 0.0
        %1884 = vmatpush1.msra.mxu0 0.0
        %1885 = vmatprep.subr.mxu0 0.0
        %1886 = vmatpush1.msra.mxu0 0.0
        %1887 = vmatprep.subr.mxu0 0.0
        %1888 = vmatpush1.msra.mxu0 0.0
        %1889 = vmatprep.subr.mxu0 0.0
        %1890 = vmatpush1.msra.mxu0 %v1857
        %1891 = vmatprep.subr.mxu0 0.0
        %1892 = vmatpush2.msra.mxu0 0.0
        %1893 = vmatprep.subr.mxu0 0.0
        %1894 = vmatpush2.msra.mxu0 0.0
        %1895 = vmatprep.subr.mxu0 0.0
        %1896 = vmatpush2.msra.mxu0 0.0
        %1897 = vmatprep.subr.mxu0 0.0
        %1898 = vmatpush2.msra.mxu0 0.0
        %1899 = vmatprep.subr.mxu0 0.0
        %1900 = vmatpush2.msra.mxu0 0.0
        %1901 = vmatprep.subr.mxu0 0.0
        %1902 = vmatpush2.msra.mxu0 0.0
        %1903 = vmatprep.subr.mxu0 0.0
        %1904 = vmatpush2.msra.mxu0 0.0
        %1905 = vmatprep.subr.mxu0 0.0
        %1906 = vmatpush2.msra.mxu0 0.0
        %1907 = vmatprep.subr.mxu0 0.0
        %1908 = vmatpush2.msra.mxu0 0.0
        %1909 = vmatprep.subr.mxu0 0.0
        %1910 = vmatpush2.msra.mxu0 0.0
        %1911 = vmatprep.subr.mxu0 0.0
        %1912 = vmatpush2.msra.mxu0 0.0
        %1913 = vmatprep.subr.mxu0 0.0
        %1914 = vmatpush2.msra.mxu0 0.0
        %1915 = vmatprep.subr.mxu0 0.0
        %1916 = vmatpush2.msra.mxu0 0.0
        %1917 = vmatprep.subr.mxu0 0.0
        %1918 = vmatpush2.msra.mxu0 0.0
        %1919 = vmatprep.subr.mxu0 0.0
        %1920 = vmatpush2.msra.mxu0 0.0
        %1921 = vmatprep.subr.mxu0 0.0
        %1922 = vmatpush2.msra.mxu0 0.0
        %1923 = vmatprep.mubr.f32.mxu0 0.0
        %1924 = vmatmul.mubr.f32.gmra.mxu0 %v1761
        %v1925 = vpop.f32.mrf.mxu0
        %v1926 = vadd.f32 0.0, %v1925
        %v1927 = vpop.f32.mrf.mxu0
        %1928 = vmatprep.mubr.f32.mxu0 0.0
        %1929 = vmatmul.mubr.f32.gmra.mxu0 %v1764
        %v1930 = vpop.f32.mrf.mxu0
        %v1931 = vadd.f32 0.0, %v1930
        %v1932 = vpop.f32.mrf.mxu0
        %1933 = vmatprep.mubr.f32.mxu0 0.0
        %1934 = vmatmul.mubr.f32.gmra.mxu0 %v1767
        %v1935 = vpop.f32.mrf.mxu0
        %v1936 = vadd.f32 0.0, %v1935
        %v1937 = vpop.f32.mrf.mxu0
        %1938 = vmatprep.mubr.f32.mxu0 0.0
        %1939 = vmatmul.mubr.f32.gmra.mxu0 %v1770
        %v1940 = vpop.f32.mrf.mxu0
        %v1941 = vadd.f32 0.0, %v1940
        %v1942 = vpop.f32.mrf.mxu0
        %1943 = vmatprep.mubr.f32.mxu0 0.0
        %1944 = vmatmul.mubr.f32.gmra.mxu0 %v1773
        %v1945 = vpop.f32.mrf.mxu0
        %v1946 = vadd.f32 0.0, %v1945
        %v1947 = vpop.f32.mrf.mxu0
        %1948 = vmatprep.mubr.f32.mxu0 0.0
        %1949 = vmatmul.mubr.f32.gmra.mxu0 %v1776
        %v1950 = vpop.f32.mrf.mxu0
        %v1951 = vadd.f32 0.0, %v1950
        %v1952 = vpop.f32.mrf.mxu0
        %1953 = vmatprep.mubr.f32.mxu0 0.0
        %1954 = vmatmul.mubr.f32.gmra.mxu0 %v1779
        %v1955 = vpop.f32.mrf.mxu0
        %v1956 = vadd.f32 0.0, %v1955
        %v1957 = vpop.f32.mrf.mxu0
        %1958 = vmatprep.mubr.f32.mxu0 0.0
        %1959 = vmatmul.mubr.f32.gmra.mxu0 %v1782
        %v1960 = vpop.f32.mrf.mxu0
        %v1961 = vadd.f32 0.0, %v1960
        %v1962 = vpop.f32.mrf.mxu0
        %1963 = vmatprep.mubr.f32.mxu0 0.0
        %1964 = vmatmul.mubr.f32.gmra.mxu0 %v1785
        %v1965 = vpop.f32.mrf.mxu0
        %v1966 = vadd.f32 0.0, %v1965
        %v1967 = vpop.f32.mrf.mxu0
        %1968 = vmatprep.mubr.f32.mxu0 0.0
        %1969 = vmatmul.mubr.f32.gmra.mxu0 %v1788
        %v1970 = vpop.f32.mrf.mxu0
        %v1971 = vadd.f32 0.0, %v1970
        %v1972 = vpop.f32.mrf.mxu0
        %1973 = vmatprep.mubr.f32.mxu0 0.0
        %1974 = vmatmul.mubr.f32.gmra.mxu0 %v1791
        %v1975 = vpop.f32.mrf.mxu0
        %v1976 = vadd.f32 0.0, %v1975
        %v1977 = vpop.f32.mrf.mxu0
        %1978 = vmatprep.mubr.f32.mxu0 0.0
        %1979 = vmatmul.mubr.f32.gmra.mxu0 %v1794
        %v1980 = vpop.f32.mrf.mxu0
        %v1981 = vadd.f32 0.0, %v1980
        %v1982 = vpop.f32.mrf.mxu0
        %1983 = vmatprep.mubr.f32.mxu0 0.0
        %1984 = vmatmul.mubr.f32.gmra.mxu0 %v1797
        %v1985 = vpop.f32.mrf.mxu0
        %v1986 = vadd.f32 0.0, %v1985
        %v1987 = vpop.f32.mrf.mxu0
        %1988 = vmatprep.mubr.f32.mxu0 0.0
        %1989 = vmatmul.mubr.f32.gmra.mxu0 %v1800
        %v1990 = vpop.f32.mrf.mxu0
        %v1991 = vadd.f32 0.0, %v1990
        %v1992 = vpop.f32.mrf.mxu0
        %1993 = vmatprep.mubr.f32.mxu0 0.0
        %1994 = vmatmul.mubr.f32.gmra.mxu0 %v1803
        %v1995 = vpop.f32.mrf.mxu0
        %v1996 = vadd.f32 0.0, %v1995
        %v1997 = vpop.f32.mrf.mxu0
        %1998 = vmatprep.mubr.f32.mxu0 0.0
        %1999 = vmatmul.mubr.f32.gmra.mxu0 %v1806
        %v2000 = vpop.f32.mrf.mxu0
        %v2001 = vadd.f32 0.0, %v2000
        %v2002 = vpop.f32.mrf.mxu0
        %2003 = vmatprep.mubr.f32.mxu0 0.0
        %2004 = vmatmul.mubr.f32.gmra.mxu0 %v1809
        %v2005 = vpop.f32.mrf.mxu0
        %v2006 = vadd.f32 0.0, %v2005
        %v2007 = vpop.f32.mrf.mxu0
        %2008 = vmatprep.mubr.f32.mxu0 0.0
        %2009 = vmatmul.mubr.f32.gmra.mxu0 %v1812
        %v2010 = vpop.f32.mrf.mxu0
        %v2011 = vadd.f32 0.0, %v2010
        %v2012 = vpop.f32.mrf.mxu0
        %2013 = vmatprep.mubr.f32.mxu0 0.0
        %2014 = vmatmul.mubr.f32.gmra.mxu0 %v1815
        %v2015 = vpop.f32.mrf.mxu0
        %v2016 = vadd.f32 0.0, %v2015
        %v2017 = vpop.f32.mrf.mxu0
        %2018 = vmatprep.mubr.f32.mxu0 0.0
        %2019 = vmatmul.mubr.f32.gmra.mxu0 %v1818
        %v2020 = vpop.f32.mrf.mxu0
        %v2021 = vadd.f32 0.0, %v2020
        %v2022 = vpop.f32.mrf.mxu0
        %2023 = vmatprep.mubr.f32.mxu0 0.0
        %2024 = vmatmul.mubr.f32.gmra.mxu0 %v1821
        %v2025 = vpop.f32.mrf.mxu0
        %v2026 = vadd.f32 0.0, %v2025
        %v2027 = vpop.f32.mrf.mxu0
        %2028 = vmatprep.mubr.f32.mxu0 0.0
        %2029 = vmatmul.mubr.f32.gmra.mxu0 %v1824
        %v2030 = vpop.f32.mrf.mxu0
        %v2031 = vadd.f32 0.0, %v2030
        %v2032 = vpop.f32.mrf.mxu0
        %2033 = vmatprep.mubr.f32.mxu0 0.0
        %2034 = vmatmul.mubr.f32.gmra.mxu0 %v1827
        %v2035 = vpop.f32.mrf.mxu0
        %v2036 = vadd.f32 0.0, %v2035
        %v2037 = vpop.f32.mrf.mxu0
        %2038 = vmatprep.mubr.f32.mxu0 0.0
        %2039 = vmatmul.mubr.f32.gmra.mxu0 %v1830
        %v2040 = vpop.f32.mrf.mxu0
        %v2041 = vadd.f32 0.0, %v2040
        %v2042 = vpop.f32.mrf.mxu0
        %2043 = vmatprep.mubr.f32.mxu0 0.0
        %2044 = vmatmul.mubr.f32.gmra.mxu0 %v1833
        %v2045 = vpop.f32.mrf.mxu0
        %v2046 = vadd.f32 0.0, %v2045
        %v2047 = vpop.f32.mrf.mxu0
        %2048 = vmatprep.mubr.f32.mxu0 0.0
        %2049 = vmatmul.mubr.f32.gmra.mxu0 %v1836
        %v2050 = vpop.f32.mrf.mxu0
        %v2051 = vadd.f32 0.0, %v2050
        %v2052 = vpop.f32.mrf.mxu0
        %2053 = vmatprep.mubr.f32.mxu0 0.0
        %2054 = vmatmul.mubr.f32.gmra.mxu0 %v1839
        %v2055 = vpop.f32.mrf.mxu0
        %v2056 = vadd.f32 0.0, %v2055
        %v2057 = vpop.f32.mrf.mxu0
        %2058 = vmatprep.mubr.f32.mxu0 0.0
        %2059 = vmatmul.mubr.f32.gmra.mxu0 %v1842
        %v2060 = vpop.f32.mrf.mxu0
        %v2061 = vadd.f32 0.0, %v2060
        %v2062 = vpop.f32.mrf.mxu0
        %2063 = vmatprep.mubr.f32.mxu0 0.0
        %2064 = vmatmul.mubr.f32.gmra.mxu0 %v1845
        %v2065 = vpop.f32.mrf.mxu0
        %v2066 = vadd.f32 0.0, %v2065
        %v2067 = vpop.f32.mrf.mxu0
        %2068 = vmatprep.mubr.f32.mxu0 0.0
        %2069 = vmatmul.mubr.f32.gmra.mxu0 %v1848
        %v2070 = vpop.f32.mrf.mxu0
        %v2071 = vadd.f32 0.0, %v2070
        %v2072 = vpop.f32.mrf.mxu0
        %2073 = vmatprep.mubr.f32.mxu0 0.0
        %2074 = vmatmul.mubr.f32.gmra.mxu0 %v1851
        %v2075 = vpop.f32.mrf.mxu0
        %v2076 = vadd.f32 0.0, %v2075
        %v2077 = vpop.f32.mrf.mxu0
        %2078 = vmatprep.mubr.f32.mxu0 0.0
        %2079 = vmatmul.mubr.f32.gmra.mxu0 %v1854
        %v2080 = vpop.f32.mrf.mxu0
        %v2081 = vadd.f32 0.0, %v2080
        %v2082 = vpop.f32.mrf.mxu0
        %2083 = vdwg.mxu0
        %v2084 = vadd.f32 %v1694, %v1926
        %v2085 = vadd.f32 %v1695, %v1931
        %v2086 = vadd.f32 %v1696, %v1936
        %v2087 = vadd.f32 %v1697, %v1941
        %v2088 = vadd.f32 %v1698, %v1946
        %v2089 = vadd.f32 %v1699, %v1951
        %v2090 = vadd.f32 %v1700, %v1956
        %v2091 = vadd.f32 %v1701, %v1961
        %v2092 = vadd.f32 %v1702, %v1966
        %v2093 = vadd.f32 %v1703, %v1971
        %v2094 = vadd.f32 %v1704, %v1976
        %v2095 = vadd.f32 %v1705, %v1981
        %v2096 = vadd.f32 %v1706, %v1986
        %v2097 = vadd.f32 %v1707, %v1991
        %v2098 = vadd.f32 %v1708, %v1996
        %v2099 = vadd.f32 %v1709, %v2001
        %v2100 = vadd.f32 %v1710, %v2006
        %v2101 = vadd.f32 %v1711, %v2011
        %v2102 = vadd.f32 %v1712, %v2016
        %v2103 = vadd.f32 %v1713, %v2021
        %v2104 = vadd.f32 %v1714, %v2026
        %v2105 = vadd.f32 %v1715, %v2031
        %v2106 = vadd.f32 %v1716, %v2036
        %v2107 = vadd.f32 %v1717, %v2041
        %v2108 = vadd.f32 %v1718, %v2046
        %v2109 = vadd.f32 %v1719, %v2051
        %v2110 = vadd.f32 %v1720, %v2056
        %v2111 = vadd.f32 %v1721, %v2061
        %v2112 = vadd.f32 %v1722, %v2066
        %v2113 = vadd.f32 %v1723, %v2071
        %v2114 = vadd.f32 %v1724, %v2076
        %v2115 = vadd.f32 %v1725, %v2081
        %v2116 = vld [vmem:[%s587 + $0x1] sm:$0xff]
        %v2117 = vld [vmem:[%s587 + $0x9] sm:$0xff]
        %v2118 = vld [vmem:[%s587 + $0x19] sm:$0xff]
        %v2119 = vld [vmem:[%s587 + $0x21] sm:$0xff]
        %v2120 = vld [vmem:[%s587 + $0x31] sm:$0xff]
        %v2121 = vld [vmem:[%s587 + $0x39] sm:$0xff]
        %v2122 = vld [vmem:[%s587 + $0x49] sm:$0xff]
        %v2123 = vld [vmem:[%s587 + $0x51] sm:$0xff]
        %v2124 = vld [vmem:[%s587 + $0x61] sm:$0xff]
        %v2125 = vld [vmem:[%s587 + $0x69] sm:$0xff]
        %v2126 = vld [vmem:[%s587 + $0x79] sm:$0xff]
        %v2127 = vld [vmem:[%s587 + $0x81] sm:$0xff]
        %v2128 = vld [vmem:[%s587 + $0x91] sm:$0xff]
        %v2129 = vld [vmem:[%s587 + $0x99] sm:$0xff]
        %v2130 = vld [vmem:[%s587 + $0xa9] sm:$0xff]
        %v2131 = vld [vmem:[%s587 + $0xb1] sm:$0xff]
        %v2132 = vld [vmem:[%s587 + $0xc1] sm:$0xff]
        %v2133 = vld [vmem:[%s587 + $0xc9] sm:$0xff]
        %v2134 = vld [vmem:[%s587 + $0xd9] sm:$0xff]
        %v2135 = vld [vmem:[%s587 + $0xe1] sm:$0xff]
        %v2136 = vld [vmem:[%s587 + $0xf1] sm:$0xff]
        %v2137 = vld [vmem:[%s587 + $0xf9] sm:$0xff]
        %v2138 = vld [vmem:[%s587 + $0x109] sm:$0xff]
        %v2139 = vld [vmem:[%s587 + $0x111] sm:$0xff]
        %v2140 = vld [vmem:[%s587 + $0x121] sm:$0xff]
        %v2141 = vld [vmem:[%s587 + $0x129] sm:$0xff]
        %v2142 = vld [vmem:[%s587 + $0x139] sm:$0xff]
        %v2143 = vld [vmem:[%s587 + $0x141] sm:$0xff]
        %v2144 = vld [vmem:[%s587 + $0x151] sm:$0xff]
        %v2145 = vld [vmem:[%s587 + $0x159] sm:$0xff]
        %v2146 = vld [vmem:[%s587 + $0x169] sm:$0xff]
        %v2147 = vld [vmem:[%s587 + $0x171] sm:$0xff]
        %s2148 = scalar_lea.vmem %s3, 16
        %v2149 = vld [vmem:[%s2148] sm:$0xf]
        %v2151 = vsel %vm385, %v2116, 0
        %v2154 = vsel %vm385, %v2117, 0
        %v2157 = vsel %vm385, %v2118, 0
        %v2160 = vsel %vm385, %v2119, 0
        %v2163 = vsel %vm385, %v2120, 0
        %v2166 = vsel %vm385, %v2121, 0
        %v2169 = vsel %vm385, %v2122, 0
        %v2172 = vsel %vm385, %v2123, 0
        %v2175 = vsel %vm385, %v2124, 0
        %v2178 = vsel %vm385, %v2125, 0
        %v2181 = vsel %vm385, %v2126, 0
        %v2184 = vsel %vm385, %v2127, 0
        %v2187 = vsel %vm385, %v2128, 0
        %v2190 = vsel %vm385, %v2129, 0
        %v2193 = vsel %vm385, %v2130, 0
        %v2196 = vsel %vm385, %v2131, 0
        %v2199 = vsel %vm385, %v2132, 0
        %v2202 = vsel %vm385, %v2133, 0
        %v2205 = vsel %vm385, %v2134, 0
        %v2208 = vsel %vm385, %v2135, 0
        %v2211 = vsel %vm385, %v2136, 0
        %v2214 = vsel %vm385, %v2137, 0
        %v2217 = vsel %vm385, %v2138, 0
        %v2220 = vsel %vm385, %v2139, 0
        %v2223 = vsel %vm385, %v2140, 0
        %v2226 = vsel %vm385, %v2141, 0
        %v2229 = vsel %vm385, %v2142, 0
        %v2232 = vsel %vm385, %v2143, 0
        %v2235 = vsel %vm385, %v2144, 0
        %v2238 = vsel %vm385, %v2145, 0
        %v2241 = vsel %vm385, %v2146, 0
        %v2244 = vsel %vm385, %v2147, 0
        %v2247 = vsel %vm783, %v2149, 0
        %2249 = vmatprep.subr.mxu0 0.0
        %2250 = vmatpush1.msra.mxu0 0.0
        %2251 = vmatprep.subr.mxu0 0.0
        %2252 = vmatpush1.msra.mxu0 0.0
        %2253 = vmatprep.subr.mxu0 0.0
        %2254 = vmatpush1.msra.mxu0 0.0
        %2255 = vmatprep.subr.mxu0 0.0
        %2256 = vmatpush1.msra.mxu0 0.0
        %2257 = vmatprep.subr.mxu0 0.0
        %2258 = vmatpush1.msra.mxu0 0.0
        %2259 = vmatprep.subr.mxu0 0.0
        %2260 = vmatpush1.msra.mxu0 0.0
        %2261 = vmatprep.subr.mxu0 0.0
        %2262 = vmatpush1.msra.mxu0 0.0
        %2263 = vmatprep.subr.mxu0 0.0
        %2264 = vmatpush1.msra.mxu0 0.0
        %2265 = vmatprep.subr.mxu0 0.0
        %2266 = vmatpush1.msra.mxu0 0.0
        %2267 = vmatprep.subr.mxu0 0.0
        %2268 = vmatpush1.msra.mxu0 0.0
        %2269 = vmatprep.subr.mxu0 0.0
        %2270 = vmatpush1.msra.mxu0 0.0
        %2271 = vmatprep.subr.mxu0 0.0
        %2272 = vmatpush1.msra.mxu0 0.0
        %2273 = vmatprep.subr.mxu0 0.0
        %2274 = vmatpush1.msra.mxu0 0.0
        %2275 = vmatprep.subr.mxu0 0.0
        %2276 = vmatpush1.msra.mxu0 0.0
        %2277 = vmatprep.subr.mxu0 0.0
        %2278 = vmatpush1.msra.mxu0 0.0
        %2279 = vmatprep.subr.mxu0 0.0
        %2280 = vmatpush1.msra.mxu0 %v2247
        %2281 = vmatprep.subr.mxu0 0.0
        %2282 = vmatpush2.msra.mxu0 0.0
        %2283 = vmatprep.subr.mxu0 0.0
        %2284 = vmatpush2.msra.mxu0 0.0
        %2285 = vmatprep.subr.mxu0 0.0
        %2286 = vmatpush2.msra.mxu0 0.0
        %2287 = vmatprep.subr.mxu0 0.0
        %2288 = vmatpush2.msra.mxu0 0.0
        %2289 = vmatprep.subr.mxu0 0.0
        %2290 = vmatpush2.msra.mxu0 0.0
        %2291 = vmatprep.subr.mxu0 0.0
        %2292 = vmatpush2.msra.mxu0 0.0
        %2293 = vmatprep.subr.mxu0 0.0
        %2294 = vmatpush2.msra.mxu0 0.0
        %2295 = vmatprep.subr.mxu0 0.0
        %2296 = vmatpush2.msra.mxu0 0.0
        %2297 = vmatprep.subr.mxu0 0.0
        %2298 = vmatpush2.msra.mxu0 0.0
        %2299 = vmatprep.subr.mxu0 0.0
        %2300 = vmatpush2.msra.mxu0 0.0
        %2301 = vmatprep.subr.mxu0 0.0
        %2302 = vmatpush2.msra.mxu0 0.0
        %2303 = vmatprep.subr.mxu0 0.0
        %2304 = vmatpush2.msra.mxu0 0.0
        %2305 = vmatprep.subr.mxu0 0.0
        %2306 = vmatpush2.msra.mxu0 0.0
        %2307 = vmatprep.subr.mxu0 0.0
        %2308 = vmatpush2.msra.mxu0 0.0
        %2309 = vmatprep.subr.mxu0 0.0
        %2310 = vmatpush2.msra.mxu0 0.0
        %2311 = vmatprep.subr.mxu0 0.0
        %2312 = vmatpush2.msra.mxu0 0.0
        %2313 = vmatprep.mubr.f32.mxu0 0.0
        %2314 = vmatmul.mubr.f32.gmra.mxu0 %v2151
        %v2315 = vpop.f32.mrf.mxu0
        %v2316 = vadd.f32 0.0, %v2315
        %v2317 = vpop.f32.mrf.mxu0
        %2318 = vmatprep.mubr.f32.mxu0 0.0
        %2319 = vmatmul.mubr.f32.gmra.mxu0 %v2154
        %v2320 = vpop.f32.mrf.mxu0
        %v2321 = vadd.f32 0.0, %v2320
        %v2322 = vpop.f32.mrf.mxu0
        %2323 = vmatprep.mubr.f32.mxu0 0.0
        %2324 = vmatmul.mubr.f32.gmra.mxu0 %v2157
        %v2325 = vpop.f32.mrf.mxu0
        %v2326 = vadd.f32 0.0, %v2325
        %v2327 = vpop.f32.mrf.mxu0
        %2328 = vmatprep.mubr.f32.mxu0 0.0
        %2329 = vmatmul.mubr.f32.gmra.mxu0 %v2160
        %v2330 = vpop.f32.mrf.mxu0
        %v2331 = vadd.f32 0.0, %v2330
        %v2332 = vpop.f32.mrf.mxu0
        %2333 = vmatprep.mubr.f32.mxu0 0.0
        %2334 = vmatmul.mubr.f32.gmra.mxu0 %v2163
        %v2335 = vpop.f32.mrf.mxu0
        %v2336 = vadd.f32 0.0, %v2335
        %v2337 = vpop.f32.mrf.mxu0
        %2338 = vmatprep.mubr.f32.mxu0 0.0
        %2339 = vmatmul.mubr.f32.gmra.mxu0 %v2166
        %v2340 = vpop.f32.mrf.mxu0
        %v2341 = vadd.f32 0.0, %v2340
        %v2342 = vpop.f32.mrf.mxu0
        %2343 = vmatprep.mubr.f32.mxu0 0.0
        %2344 = vmatmul.mubr.f32.gmra.mxu0 %v2169
        %v2345 = vpop.f32.mrf.mxu0
        %v2346 = vadd.f32 0.0, %v2345
        %v2347 = vpop.f32.mrf.mxu0
        %2348 = vmatprep.mubr.f32.mxu0 0.0
        %2349 = vmatmul.mubr.f32.gmra.mxu0 %v2172
        %v2350 = vpop.f32.mrf.mxu0
        %v2351 = vadd.f32 0.0, %v2350
        %v2352 = vpop.f32.mrf.mxu0
        %2353 = vmatprep.mubr.f32.mxu0 0.0
        %2354 = vmatmul.mubr.f32.gmra.mxu0 %v2175
        %v2355 = vpop.f32.mrf.mxu0
        %v2356 = vadd.f32 0.0, %v2355
        %v2357 = vpop.f32.mrf.mxu0
        %2358 = vmatprep.mubr.f32.mxu0 0.0
        %2359 = vmatmul.mubr.f32.gmra.mxu0 %v2178
        %v2360 = vpop.f32.mrf.mxu0
        %v2361 = vadd.f32 0.0, %v2360
        %v2362 = vpop.f32.mrf.mxu0
        %2363 = vmatprep.mubr.f32.mxu0 0.0
        %2364 = vmatmul.mubr.f32.gmra.mxu0 %v2181
        %v2365 = vpop.f32.mrf.mxu0
        %v2366 = vadd.f32 0.0, %v2365
        %v2367 = vpop.f32.mrf.mxu0
        %2368 = vmatprep.mubr.f32.mxu0 0.0
        %2369 = vmatmul.mubr.f32.gmra.mxu0 %v2184
        %v2370 = vpop.f32.mrf.mxu0
        %v2371 = vadd.f32 0.0, %v2370
        %v2372 = vpop.f32.mrf.mxu0
        %2373 = vmatprep.mubr.f32.mxu0 0.0
        %2374 = vmatmul.mubr.f32.gmra.mxu0 %v2187
        %v2375 = vpop.f32.mrf.mxu0
        %v2376 = vadd.f32 0.0, %v2375
        %v2377 = vpop.f32.mrf.mxu0
        %2378 = vmatprep.mubr.f32.mxu0 0.0
        %2379 = vmatmul.mubr.f32.gmra.mxu0 %v2190
        %v2380 = vpop.f32.mrf.mxu0
        %v2381 = vadd.f32 0.0, %v2380
        %v2382 = vpop.f32.mrf.mxu0
        %2383 = vmatprep.mubr.f32.mxu0 0.0
        %2384 = vmatmul.mubr.f32.gmra.mxu0 %v2193
        %v2385 = vpop.f32.mrf.mxu0
        %v2386 = vadd.f32 0.0, %v2385
        %v2387 = vpop.f32.mrf.mxu0
        %2388 = vmatprep.mubr.f32.mxu0 0.0
        %2389 = vmatmul.mubr.f32.gmra.mxu0 %v2196
        %v2390 = vpop.f32.mrf.mxu0
        %v2391 = vadd.f32 0.0, %v2390
        %v2392 = vpop.f32.mrf.mxu0
        %2393 = vmatprep.mubr.f32.mxu0 0.0
        %2394 = vmatmul.mubr.f32.gmra.mxu0 %v2199
        %v2395 = vpop.f32.mrf.mxu0
        %v2396 = vadd.f32 0.0, %v2395
        %v2397 = vpop.f32.mrf.mxu0
        %2398 = vmatprep.mubr.f32.mxu0 0.0
        %2399 = vmatmul.mubr.f32.gmra.mxu0 %v2202
        %v2400 = vpop.f32.mrf.mxu0
        %v2401 = vadd.f32 0.0, %v2400
        %v2402 = vpop.f32.mrf.mxu0
        %2403 = vmatprep.mubr.f32.mxu0 0.0
        %2404 = vmatmul.mubr.f32.gmra.mxu0 %v2205
        %v2405 = vpop.f32.mrf.mxu0
        %v2406 = vadd.f32 0.0, %v2405
        %v2407 = vpop.f32.mrf.mxu0
        %2408 = vmatprep.mubr.f32.mxu0 0.0
        %2409 = vmatmul.mubr.f32.gmra.mxu0 %v2208
        %v2410 = vpop.f32.mrf.mxu0
        %v2411 = vadd.f32 0.0, %v2410
        %v2412 = vpop.f32.mrf.mxu0
        %2413 = vmatprep.mubr.f32.mxu0 0.0
        %2414 = vmatmul.mubr.f32.gmra.mxu0 %v2211
        %v2415 = vpop.f32.mrf.mxu0
        %v2416 = vadd.f32 0.0, %v2415
        %v2417 = vpop.f32.mrf.mxu0
        %2418 = vmatprep.mubr.f32.mxu0 0.0
        %2419 = vmatmul.mubr.f32.gmra.mxu0 %v2214
        %v2420 = vpop.f32.mrf.mxu0
        %v2421 = vadd.f32 0.0, %v2420
        %v2422 = vpop.f32.mrf.mxu0
        %2423 = vmatprep.mubr.f32.mxu0 0.0
        %2424 = vmatmul.mubr.f32.gmra.mxu0 %v2217
        %v2425 = vpop.f32.mrf.mxu0
        %v2426 = vadd.f32 0.0, %v2425
        %v2427 = vpop.f32.mrf.mxu0
        %2428 = vmatprep.mubr.f32.mxu0 0.0
        %2429 = vmatmul.mubr.f32.gmra.mxu0 %v2220
        %v2430 = vpop.f32.mrf.mxu0
        %v2431 = vadd.f32 0.0, %v2430
        %v2432 = vpop.f32.mrf.mxu0
        %2433 = vmatprep.mubr.f32.mxu0 0.0
        %2434 = vmatmul.mubr.f32.gmra.mxu0 %v2223
        %v2435 = vpop.f32.mrf.mxu0
        %v2436 = vadd.f32 0.0, %v2435
        %v2437 = vpop.f32.mrf.mxu0
        %2438 = vmatprep.mubr.f32.mxu0 0.0
        %2439 = vmatmul.mubr.f32.gmra.mxu0 %v2226
        %v2440 = vpop.f32.mrf.mxu0
        %v2441 = vadd.f32 0.0, %v2440
        %v2442 = vpop.f32.mrf.mxu0
        %2443 = vmatprep.mubr.f32.mxu0 0.0
        %2444 = vmatmul.mubr.f32.gmra.mxu0 %v2229
        %v2445 = vpop.f32.mrf.mxu0
        %v2446 = vadd.f32 0.0, %v2445
        %v2447 = vpop.f32.mrf.mxu0
        %2448 = vmatprep.mubr.f32.mxu0 0.0
        %2449 = vmatmul.mubr.f32.gmra.mxu0 %v2232
        %v2450 = vpop.f32.mrf.mxu0
        %v2451 = vadd.f32 0.0, %v2450
        %v2452 = vpop.f32.mrf.mxu0
        %2453 = vmatprep.mubr.f32.mxu0 0.0
        %2454 = vmatmul.mubr.f32.gmra.mxu0 %v2235
        %v2455 = vpop.f32.mrf.mxu0
        %v2456 = vadd.f32 0.0, %v2455
        %v2457 = vpop.f32.mrf.mxu0
        %2458 = vmatprep.mubr.f32.mxu0 0.0
        %2459 = vmatmul.mubr.f32.gmra.mxu0 %v2238
        %v2460 = vpop.f32.mrf.mxu0
        %v2461 = vadd.f32 0.0, %v2460
        %v2462 = vpop.f32.mrf.mxu0
        %2463 = vmatprep.mubr.f32.mxu0 0.0
        %2464 = vmatmul.mubr.f32.gmra.mxu0 %v2241
        %v2465 = vpop.f32.mrf.mxu0
        %v2466 = vadd.f32 0.0, %v2465
        %v2467 = vpop.f32.mrf.mxu0
        %2468 = vmatprep.mubr.f32.mxu0 0.0
        %2469 = vmatmul.mubr.f32.gmra.mxu0 %v2244
        %v2470 = vpop.f32.mrf.mxu0
        %v2471 = vadd.f32 0.0, %v2470
        %v2472 = vpop.f32.mrf.mxu0
        %2473 = vdwg.mxu0
        %v2474 = vadd.f32 %v2084, %v2316
        %v2475 = vadd.f32 %v2085, %v2321
        %v2476 = vadd.f32 %v2086, %v2326
        %v2477 = vadd.f32 %v2087, %v2331
        %v2478 = vadd.f32 %v2088, %v2336
        %v2479 = vadd.f32 %v2089, %v2341
        %v2480 = vadd.f32 %v2090, %v2346
        %v2481 = vadd.f32 %v2091, %v2351
        %v2482 = vadd.f32 %v2092, %v2356
        %v2483 = vadd.f32 %v2093, %v2361
        %v2484 = vadd.f32 %v2094, %v2366
        %v2485 = vadd.f32 %v2095, %v2371
        %v2486 = vadd.f32 %v2096, %v2376
        %v2487 = vadd.f32 %v2097, %v2381
        %v2488 = vadd.f32 %v2098, %v2386
        %v2489 = vadd.f32 %v2099, %v2391
        %v2490 = vadd.f32 %v2100, %v2396
        %v2491 = vadd.f32 %v2101, %v2401
        %v2492 = vadd.f32 %v2102, %v2406
        %v2493 = vadd.f32 %v2103, %v2411
        %v2494 = vadd.f32 %v2104, %v2416
        %v2495 = vadd.f32 %v2105, %v2421
        %v2496 = vadd.f32 %v2106, %v2426
        %v2497 = vadd.f32 %v2107, %v2431
        %v2498 = vadd.f32 %v2108, %v2436
        %v2499 = vadd.f32 %v2109, %v2441
        %v2500 = vadd.f32 %v2110, %v2446
        %v2501 = vadd.f32 %v2111, %v2451
        %v2502 = vadd.f32 %v2112, %v2456
        %v2503 = vadd.f32 %v2113, %v2461
        %v2504 = vadd.f32 %v2114, %v2466
        %v2505 = vadd.f32 %v2115, %v2471
        %v2506 = vld [vmem:[%s587 + $0x2] sm:$0xff]
        %v2507 = vld [vmem:[%s587 + $0xa] sm:$0xff]
        %v2508 = vld [vmem:[%s587 + $0x1a] sm:$0xff]
        %v2509 = vld [vmem:[%s587 + $0x22] sm:$0xff]
        %v2510 = vld [vmem:[%s587 + $0x32] sm:$0xff]
        %v2511 = vld [vmem:[%s587 + $0x3a] sm:$0xff]
        %v2512 = vld [vmem:[%s587 + $0x4a] sm:$0xff]
        %v2513 = vld [vmem:[%s587 + $0x52] sm:$0xff]
        %v2514 = vld [vmem:[%s587 + $0x62] sm:$0xff]
        %v2515 = vld [vmem:[%s587 + $0x6a] sm:$0xff]
        %v2516 = vld [vmem:[%s587 + $0x7a] sm:$0xff]
        %v2517 = vld [vmem:[%s587 + $0x82] sm:$0xff]
        %v2518 = vld [vmem:[%s587 + $0x92] sm:$0xff]
        %v2519 = vld [vmem:[%s587 + $0x9a] sm:$0xff]
        %v2520 = vld [vmem:[%s587 + $0xaa] sm:$0xff]
        %v2521 = vld [vmem:[%s587 + $0xb2] sm:$0xff]
        %v2522 = vld [vmem:[%s587 + $0xc2] sm:$0xff]
        %v2523 = vld [vmem:[%s587 + $0xca] sm:$0xff]
        %v2524 = vld [vmem:[%s587 + $0xda] sm:$0xff]
        %v2525 = vld [vmem:[%s587 + $0xe2] sm:$0xff]
        %v2526 = vld [vmem:[%s587 + $0xf2] sm:$0xff]
        %v2527 = vld [vmem:[%s587 + $0xfa] sm:$0xff]
        %v2528 = vld [vmem:[%s587 + $0x10a] sm:$0xff]
        %v2529 = vld [vmem:[%s587 + $0x112] sm:$0xff]
        %v2530 = vld [vmem:[%s587 + $0x122] sm:$0xff]
        %v2531 = vld [vmem:[%s587 + $0x12a] sm:$0xff]
        %v2532 = vld [vmem:[%s587 + $0x13a] sm:$0xff]
        %v2533 = vld [vmem:[%s587 + $0x142] sm:$0xff]
        %v2534 = vld [vmem:[%s587 + $0x152] sm:$0xff]
        %v2535 = vld [vmem:[%s587 + $0x15a] sm:$0xff]
        %v2536 = vld [vmem:[%s587 + $0x16a] sm:$0xff]
        %v2537 = vld [vmem:[%s587 + $0x172] sm:$0xff]
        %s2538 = scalar_lea.vmem %s3, 20
        %v2539 = vld [vmem:[%s2538] sm:$0xf]
        %v2541 = vsel %vm385, %v2506, 0
        %v2544 = vsel %vm385, %v2507, 0
        %v2547 = vsel %vm385, %v2508, 0
        %v2550 = vsel %vm385, %v2509, 0
        %v2553 = vsel %vm385, %v2510, 0
        %v2556 = vsel %vm385, %v2511, 0
        %v2559 = vsel %vm385, %v2512, 0
        %v2562 = vsel %vm385, %v2513, 0
        %v2565 = vsel %vm385, %v2514, 0
        %v2568 = vsel %vm385, %v2515, 0
        %v2571 = vsel %vm385, %v2516, 0
        %v2574 = vsel %vm385, %v2517, 0
        %v2577 = vsel %vm385, %v2518, 0
        %v2580 = vsel %vm385, %v2519, 0
        %v2583 = vsel %vm385, %v2520, 0
        %v2586 = vsel %vm385, %v2521, 0
        %v2589 = vsel %vm385, %v2522, 0
        %v2592 = vsel %vm385, %v2523, 0
        %v2595 = vsel %vm385, %v2524, 0
        %v2598 = vsel %vm385, %v2525, 0
        %v2601 = vsel %vm385, %v2526, 0
        %v2604 = vsel %vm385, %v2527, 0
        %v2607 = vsel %vm385, %v2528, 0
        %v2610 = vsel %vm385, %v2529, 0
        %v2613 = vsel %vm385, %v2530, 0
        %v2616 = vsel %vm385, %v2531, 0
        %v2619 = vsel %vm385, %v2532, 0
        %v2622 = vsel %vm385, %v2533, 0
        %v2625 = vsel %vm385, %v2534, 0
        %v2628 = vsel %vm385, %v2535, 0
        %v2631 = vsel %vm385, %v2536, 0
        %v2634 = vsel %vm385, %v2537, 0
        %v2637 = vsel %vm783, %v2539, 0
        %2639 = vmatprep.subr.mxu0 0.0
        %2640 = vmatpush1.msra.mxu0 0.0
        %2641 = vmatprep.subr.mxu0 0.0
        %2642 = vmatpush1.msra.mxu0 0.0
        %2643 = vmatprep.subr.mxu0 0.0
        %2644 = vmatpush1.msra.mxu0 0.0
        %2645 = vmatprep.subr.mxu0 0.0
        %2646 = vmatpush1.msra.mxu0 0.0
        %2647 = vmatprep.subr.mxu0 0.0
        %2648 = vmatpush1.msra.mxu0 0.0
        %2649 = vmatprep.subr.mxu0 0.0
        %2650 = vmatpush1.msra.mxu0 0.0
        %2651 = vmatprep.subr.mxu0 0.0
        %2652 = vmatpush1.msra.mxu0 0.0
        %2653 = vmatprep.subr.mxu0 0.0
        %2654 = vmatpush1.msra.mxu0 0.0
        %2655 = vmatprep.subr.mxu0 0.0
        %2656 = vmatpush1.msra.mxu0 0.0
        %2657 = vmatprep.subr.mxu0 0.0
        %2658 = vmatpush1.msra.mxu0 0.0
        %2659 = vmatprep.subr.mxu0 0.0
        %2660 = vmatpush1.msra.mxu0 0.0
        %2661 = vmatprep.subr.mxu0 0.0
        %2662 = vmatpush1.msra.mxu0 0.0
        %2663 = vmatprep.subr.mxu0 0.0
        %2664 = vmatpush1.msra.mxu0 0.0
        %2665 = vmatprep.subr.mxu0 0.0
        %2666 = vmatpush1.msra.mxu0 0.0
        %2667 = vmatprep.subr.mxu0 0.0
        %2668 = vmatpush1.msra.mxu0 0.0
        %2669 = vmatprep.subr.mxu0 0.0
        %2670 = vmatpush1.msra.mxu0 %v2637
        %2671 = vmatprep.subr.mxu0 0.0
        %2672 = vmatpush2.msra.mxu0 0.0
        %2673 = vmatprep.subr.mxu0 0.0
        %2674 = vmatpush2.msra.mxu0 0.0
        %2675 = vmatprep.subr.mxu0 0.0
        %2676 = vmatpush2.msra.mxu0 0.0
        %2677 = vmatprep.subr.mxu0 0.0
        %2678 = vmatpush2.msra.mxu0 0.0
        %2679 = vmatprep.subr.mxu0 0.0
        %2680 = vmatpush2.msra.mxu0 0.0
        %2681 = vmatprep.subr.mxu0 0.0
        %2682 = vmatpush2.msra.mxu0 0.0
        %2683 = vmatprep.subr.mxu0 0.0
        %2684 = vmatpush2.msra.mxu0 0.0
        %2685 = vmatprep.subr.mxu0 0.0
        %2686 = vmatpush2.msra.mxu0 0.0
        %2687 = vmatprep.subr.mxu0 0.0
        %2688 = vmatpush2.msra.mxu0 0.0
        %2689 = vmatprep.subr.mxu0 0.0
        %2690 = vmatpush2.msra.mxu0 0.0
        %2691 = vmatprep.subr.mxu0 0.0
        %2692 = vmatpush2.msra.mxu0 0.0
        %2693 = vmatprep.subr.mxu0 0.0
        %2694 = vmatpush2.msra.mxu0 0.0
        %2695 = vmatprep.subr.mxu0 0.0
        %2696 = vmatpush2.msra.mxu0 0.0
        %2697 = vmatprep.subr.mxu0 0.0
        %2698 = vmatpush2.msra.mxu0 0.0
        %2699 = vmatprep.subr.mxu0 0.0
        %2700 = vmatpush2.msra.mxu0 0.0
        %2701 = vmatprep.subr.mxu0 0.0
        %2702 = vmatpush2.msra.mxu0 0.0
        %2703 = vmatprep.mubr.f32.mxu0 0.0
        %2704 = vmatmul.mubr.f32.gmra.mxu0 %v2541
        %v2705 = vpop.f32.mrf.mxu0
        %v2706 = vadd.f32 0.0, %v2705
        %v2707 = vpop.f32.mrf.mxu0
        %2708 = vmatprep.mubr.f32.mxu0 0.0
        %2709 = vmatmul.mubr.f32.gmra.mxu0 %v2544
        %v2710 = vpop.f32.mrf.mxu0
        %v2711 = vadd.f32 0.0, %v2710
        %v2712 = vpop.f32.mrf.mxu0
        %2713 = vmatprep.mubr.f32.mxu0 0.0
        %2714 = vmatmul.mubr.f32.gmra.mxu0 %v2547
        %v2715 = vpop.f32.mrf.mxu0
        %v2716 = vadd.f32 0.0, %v2715
        %v2717 = vpop.f32.mrf.mxu0
        %2718 = vmatprep.mubr.f32.mxu0 0.0
        %2719 = vmatmul.mubr.f32.gmra.mxu0 %v2550
        %v2720 = vpop.f32.mrf.mxu0
        %v2721 = vadd.f32 0.0, %v2720
        %v2722 = vpop.f32.mrf.mxu0
        %2723 = vmatprep.mubr.f32.mxu0 0.0
        %2724 = vmatmul.mubr.f32.gmra.mxu0 %v2553
        %v2725 = vpop.f32.mrf.mxu0
        %v2726 = vadd.f32 0.0, %v2725
        %v2727 = vpop.f32.mrf.mxu0
        %2728 = vmatprep.mubr.f32.mxu0 0.0
        %2729 = vmatmul.mubr.f32.gmra.mxu0 %v2556
        %v2730 = vpop.f32.mrf.mxu0
        %v2731 = vadd.f32 0.0, %v2730
        %v2732 = vpop.f32.mrf.mxu0
        %2733 = vmatprep.mubr.f32.mxu0 0.0
        %2734 = vmatmul.mubr.f32.gmra.mxu0 %v2559
        %v2735 = vpop.f32.mrf.mxu0
        %v2736 = vadd.f32 0.0, %v2735
        %v2737 = vpop.f32.mrf.mxu0
        %2738 = vmatprep.mubr.f32.mxu0 0.0
        %2739 = vmatmul.mubr.f32.gmra.mxu0 %v2562
        %v2740 = vpop.f32.mrf.mxu0
        %v2741 = vadd.f32 0.0, %v2740
        %v2742 = vpop.f32.mrf.mxu0
        %2743 = vmatprep.mubr.f32.mxu0 0.0
        %2744 = vmatmul.mubr.f32.gmra.mxu0 %v2565
        %v2745 = vpop.f32.mrf.mxu0
        %v2746 = vadd.f32 0.0, %v2745
        %v2747 = vpop.f32.mrf.mxu0
        %2748 = vmatprep.mubr.f32.mxu0 0.0
        %2749 = vmatmul.mubr.f32.gmra.mxu0 %v2568
        %v2750 = vpop.f32.mrf.mxu0
        %v2751 = vadd.f32 0.0, %v2750
        %v2752 = vpop.f32.mrf.mxu0
        %2753 = vmatprep.mubr.f32.mxu0 0.0
        %2754 = vmatmul.mubr.f32.gmra.mxu0 %v2571
        %v2755 = vpop.f32.mrf.mxu0
        %v2756 = vadd.f32 0.0, %v2755
        %v2757 = vpop.f32.mrf.mxu0
        %2758 = vmatprep.mubr.f32.mxu0 0.0
        %2759 = vmatmul.mubr.f32.gmra.mxu0 %v2574
        %v2760 = vpop.f32.mrf.mxu0
        %v2761 = vadd.f32 0.0, %v2760
        %v2762 = vpop.f32.mrf.mxu0
        %2763 = vmatprep.mubr.f32.mxu0 0.0
        %2764 = vmatmul.mubr.f32.gmra.mxu0 %v2577
        %v2765 = vpop.f32.mrf.mxu0
        %v2766 = vadd.f32 0.0, %v2765
        %v2767 = vpop.f32.mrf.mxu0
        %2768 = vmatprep.mubr.f32.mxu0 0.0
        %2769 = vmatmul.mubr.f32.gmra.mxu0 %v2580
        %v2770 = vpop.f32.mrf.mxu0
        %v2771 = vadd.f32 0.0, %v2770
        %v2772 = vpop.f32.mrf.mxu0
        %2773 = vmatprep.mubr.f32.mxu0 0.0
        %2774 = vmatmul.mubr.f32.gmra.mxu0 %v2583
        %v2775 = vpop.f32.mrf.mxu0
        %v2776 = vadd.f32 0.0, %v2775
        %v2777 = vpop.f32.mrf.mxu0
        %2778 = vmatprep.mubr.f32.mxu0 0.0
        %2779 = vmatmul.mubr.f32.gmra.mxu0 %v2586
        %v2780 = vpop.f32.mrf.mxu0
        %v2781 = vadd.f32 0.0, %v2780
        %v2782 = vpop.f32.mrf.mxu0
        %2783 = vmatprep.mubr.f32.mxu0 0.0
        %2784 = vmatmul.mubr.f32.gmra.mxu0 %v2589
        %v2785 = vpop.f32.mrf.mxu0
        %v2786 = vadd.f32 0.0, %v2785
        %v2787 = vpop.f32.mrf.mxu0
        %2788 = vmatprep.mubr.f32.mxu0 0.0
        %2789 = vmatmul.mubr.f32.gmra.mxu0 %v2592
        %v2790 = vpop.f32.mrf.mxu0
        %v2791 = vadd.f32 0.0, %v2790
        %v2792 = vpop.f32.mrf.mxu0
        %2793 = vmatprep.mubr.f32.mxu0 0.0
        %2794 = vmatmul.mubr.f32.gmra.mxu0 %v2595
        %v2795 = vpop.f32.mrf.mxu0
        %v2796 = vadd.f32 0.0, %v2795
        %v2797 = vpop.f32.mrf.mxu0
        %2798 = vmatprep.mubr.f32.mxu0 0.0
        %2799 = vmatmul.mubr.f32.gmra.mxu0 %v2598
        %v2800 = vpop.f32.mrf.mxu0
        %v2801 = vadd.f32 0.0, %v2800
        %v2802 = vpop.f32.mrf.mxu0
        %2803 = vmatprep.mubr.f32.mxu0 0.0
        %2804 = vmatmul.mubr.f32.gmra.mxu0 %v2601
        %v2805 = vpop.f32.mrf.mxu0
        %v2806 = vadd.f32 0.0, %v2805
        %v2807 = vpop.f32.mrf.mxu0
        %2808 = vmatprep.mubr.f32.mxu0 0.0
        %2809 = vmatmul.mubr.f32.gmra.mxu0 %v2604
        %v2810 = vpop.f32.mrf.mxu0
        %v2811 = vadd.f32 0.0, %v2810
        %v2812 = vpop.f32.mrf.mxu0
        %2813 = vmatprep.mubr.f32.mxu0 0.0
        %2814 = vmatmul.mubr.f32.gmra.mxu0 %v2607
        %v2815 = vpop.f32.mrf.mxu0
        %v2816 = vadd.f32 0.0, %v2815
        %v2817 = vpop.f32.mrf.mxu0
        %2818 = vmatprep.mubr.f32.mxu0 0.0
        %2819 = vmatmul.mubr.f32.gmra.mxu0 %v2610
        %v2820 = vpop.f32.mrf.mxu0
        %v2821 = vadd.f32 0.0, %v2820
        %v2822 = vpop.f32.mrf.mxu0
        %2823 = vmatprep.mubr.f32.mxu0 0.0
        %2824 = vmatmul.mubr.f32.gmra.mxu0 %v2613
        %v2825 = vpop.f32.mrf.mxu0
        %v2826 = vadd.f32 0.0, %v2825
        %v2827 = vpop.f32.mrf.mxu0
        %2828 = vmatprep.mubr.f32.mxu0 0.0
        %2829 = vmatmul.mubr.f32.gmra.mxu0 %v2616
        %v2830 = vpop.f32.mrf.mxu0
        %v2831 = vadd.f32 0.0, %v2830
        %v2832 = vpop.f32.mrf.mxu0
        %2833 = vmatprep.mubr.f32.mxu0 0.0
        %2834 = vmatmul.mubr.f32.gmra.mxu0 %v2619
        %v2835 = vpop.f32.mrf.mxu0
        %v2836 = vadd.f32 0.0, %v2835
        %v2837 = vpop.f32.mrf.mxu0
        %2838 = vmatprep.mubr.f32.mxu0 0.0
        %2839 = vmatmul.mubr.f32.gmra.mxu0 %v2622
        %v2840 = vpop.f32.mrf.mxu0
        %v2841 = vadd.f32 0.0, %v2840
        %v2842 = vpop.f32.mrf.mxu0
        %2843 = vmatprep.mubr.f32.mxu0 0.0
        %2844 = vmatmul.mubr.f32.gmra.mxu0 %v2625
        %v2845 = vpop.f32.mrf.mxu0
        %v2846 = vadd.f32 0.0, %v2845
        %v2847 = vpop.f32.mrf.mxu0
        %2848 = vmatprep.mubr.f32.mxu0 0.0
        %2849 = vmatmul.mubr.f32.gmra.mxu0 %v2628
        %v2850 = vpop.f32.mrf.mxu0
        %v2851 = vadd.f32 0.0, %v2850
        %v2852 = vpop.f32.mrf.mxu0
        %2853 = vmatprep.mubr.f32.mxu0 0.0
        %2854 = vmatmul.mubr.f32.gmra.mxu0 %v2631
        %v2855 = vpop.f32.mrf.mxu0
        %v2856 = vadd.f32 0.0, %v2855
        %v2857 = vpop.f32.mrf.mxu0
        %2858 = vmatprep.mubr.f32.mxu0 0.0
        %2859 = vmatmul.mubr.f32.gmra.mxu0 %v2634
        %v2860 = vpop.f32.mrf.mxu0
        %v2861 = vadd.f32 0.0, %v2860
        %v2862 = vpop.f32.mrf.mxu0
        %2863 = vdwg.mxu0
        %v2864 = vadd.f32 %v2474, %v2706
        %v2865 = vadd.f32 %v2475, %v2711
        %v2866 = vadd.f32 %v2476, %v2716
        %v2867 = vadd.f32 %v2477, %v2721
        %v2868 = vadd.f32 %v2478, %v2726
        %v2869 = vadd.f32 %v2479, %v2731
        %v2870 = vadd.f32 %v2480, %v2736
        %v2871 = vadd.f32 %v2481, %v2741
        %v2872 = vadd.f32 %v2482, %v2746
        %v2873 = vadd.f32 %v2483, %v2751
        %v2874 = vadd.f32 %v2484, %v2756
        %v2875 = vadd.f32 %v2485, %v2761
        %v2876 = vadd.f32 %v2486, %v2766
        %v2877 = vadd.f32 %v2487, %v2771
        %v2878 = vadd.f32 %v2488, %v2776
        %v2879 = vadd.f32 %v2489, %v2781
        %v2880 = vadd.f32 %v2490, %v2786
        %v2881 = vadd.f32 %v2491, %v2791
        %v2882 = vadd.f32 %v2492, %v2796
        %v2883 = vadd.f32 %v2493, %v2801
        %v2884 = vadd.f32 %v2494, %v2806
        %v2885 = vadd.f32 %v2495, %v2811
        %v2886 = vadd.f32 %v2496, %v2816
        %v2887 = vadd.f32 %v2497, %v2821
        %v2888 = vadd.f32 %v2498, %v2826
        %v2889 = vadd.f32 %v2499, %v2831
        %v2890 = vadd.f32 %v2500, %v2836
        %v2891 = vadd.f32 %v2501, %v2841
        %v2892 = vadd.f32 %v2502, %v2846
        %v2893 = vadd.f32 %v2503, %v2851
        %v2894 = vadd.f32 %v2504, %v2856
        %v2895 = vadd.f32 %v2505, %v2861
        %s2896 = scalar_lea.vmem [#allocation2], 48
        %v2897 = vld [vmem:[%s2896] sm:$0xff]
        %v2898 = vld [vmem:[%s2896 + $0x8] sm:$0xff]
        %v2899 = vld [vmem:[%s2896 + $0x18] sm:$0xff]
        %v2900 = vld [vmem:[%s2896 + $0x20] sm:$0xff]
        %v2901 = vld [vmem:[%s2896 + $0x30] sm:$0xff]
        %v2902 = vld [vmem:[%s2896 + $0x38] sm:$0xff]
        %v2903 = vld [vmem:[%s2896 + $0x48] sm:$0xff]
        %v2904 = vld [vmem:[%s2896 + $0x50] sm:$0xff]
        %v2905 = vld [vmem:[%s2896 + $0x60] sm:$0xff]
        %v2906 = vld [vmem:[%s2896 + $0x68] sm:$0xff]
        %v2907 = vld [vmem:[%s2896 + $0x78] sm:$0xff]
        %v2908 = vld [vmem:[%s2896 + $0x80] sm:$0xff]
        %v2909 = vld [vmem:[%s2896 + $0x90] sm:$0xff]
        %v2910 = vld [vmem:[%s2896 + $0x98] sm:$0xff]
        %v2911 = vld [vmem:[%s2896 + $0xa8] sm:$0xff]
        %v2912 = vld [vmem:[%s2896 + $0xb0] sm:$0xff]
        %v2913 = vld [vmem:[%s2896 + $0xc0] sm:$0xff]
        %v2914 = vld [vmem:[%s2896 + $0xc8] sm:$0xff]
        %v2915 = vld [vmem:[%s2896 + $0xd8] sm:$0xff]
        %v2916 = vld [vmem:[%s2896 + $0xe0] sm:$0xff]
        %v2917 = vld [vmem:[%s2896 + $0xf0] sm:$0xff]
        %v2918 = vld [vmem:[%s2896 + $0xf8] sm:$0xff]
        %v2919 = vld [vmem:[%s2896 + $0x108] sm:$0xff]
        %v2920 = vld [vmem:[%s2896 + $0x110] sm:$0xff]
        %v2921 = vld [vmem:[%s2896 + $0x120] sm:$0xff]
        %v2922 = vld [vmem:[%s2896 + $0x128] sm:$0xff]
        %v2923 = vld [vmem:[%s2896 + $0x138] sm:$0xff]
        %v2924 = vld [vmem:[%s2896 + $0x140] sm:$0xff]
        %v2925 = vld [vmem:[%s2896 + $0x150] sm:$0xff]
        %v2926 = vld [vmem:[%s2896 + $0x158] sm:$0xff]
        %v2927 = vld [vmem:[%s2896 + $0x168] sm:$0xff]
        %v2928 = vld [vmem:[%s2896 + $0x170] sm:$0xff]
        %s2929 = scalar_lea.vmem %s3, 24
        %v2930 = vld [vmem:[%s2929] sm:$0xf]
        %v2932 = vsel %vm385, %v2897, 0
        %v2935 = vsel %vm385, %v2898, 0
        %v2938 = vsel %vm385, %v2899, 0
        %v2941 = vsel %vm385, %v2900, 0
        %v2944 = vsel %vm385, %v2901, 0
        %v2947 = vsel %vm385, %v2902, 0
        %v2950 = vsel %vm385, %v2903, 0
        %v2953 = vsel %vm385, %v2904, 0
        %v2956 = vsel %vm385, %v2905, 0
        %v2959 = vsel %vm385, %v2906, 0
        %v2962 = vsel %vm385, %v2907, 0
        %v2965 = vsel %vm385, %v2908, 0
        %v2968 = vsel %vm385, %v2909, 0
        %v2971 = vsel %vm385, %v2910, 0
        %v2974 = vsel %vm385, %v2911, 0
        %v2977 = vsel %vm385, %v2912, 0
        %v2980 = vsel %vm385, %v2913, 0
        %v2983 = vsel %vm385, %v2914, 0
        %v2986 = vsel %vm385, %v2915, 0
        %v2989 = vsel %vm385, %v2916, 0
        %v2992 = vsel %vm385, %v2917, 0
        %v2995 = vsel %vm385, %v2918, 0
        %v2998 = vsel %vm385, %v2919, 0
        %v3001 = vsel %vm385, %v2920, 0
        %v3004 = vsel %vm385, %v2921, 0
        %v3007 = vsel %vm385, %v2922, 0
        %v3010 = vsel %vm385, %v2923, 0
        %v3013 = vsel %vm385, %v2924, 0
        %v3016 = vsel %vm385, %v2925, 0
        %v3019 = vsel %vm385, %v2926, 0
        %v3022 = vsel %vm385, %v2927, 0
        %v3025 = vsel %vm385, %v2928, 0
        %v3028 = vsel %vm783, %v2930, 0
        %3030 = vmatprep.subr.mxu0 0.0
        %3031 = vmatpush1.msra.mxu0 0.0
        %3032 = vmatprep.subr.mxu0 0.0
        %3033 = vmatpush1.msra.mxu0 0.0
        %3034 = vmatprep.subr.mxu0 0.0
        %3035 = vmatpush1.msra.mxu0 0.0
        %3036 = vmatprep.subr.mxu0 0.0
        %3037 = vmatpush1.msra.mxu0 0.0
        %3038 = vmatprep.subr.mxu0 0.0
        %3039 = vmatpush1.msra.mxu0 0.0
        %3040 = vmatprep.subr.mxu0 0.0
        %3041 = vmatpush1.msra.mxu0 0.0
        %3042 = vmatprep.subr.mxu0 0.0
        %3043 = vmatpush1.msra.mxu0 0.0
        %3044 = vmatprep.subr.mxu0 0.0
        %3045 = vmatpush1.msra.mxu0 0.0
        %3046 = vmatprep.subr.mxu0 0.0
        %3047 = vmatpush1.msra.mxu0 0.0
        %3048 = vmatprep.subr.mxu0 0.0
        %3049 = vmatpush1.msra.mxu0 0.0
        %3050 = vmatprep.subr.mxu0 0.0
        %3051 = vmatpush1.msra.mxu0 0.0
        %3052 = vmatprep.subr.mxu0 0.0
        %3053 = vmatpush1.msra.mxu0 0.0
        %3054 = vmatprep.subr.mxu0 0.0
        %3055 = vmatpush1.msra.mxu0 0.0
        %3056 = vmatprep.subr.mxu0 0.0
        %3057 = vmatpush1.msra.mxu0 0.0
        %3058 = vmatprep.subr.mxu0 0.0
        %3059 = vmatpush1.msra.mxu0 0.0
        %3060 = vmatprep.subr.mxu0 0.0
        %3061 = vmatpush1.msra.mxu0 %v3028
        %3062 = vmatprep.subr.mxu0 0.0
        %3063 = vmatpush2.msra.mxu0 0.0
        %3064 = vmatprep.subr.mxu0 0.0
        %3065 = vmatpush2.msra.mxu0 0.0
        %3066 = vmatprep.subr.mxu0 0.0
        %3067 = vmatpush2.msra.mxu0 0.0
        %3068 = vmatprep.subr.mxu0 0.0
        %3069 = vmatpush2.msra.mxu0 0.0
        %3070 = vmatprep.subr.mxu0 0.0
        %3071 = vmatpush2.msra.mxu0 0.0
        %3072 = vmatprep.subr.mxu0 0.0
        %3073 = vmatpush2.msra.mxu0 0.0
        %3074 = vmatprep.subr.mxu0 0.0
        %3075 = vmatpush2.msra.mxu0 0.0
        %3076 = vmatprep.subr.mxu0 0.0
        %3077 = vmatpush2.msra.mxu0 0.0
        %3078 = vmatprep.subr.mxu0 0.0
        %3079 = vmatpush2.msra.mxu0 0.0
        %3080 = vmatprep.subr.mxu0 0.0
        %3081 = vmatpush2.msra.mxu0 0.0
        %3082 = vmatprep.subr.mxu0 0.0
        %3083 = vmatpush2.msra.mxu0 0.0
        %3084 = vmatprep.subr.mxu0 0.0
        %3085 = vmatpush2.msra.mxu0 0.0
        %3086 = vmatprep.subr.mxu0 0.0
        %3087 = vmatpush2.msra.mxu0 0.0
        %3088 = vmatprep.subr.mxu0 0.0
        %3089 = vmatpush2.msra.mxu0 0.0
        %3090 = vmatprep.subr.mxu0 0.0
        %3091 = vmatpush2.msra.mxu0 0.0
        %3092 = vmatprep.subr.mxu0 0.0
        %3093 = vmatpush2.msra.mxu0 0.0
        %3094 = vmatprep.mubr.f32.mxu0 0.0
        %3095 = vmatmul.mubr.f32.gmra.mxu0 %v2932
        %v3096 = vpop.f32.mrf.mxu0
        %v3097 = vadd.f32 0.0, %v3096
        %v3098 = vpop.f32.mrf.mxu0
        %3099 = vmatprep.mubr.f32.mxu0 0.0
        %3100 = vmatmul.mubr.f32.gmra.mxu0 %v2935
        %v3101 = vpop.f32.mrf.mxu0
        %v3102 = vadd.f32 0.0, %v3101
        %v3103 = vpop.f32.mrf.mxu0
        %3104 = vmatprep.mubr.f32.mxu0 0.0
        %3105 = vmatmul.mubr.f32.gmra.mxu0 %v2938
        %v3106 = vpop.f32.mrf.mxu0
        %v3107 = vadd.f32 0.0, %v3106
        %v3108 = vpop.f32.mrf.mxu0
        %3109 = vmatprep.mubr.f32.mxu0 0.0
        %3110 = vmatmul.mubr.f32.gmra.mxu0 %v2941
        %v3111 = vpop.f32.mrf.mxu0
        %v3112 = vadd.f32 0.0, %v3111
        %v3113 = vpop.f32.mrf.mxu0
        %3114 = vmatprep.mubr.f32.mxu0 0.0
        %3115 = vmatmul.mubr.f32.gmra.mxu0 %v2944
        %v3116 = vpop.f32.mrf.mxu0
        %v3117 = vadd.f32 0.0, %v3116
        %v3118 = vpop.f32.mrf.mxu0
        %3119 = vmatprep.mubr.f32.mxu0 0.0
        %3120 = vmatmul.mubr.f32.gmra.mxu0 %v2947
        %v3121 = vpop.f32.mrf.mxu0
        %v3122 = vadd.f32 0.0, %v3121
        %v3123 = vpop.f32.mrf.mxu0
        %3124 = vmatprep.mubr.f32.mxu0 0.0
        %3125 = vmatmul.mubr.f32.gmra.mxu0 %v2950
        %v3126 = vpop.f32.mrf.mxu0
        %v3127 = vadd.f32 0.0, %v3126
        %v3128 = vpop.f32.mrf.mxu0
        %3129 = vmatprep.mubr.f32.mxu0 0.0
        %3130 = vmatmul.mubr.f32.gmra.mxu0 %v2953
        %v3131 = vpop.f32.mrf.mxu0
        %v3132 = vadd.f32 0.0, %v3131
        %v3133 = vpop.f32.mrf.mxu0
        %3134 = vmatprep.mubr.f32.mxu0 0.0
        %3135 = vmatmul.mubr.f32.gmra.mxu0 %v2956
        %v3136 = vpop.f32.mrf.mxu0
        %v3137 = vadd.f32 0.0, %v3136
        %v3138 = vpop.f32.mrf.mxu0
        %3139 = vmatprep.mubr.f32.mxu0 0.0
        %3140 = vmatmul.mubr.f32.gmra.mxu0 %v2959
        %v3141 = vpop.f32.mrf.mxu0
        %v3142 = vadd.f32 0.0, %v3141
        %v3143 = vpop.f32.mrf.mxu0
        %3144 = vmatprep.mubr.f32.mxu0 0.0
        %3145 = vmatmul.mubr.f32.gmra.mxu0 %v2962
        %v3146 = vpop.f32.mrf.mxu0
        %v3147 = vadd.f32 0.0, %v3146
        %v3148 = vpop.f32.mrf.mxu0
        %3149 = vmatprep.mubr.f32.mxu0 0.0
        %3150 = vmatmul.mubr.f32.gmra.mxu0 %v2965
        %v3151 = vpop.f32.mrf.mxu0
        %v3152 = vadd.f32 0.0, %v3151
        %v3153 = vpop.f32.mrf.mxu0
        %3154 = vmatprep.mubr.f32.mxu0 0.0
        %3155 = vmatmul.mubr.f32.gmra.mxu0 %v2968
        %v3156 = vpop.f32.mrf.mxu0
        %v3157 = vadd.f32 0.0, %v3156
        %v3158 = vpop.f32.mrf.mxu0
        %3159 = vmatprep.mubr.f32.mxu0 0.0
        %3160 = vmatmul.mubr.f32.gmra.mxu0 %v2971
        %v3161 = vpop.f32.mrf.mxu0
        %v3162 = vadd.f32 0.0, %v3161
        %v3163 = vpop.f32.mrf.mxu0
        %3164 = vmatprep.mubr.f32.mxu0 0.0
        %3165 = vmatmul.mubr.f32.gmra.mxu0 %v2974
        %v3166 = vpop.f32.mrf.mxu0
        %v3167 = vadd.f32 0.0, %v3166
        %v3168 = vpop.f32.mrf.mxu0
        %3169 = vmatprep.mubr.f32.mxu0 0.0
        %3170 = vmatmul.mubr.f32.gmra.mxu0 %v2977
        %v3171 = vpop.f32.mrf.mxu0
        %v3172 = vadd.f32 0.0, %v3171
        %v3173 = vpop.f32.mrf.mxu0
        %3174 = vmatprep.mubr.f32.mxu0 0.0
        %3175 = vmatmul.mubr.f32.gmra.mxu0 %v2980
        %v3176 = vpop.f32.mrf.mxu0
        %v3177 = vadd.f32 0.0, %v3176
        %v3178 = vpop.f32.mrf.mxu0
        %3179 = vmatprep.mubr.f32.mxu0 0.0
        %3180 = vmatmul.mubr.f32.gmra.mxu0 %v2983
        %v3181 = vpop.f32.mrf.mxu0
        %v3182 = vadd.f32 0.0, %v3181
        %v3183 = vpop.f32.mrf.mxu0
        %3184 = vmatprep.mubr.f32.mxu0 0.0
        %3185 = vmatmul.mubr.f32.gmra.mxu0 %v2986
        %v3186 = vpop.f32.mrf.mxu0
        %v3187 = vadd.f32 0.0, %v3186
        %v3188 = vpop.f32.mrf.mxu0
        %3189 = vmatprep.mubr.f32.mxu0 0.0
        %3190 = vmatmul.mubr.f32.gmra.mxu0 %v2989
        %v3191 = vpop.f32.mrf.mxu0
        %v3192 = vadd.f32 0.0, %v3191
        %v3193 = vpop.f32.mrf.mxu0
        %3194 = vmatprep.mubr.f32.mxu0 0.0
        %3195 = vmatmul.mubr.f32.gmra.mxu0 %v2992
        %v3196 = vpop.f32.mrf.mxu0
        %v3197 = vadd.f32 0.0, %v3196
        %v3198 = vpop.f32.mrf.mxu0
        %3199 = vmatprep.mubr.f32.mxu0 0.0
        %3200 = vmatmul.mubr.f32.gmra.mxu0 %v2995
        %v3201 = vpop.f32.mrf.mxu0
        %v3202 = vadd.f32 0.0, %v3201
        %v3203 = vpop.f32.mrf.mxu0
        %3204 = vmatprep.mubr.f32.mxu0 0.0
        %3205 = vmatmul.mubr.f32.gmra.mxu0 %v2998
        %v3206 = vpop.f32.mrf.mxu0
        %v3207 = vadd.f32 0.0, %v3206
        %v3208 = vpop.f32.mrf.mxu0
        %3209 = vmatprep.mubr.f32.mxu0 0.0
        %3210 = vmatmul.mubr.f32.gmra.mxu0 %v3001
        %v3211 = vpop.f32.mrf.mxu0
        %v3212 = vadd.f32 0.0, %v3211
        %v3213 = vpop.f32.mrf.mxu0
        %3214 = vmatprep.mubr.f32.mxu0 0.0
        %3215 = vmatmul.mubr.f32.gmra.mxu0 %v3004
        %v3216 = vpop.f32.mrf.mxu0
        %v3217 = vadd.f32 0.0, %v3216
        %v3218 = vpop.f32.mrf.mxu0
        %3219 = vmatprep.mubr.f32.mxu0 0.0
        %3220 = vmatmul.mubr.f32.gmra.mxu0 %v3007
        %v3221 = vpop.f32.mrf.mxu0
        %v3222 = vadd.f32 0.0, %v3221
        %v3223 = vpop.f32.mrf.mxu0
        %3224 = vmatprep.mubr.f32.mxu0 0.0
        %3225 = vmatmul.mubr.f32.gmra.mxu0 %v3010
        %v3226 = vpop.f32.mrf.mxu0
        %v3227 = vadd.f32 0.0, %v3226
        %v3228 = vpop.f32.mrf.mxu0
        %3229 = vmatprep.mubr.f32.mxu0 0.0
        %3230 = vmatmul.mubr.f32.gmra.mxu0 %v3013
        %v3231 = vpop.f32.mrf.mxu0
        %v3232 = vadd.f32 0.0, %v3231
        %v3233 = vpop.f32.mrf.mxu0
        %3234 = vmatprep.mubr.f32.mxu0 0.0
        %3235 = vmatmul.mubr.f32.gmra.mxu0 %v3016
        %v3236 = vpop.f32.mrf.mxu0
        %v3237 = vadd.f32 0.0, %v3236
        %v3238 = vpop.f32.mrf.mxu0
        %3239 = vmatprep.mubr.f32.mxu0 0.0
        %3240 = vmatmul.mubr.f32.gmra.mxu0 %v3019
        %v3241 = vpop.f32.mrf.mxu0
        %v3242 = vadd.f32 0.0, %v3241
        %v3243 = vpop.f32.mrf.mxu0
        %3244 = vmatprep.mubr.f32.mxu0 0.0
        %3245 = vmatmul.mubr.f32.gmra.mxu0 %v3022
        %v3246 = vpop.f32.mrf.mxu0
        %v3247 = vadd.f32 0.0, %v3246
        %v3248 = vpop.f32.mrf.mxu0
        %3249 = vmatprep.mubr.f32.mxu0 0.0
        %3250 = vmatmul.mubr.f32.gmra.mxu0 %v3025
        %v3251 = vpop.f32.mrf.mxu0
        %v3252 = vadd.f32 0.0, %v3251
        %v3253 = vpop.f32.mrf.mxu0
        %3254 = vdwg.mxu0
        %v3255 = vadd.f32 %v2864, %v3097
        %v3256 = vadd.f32 %v2865, %v3102
        %v3257 = vadd.f32 %v2866, %v3107
        %v3258 = vadd.f32 %v2867, %v3112
        %v3259 = vadd.f32 %v2868, %v3117
        %v3260 = vadd.f32 %v2869, %v3122
        %v3261 = vadd.f32 %v2870, %v3127
        %v3262 = vadd.f32 %v2871, %v3132
        %v3263 = vadd.f32 %v2872, %v3137
        %v3264 = vadd.f32 %v2873, %v3142
        %v3265 = vadd.f32 %v2874, %v3147
        %v3266 = vadd.f32 %v2875, %v3152
        %v3267 = vadd.f32 %v2876, %v3157
        %v3268 = vadd.f32 %v2877, %v3162
        %v3269 = vadd.f32 %v2878, %v3167
        %v3270 = vadd.f32 %v2879, %v3172
        %v3271 = vadd.f32 %v2880, %v3177
        %v3272 = vadd.f32 %v2881, %v3182
        %v3273 = vadd.f32 %v2882, %v3187
        %v3274 = vadd.f32 %v2883, %v3192
        %v3275 = vadd.f32 %v2884, %v3197
        %v3276 = vadd.f32 %v2885, %v3202
        %v3277 = vadd.f32 %v2886, %v3207
        %v3278 = vadd.f32 %v2887, %v3212
        %v3279 = vadd.f32 %v2888, %v3217
        %v3280 = vadd.f32 %v2889, %v3222
        %v3281 = vadd.f32 %v2890, %v3227
        %v3282 = vadd.f32 %v2891, %v3232
        %v3283 = vadd.f32 %v2892, %v3237
        %v3284 = vadd.f32 %v2893, %v3242
        %v3285 = vadd.f32 %v2894, %v3247
        %v3286 = vadd.f32 %v2895, %v3252
        %v3287 = vld [vmem:[%s2896 + $0x1] sm:$0xff]
        %v3288 = vld [vmem:[%s2896 + $0x9] sm:$0xff]
        %v3289 = vld [vmem:[%s2896 + $0x19] sm:$0xff]
        %v3290 = vld [vmem:[%s2896 + $0x21] sm:$0xff]
        %v3291 = vld [vmem:[%s2896 + $0x31] sm:$0xff]
        %v3292 = vld [vmem:[%s2896 + $0x39] sm:$0xff]
        %v3293 = vld [vmem:[%s2896 + $0x49] sm:$0xff]
        %v3294 = vld [vmem:[%s2896 + $0x51] sm:$0xff]
        %v3295 = vld [vmem:[%s2896 + $0x61] sm:$0xff]
        %v3296 = vld [vmem:[%s2896 + $0x69] sm:$0xff]
        %v3297 = vld [vmem:[%s2896 + $0x79] sm:$0xff]
        %v3298 = vld [vmem:[%s2896 + $0x81] sm:$0xff]
        %v3299 = vld [vmem:[%s2896 + $0x91] sm:$0xff]
        %v3300 = vld [vmem:[%s2896 + $0x99] sm:$0xff]
        %v3301 = vld [vmem:[%s2896 + $0xa9] sm:$0xff]
        %v3302 = vld [vmem:[%s2896 + $0xb1] sm:$0xff]
        %v3303 = vld [vmem:[%s2896 + $0xc1] sm:$0xff]
        %v3304 = vld [vmem:[%s2896 + $0xc9] sm:$0xff]
        %v3305 = vld [vmem:[%s2896 + $0xd9] sm:$0xff]
        %v3306 = vld [vmem:[%s2896 + $0xe1] sm:$0xff]
        %v3307 = vld [vmem:[%s2896 + $0xf1] sm:$0xff]
        %v3308 = vld [vmem:[%s2896 + $0xf9] sm:$0xff]
        %v3309 = vld [vmem:[%s2896 + $0x109] sm:$0xff]
        %v3310 = vld [vmem:[%s2896 + $0x111] sm:$0xff]
        %v3311 = vld [vmem:[%s2896 + $0x121] sm:$0xff]
        %v3312 = vld [vmem:[%s2896 + $0x129] sm:$0xff]
        %v3313 = vld [vmem:[%s2896 + $0x139] sm:$0xff]
        %v3314 = vld [vmem:[%s2896 + $0x141] sm:$0xff]
        %v3315 = vld [vmem:[%s2896 + $0x151] sm:$0xff]
        %v3316 = vld [vmem:[%s2896 + $0x159] sm:$0xff]
        %v3317 = vld [vmem:[%s2896 + $0x169] sm:$0xff]
        %v3318 = vld [vmem:[%s2896 + $0x171] sm:$0xff]
        %s3319 = scalar_lea.vmem %s3, 28
        %v3320 = vld [vmem:[%s3319] sm:$0xf]
        %v3322 = vsel %vm385, %v3287, 0
        %v3325 = vsel %vm385, %v3288, 0
        %v3328 = vsel %vm385, %v3289, 0
        %v3331 = vsel %vm385, %v3290, 0
        %v3334 = vsel %vm385, %v3291, 0
        %v3337 = vsel %vm385, %v3292, 0
        %v3340 = vsel %vm385, %v3293, 0
        %v3343 = vsel %vm385, %v3294, 0
        %v3346 = vsel %vm385, %v3295, 0
        %v3349 = vsel %vm385, %v3296, 0
        %v3352 = vsel %vm385, %v3297, 0
        %v3355 = vsel %vm385, %v3298, 0
        %v3358 = vsel %vm385, %v3299, 0
        %v3361 = vsel %vm385, %v3300, 0
        %v3364 = vsel %vm385, %v3301, 0
        %v3367 = vsel %vm385, %v3302, 0
        %v3370 = vsel %vm385, %v3303, 0
        %v3373 = vsel %vm385, %v3304, 0
        %v3376 = vsel %vm385, %v3305, 0
        %v3379 = vsel %vm385, %v3306, 0
        %v3382 = vsel %vm385, %v3307, 0
        %v3385 = vsel %vm385, %v3308, 0
        %v3388 = vsel %vm385, %v3309, 0
        %v3391 = vsel %vm385, %v3310, 0
        %v3394 = vsel %vm385, %v3311, 0
        %v3397 = vsel %vm385, %v3312, 0
        %v3400 = vsel %vm385, %v3313, 0
        %v3403 = vsel %vm385, %v3314, 0
        %v3406 = vsel %vm385, %v3315, 0
        %v3409 = vsel %vm385, %v3316, 0
        %v3412 = vsel %vm385, %v3317, 0
        %v3415 = vsel %vm385, %v3318, 0
        %v3418 = vsel %vm783, %v3320, 0
        %3420 = vmatprep.subr.mxu0 0.0
        %3421 = vmatpush1.msra.mxu0 0.0
        %3422 = vmatprep.subr.mxu0 0.0
        %3423 = vmatpush1.msra.mxu0 0.0
        %3424 = vmatprep.subr.mxu0 0.0
        %3425 = vmatpush1.msra.mxu0 0.0
        %3426 = vmatprep.subr.mxu0 0.0
        %3427 = vmatpush1.msra.mxu0 0.0
        %3428 = vmatprep.subr.mxu0 0.0
        %3429 = vmatpush1.msra.mxu0 0.0
        %3430 = vmatprep.subr.mxu0 0.0
        %3431 = vmatpush1.msra.mxu0 0.0
        %3432 = vmatprep.subr.mxu0 0.0
        %3433 = vmatpush1.msra.mxu0 0.0
        %3434 = vmatprep.subr.mxu0 0.0
        %3435 = vmatpush1.msra.mxu0 0.0
        %3436 = vmatprep.subr.mxu0 0.0
        %3437 = vmatpush1.msra.mxu0 0.0
        %3438 = vmatprep.subr.mxu0 0.0
        %3439 = vmatpush1.msra.mxu0 0.0
        %3440 = vmatprep.subr.mxu0 0.0
        %3441 = vmatpush1.msra.mxu0 0.0
        %3442 = vmatprep.subr.mxu0 0.0
        %3443 = vmatpush1.msra.mxu0 0.0
        %3444 = vmatprep.subr.mxu0 0.0
        %3445 = vmatpush1.msra.mxu0 0.0
        %3446 = vmatprep.subr.mxu0 0.0
        %3447 = vmatpush1.msra.mxu0 0.0
        %3448 = vmatprep.subr.mxu0 0.0
        %3449 = vmatpush1.msra.mxu0 0.0
        %3450 = vmatprep.subr.mxu0 0.0
        %3451 = vmatpush1.msra.mxu0 %v3418
        %3452 = vmatprep.subr.mxu0 0.0
        %3453 = vmatpush2.msra.mxu0 0.0
        %3454 = vmatprep.subr.mxu0 0.0
        %3455 = vmatpush2.msra.mxu0 0.0
        %3456 = vmatprep.subr.mxu0 0.0
        %3457 = vmatpush2.msra.mxu0 0.0
        %3458 = vmatprep.subr.mxu0 0.0
        %3459 = vmatpush2.msra.mxu0 0.0
        %3460 = vmatprep.subr.mxu0 0.0
        %3461 = vmatpush2.msra.mxu0 0.0
        %3462 = vmatprep.subr.mxu0 0.0
        %3463 = vmatpush2.msra.mxu0 0.0
        %3464 = vmatprep.subr.mxu0 0.0
        %3465 = vmatpush2.msra.mxu0 0.0
        %3466 = vmatprep.subr.mxu0 0.0
        %3467 = vmatpush2.msra.mxu0 0.0
        %3468 = vmatprep.subr.mxu0 0.0
        %3469 = vmatpush2.msra.mxu0 0.0
        %3470 = vmatprep.subr.mxu0 0.0
        %3471 = vmatpush2.msra.mxu0 0.0
        %3472 = vmatprep.subr.mxu0 0.0
        %3473 = vmatpush2.msra.mxu0 0.0
        %3474 = vmatprep.subr.mxu0 0.0
        %3475 = vmatpush2.msra.mxu0 0.0
        %3476 = vmatprep.subr.mxu0 0.0
        %3477 = vmatpush2.msra.mxu0 0.0
        %3478 = vmatprep.subr.mxu0 0.0
        %3479 = vmatpush2.msra.mxu0 0.0
        %3480 = vmatprep.subr.mxu0 0.0
        %3481 = vmatpush2.msra.mxu0 0.0
        %3482 = vmatprep.subr.mxu0 0.0
        %3483 = vmatpush2.msra.mxu0 0.0
        %3484 = vmatprep.mubr.f32.mxu0 0.0
        %3485 = vmatmul.mubr.f32.gmra.mxu0 %v3322
        %v3486 = vpop.f32.mrf.mxu0
        %v3487 = vadd.f32 0.0, %v3486
        %v3488 = vpop.f32.mrf.mxu0
        %3489 = vmatprep.mubr.f32.mxu0 0.0
        %3490 = vmatmul.mubr.f32.gmra.mxu0 %v3325
        %v3491 = vpop.f32.mrf.mxu0
        %v3492 = vadd.f32 0.0, %v3491
        %v3493 = vpop.f32.mrf.mxu0
        %3494 = vmatprep.mubr.f32.mxu0 0.0
        %3495 = vmatmul.mubr.f32.gmra.mxu0 %v3328
        %v3496 = vpop.f32.mrf.mxu0
        %v3497 = vadd.f32 0.0, %v3496
        %v3498 = vpop.f32.mrf.mxu0
        %3499 = vmatprep.mubr.f32.mxu0 0.0
        %3500 = vmatmul.mubr.f32.gmra.mxu0 %v3331
        %v3501 = vpop.f32.mrf.mxu0
        %v3502 = vadd.f32 0.0, %v3501
        %v3503 = vpop.f32.mrf.mxu0
        %3504 = vmatprep.mubr.f32.mxu0 0.0
        %3505 = vmatmul.mubr.f32.gmra.mxu0 %v3334
        %v3506 = vpop.f32.mrf.mxu0
        %v3507 = vadd.f32 0.0, %v3506
        %v3508 = vpop.f32.mrf.mxu0
        %3509 = vmatprep.mubr.f32.mxu0 0.0
        %3510 = vmatmul.mubr.f32.gmra.mxu0 %v3337
        %v3511 = vpop.f32.mrf.mxu0
        %v3512 = vadd.f32 0.0, %v3511
        %v3513 = vpop.f32.mrf.mxu0
        %3514 = vmatprep.mubr.f32.mxu0 0.0
        %3515 = vmatmul.mubr.f32.gmra.mxu0 %v3340
        %v3516 = vpop.f32.mrf.mxu0
        %v3517 = vadd.f32 0.0, %v3516
        %v3518 = vpop.f32.mrf.mxu0
        %3519 = vmatprep.mubr.f32.mxu0 0.0
        %3520 = vmatmul.mubr.f32.gmra.mxu0 %v3343
        %v3521 = vpop.f32.mrf.mxu0
        %v3522 = vadd.f32 0.0, %v3521
        %v3523 = vpop.f32.mrf.mxu0
        %3524 = vmatprep.mubr.f32.mxu0 0.0
        %3525 = vmatmul.mubr.f32.gmra.mxu0 %v3346
        %v3526 = vpop.f32.mrf.mxu0
        %v3527 = vadd.f32 0.0, %v3526
        %v3528 = vpop.f32.mrf.mxu0
        %3529 = vmatprep.mubr.f32.mxu0 0.0
        %3530 = vmatmul.mubr.f32.gmra.mxu0 %v3349
        %v3531 = vpop.f32.mrf.mxu0
        %v3532 = vadd.f32 0.0, %v3531
        %v3533 = vpop.f32.mrf.mxu0
        %3534 = vmatprep.mubr.f32.mxu0 0.0
        %3535 = vmatmul.mubr.f32.gmra.mxu0 %v3352
        %v3536 = vpop.f32.mrf.mxu0
        %v3537 = vadd.f32 0.0, %v3536
        %v3538 = vpop.f32.mrf.mxu0
        %3539 = vmatprep.mubr.f32.mxu0 0.0
        %3540 = vmatmul.mubr.f32.gmra.mxu0 %v3355
        %v3541 = vpop.f32.mrf.mxu0
        %v3542 = vadd.f32 0.0, %v3541
        %v3543 = vpop.f32.mrf.mxu0
        %3544 = vmatprep.mubr.f32.mxu0 0.0
        %3545 = vmatmul.mubr.f32.gmra.mxu0 %v3358
        %v3546 = vpop.f32.mrf.mxu0
        %v3547 = vadd.f32 0.0, %v3546
        %v3548 = vpop.f32.mrf.mxu0
        %3549 = vmatprep.mubr.f32.mxu0 0.0
        %3550 = vmatmul.mubr.f32.gmra.mxu0 %v3361
        %v3551 = vpop.f32.mrf.mxu0
        %v3552 = vadd.f32 0.0, %v3551
        %v3553 = vpop.f32.mrf.mxu0
        %3554 = vmatprep.mubr.f32.mxu0 0.0
        %3555 = vmatmul.mubr.f32.gmra.mxu0 %v3364
        %v3556 = vpop.f32.mrf.mxu0
        %v3557 = vadd.f32 0.0, %v3556
        %v3558 = vpop.f32.mrf.mxu0
        %3559 = vmatprep.mubr.f32.mxu0 0.0
        %3560 = vmatmul.mubr.f32.gmra.mxu0 %v3367
        %v3561 = vpop.f32.mrf.mxu0
        %v3562 = vadd.f32 0.0, %v3561
        %v3563 = vpop.f32.mrf.mxu0
        %3564 = vmatprep.mubr.f32.mxu0 0.0
        %3565 = vmatmul.mubr.f32.gmra.mxu0 %v3370
        %v3566 = vpop.f32.mrf.mxu0
        %v3567 = vadd.f32 0.0, %v3566
        %v3568 = vpop.f32.mrf.mxu0
        %3569 = vmatprep.mubr.f32.mxu0 0.0
        %3570 = vmatmul.mubr.f32.gmra.mxu0 %v3373
        %v3571 = vpop.f32.mrf.mxu0
        %v3572 = vadd.f32 0.0, %v3571
        %v3573 = vpop.f32.mrf.mxu0
        %3574 = vmatprep.mubr.f32.mxu0 0.0
        %3575 = vmatmul.mubr.f32.gmra.mxu0 %v3376
        %v3576 = vpop.f32.mrf.mxu0
        %v3577 = vadd.f32 0.0, %v3576
        %v3578 = vpop.f32.mrf.mxu0
        %3579 = vmatprep.mubr.f32.mxu0 0.0
        %3580 = vmatmul.mubr.f32.gmra.mxu0 %v3379
        %v3581 = vpop.f32.mrf.mxu0
        %v3582 = vadd.f32 0.0, %v3581
        %v3583 = vpop.f32.mrf.mxu0
        %3584 = vmatprep.mubr.f32.mxu0 0.0
        %3585 = vmatmul.mubr.f32.gmra.mxu0 %v3382
        %v3586 = vpop.f32.mrf.mxu0
        %v3587 = vadd.f32 0.0, %v3586
        %v3588 = vpop.f32.mrf.mxu0
        %3589 = vmatprep.mubr.f32.mxu0 0.0
        %3590 = vmatmul.mubr.f32.gmra.mxu0 %v3385
        %v3591 = vpop.f32.mrf.mxu0
        %v3592 = vadd.f32 0.0, %v3591
        %v3593 = vpop.f32.mrf.mxu0
        %3594 = vmatprep.mubr.f32.mxu0 0.0
        %3595 = vmatmul.mubr.f32.gmra.mxu0 %v3388
        %v3596 = vpop.f32.mrf.mxu0
        %v3597 = vadd.f32 0.0, %v3596
        %v3598 = vpop.f32.mrf.mxu0
        %3599 = vmatprep.mubr.f32.mxu0 0.0
        %3600 = vmatmul.mubr.f32.gmra.mxu0 %v3391
        %v3601 = vpop.f32.mrf.mxu0
        %v3602 = vadd.f32 0.0, %v3601
        %v3603 = vpop.f32.mrf.mxu0
        %3604 = vmatprep.mubr.f32.mxu0 0.0
        %3605 = vmatmul.mubr.f32.gmra.mxu0 %v3394
        %v3606 = vpop.f32.mrf.mxu0
        %v3607 = vadd.f32 0.0, %v3606
        %v3608 = vpop.f32.mrf.mxu0
        %3609 = vmatprep.mubr.f32.mxu0 0.0
        %3610 = vmatmul.mubr.f32.gmra.mxu0 %v3397
        %v3611 = vpop.f32.mrf.mxu0
        %v3612 = vadd.f32 0.0, %v3611
        %v3613 = vpop.f32.mrf.mxu0
        %3614 = vmatprep.mubr.f32.mxu0 0.0
        %3615 = vmatmul.mubr.f32.gmra.mxu0 %v3400
        %v3616 = vpop.f32.mrf.mxu0
        %v3617 = vadd.f32 0.0, %v3616
        %v3618 = vpop.f32.mrf.mxu0
        %3619 = vmatprep.mubr.f32.mxu0 0.0
        %3620 = vmatmul.mubr.f32.gmra.mxu0 %v3403
        %v3621 = vpop.f32.mrf.mxu0
        %v3622 = vadd.f32 0.0, %v3621
        %v3623 = vpop.f32.mrf.mxu0
        %3624 = vmatprep.mubr.f32.mxu0 0.0
        %3625 = vmatmul.mubr.f32.gmra.mxu0 %v3406
        %v3626 = vpop.f32.mrf.mxu0
        %v3627 = vadd.f32 0.0, %v3626
        %v3628 = vpop.f32.mrf.mxu0
        %3629 = vmatprep.mubr.f32.mxu0 0.0
        %3630 = vmatmul.mubr.f32.gmra.mxu0 %v3409
        %v3631 = vpop.f32.mrf.mxu0
        %v3632 = vadd.f32 0.0, %v3631
        %v3633 = vpop.f32.mrf.mxu0
        %3634 = vmatprep.mubr.f32.mxu0 0.0
        %3635 = vmatmul.mubr.f32.gmra.mxu0 %v3412
        %v3636 = vpop.f32.mrf.mxu0
        %v3637 = vadd.f32 0.0, %v3636
        %v3638 = vpop.f32.mrf.mxu0
        %3639 = vmatprep.mubr.f32.mxu0 0.0
        %3640 = vmatmul.mubr.f32.gmra.mxu0 %v3415
        %v3641 = vpop.f32.mrf.mxu0
        %v3642 = vadd.f32 0.0, %v3641
        %v3643 = vpop.f32.mrf.mxu0
        %3644 = vdwg.mxu0
        %v3645 = vadd.f32 %v3255, %v3487
        %v3646 = vadd.f32 %v3256, %v3492
        %v3647 = vadd.f32 %v3257, %v3497
        %v3648 = vadd.f32 %v3258, %v3502
        %v3649 = vadd.f32 %v3259, %v3507
        %v3650 = vadd.f32 %v3260, %v3512
        %v3651 = vadd.f32 %v3261, %v3517
        %v3652 = vadd.f32 %v3262, %v3522
        %v3653 = vadd.f32 %v3263, %v3527
        %v3654 = vadd.f32 %v3264, %v3532
        %v3655 = vadd.f32 %v3265, %v3537
        %v3656 = vadd.f32 %v3266, %v3542
        %v3657 = vadd.f32 %v3267, %v3547
        %v3658 = vadd.f32 %v3268, %v3552
        %v3659 = vadd.f32 %v3269, %v3557
        %v3660 = vadd.f32 %v3270, %v3562
        %v3661 = vadd.f32 %v3271, %v3567
        %v3662 = vadd.f32 %v3272, %v3572
        %v3663 = vadd.f32 %v3273, %v3577
        %v3664 = vadd.f32 %v3274, %v3582
        %v3665 = vadd.f32 %v3275, %v3587
        %v3666 = vadd.f32 %v3276, %v3592
        %v3667 = vadd.f32 %v3277, %v3597
        %v3668 = vadd.f32 %v3278, %v3602
        %v3669 = vadd.f32 %v3279, %v3607
        %v3670 = vadd.f32 %v3280, %v3612
        %v3671 = vadd.f32 %v3281, %v3617
        %v3672 = vadd.f32 %v3282, %v3622
        %v3673 = vadd.f32 %v3283, %v3627
        %v3674 = vadd.f32 %v3284, %v3632
        %v3675 = vadd.f32 %v3285, %v3637
        %v3676 = vadd.f32 %v3286, %v3642
        %v3677 = vld [vmem:[%s2896 + $0x2] sm:$0xff]
        %v3678 = vld [vmem:[%s2896 + $0xa] sm:$0xff]
        %v3679 = vld [vmem:[%s2896 + $0x1a] sm:$0xff]
        %v3680 = vld [vmem:[%s2896 + $0x22] sm:$0xff]
        %v3681 = vld [vmem:[%s2896 + $0x32] sm:$0xff]
        %v3682 = vld [vmem:[%s2896 + $0x3a] sm:$0xff]
        %v3683 = vld [vmem:[%s2896 + $0x4a] sm:$0xff]
        %v3684 = vld [vmem:[%s2896 + $0x52] sm:$0xff]
        %v3685 = vld [vmem:[%s2896 + $0x62] sm:$0xff]
        %v3686 = vld [vmem:[%s2896 + $0x6a] sm:$0xff]
        %v3687 = vld [vmem:[%s2896 + $0x7a] sm:$0xff]
        %v3688 = vld [vmem:[%s2896 + $0x82] sm:$0xff]
        %v3689 = vld [vmem:[%s2896 + $0x92] sm:$0xff]
        %v3690 = vld [vmem:[%s2896 + $0x9a] sm:$0xff]
        %v3691 = vld [vmem:[%s2896 + $0xaa] sm:$0xff]
        %v3692 = vld [vmem:[%s2896 + $0xb2] sm:$0xff]
        %v3693 = vld [vmem:[%s2896 + $0xc2] sm:$0xff]
        %v3694 = vld [vmem:[%s2896 + $0xca] sm:$0xff]
        %v3695 = vld [vmem:[%s2896 + $0xda] sm:$0xff]
        %v3696 = vld [vmem:[%s2896 + $0xe2] sm:$0xff]
        %v3697 = vld [vmem:[%s2896 + $0xf2] sm:$0xff]
        %v3698 = vld [vmem:[%s2896 + $0xfa] sm:$0xff]
        %v3699 = vld [vmem:[%s2896 + $0x10a] sm:$0xff]
        %v3700 = vld [vmem:[%s2896 + $0x112] sm:$0xff]
        %v3701 = vld [vmem:[%s2896 + $0x122] sm:$0xff]
        %v3702 = vld [vmem:[%s2896 + $0x12a] sm:$0xff]
        %v3703 = vld [vmem:[%s2896 + $0x13a] sm:$0xff]
        %v3704 = vld [vmem:[%s2896 + $0x142] sm:$0xff]
        %v3705 = vld [vmem:[%s2896 + $0x152] sm:$0xff]
        %v3706 = vld [vmem:[%s2896 + $0x15a] sm:$0xff]
        %v3707 = vld [vmem:[%s2896 + $0x16a] sm:$0xff]
        %v3708 = vld [vmem:[%s2896 + $0x172] sm:$0xff]
        %s3709 = scalar_lea.vmem %s3, 32
        %v3710 = vld [vmem:[%s3709] sm:$0xf]
        %v3712 = vsel %vm385, %v3677, 0
        %v3715 = vsel %vm385, %v3678, 0
        %v3718 = vsel %vm385, %v3679, 0
        %v3721 = vsel %vm385, %v3680, 0
        %v3724 = vsel %vm385, %v3681, 0
        %v3727 = vsel %vm385, %v3682, 0
        %v3730 = vsel %vm385, %v3683, 0
        %v3733 = vsel %vm385, %v3684, 0
        %v3736 = vsel %vm385, %v3685, 0
        %v3739 = vsel %vm385, %v3686, 0
        %v3742 = vsel %vm385, %v3687, 0
        %v3745 = vsel %vm385, %v3688, 0
        %v3748 = vsel %vm385, %v3689, 0
        %v3751 = vsel %vm385, %v3690, 0
        %v3754 = vsel %vm385, %v3691, 0
        %v3757 = vsel %vm385, %v3692, 0
        %v3760 = vsel %vm385, %v3693, 0
        %v3763 = vsel %vm385, %v3694, 0
        %v3766 = vsel %vm385, %v3695, 0
        %v3769 = vsel %vm385, %v3696, 0
        %v3772 = vsel %vm385, %v3697, 0
        %v3775 = vsel %vm385, %v3698, 0
        %v3778 = vsel %vm385, %v3699, 0
        %v3781 = vsel %vm385, %v3700, 0
        %v3784 = vsel %vm385, %v3701, 0
        %v3787 = vsel %vm385, %v3702, 0
        %v3790 = vsel %vm385, %v3703, 0
        %v3793 = vsel %vm385, %v3704, 0
        %v3796 = vsel %vm385, %v3705, 0
        %v3799 = vsel %vm385, %v3706, 0
        %v3802 = vsel %vm385, %v3707, 0
        %v3805 = vsel %vm385, %v3708, 0
        %v3808 = vsel %vm783, %v3710, 0
        %3810 = vmatprep.subr.mxu0 0.0
        %3811 = vmatpush1.msra.mxu0 0.0
        %3812 = vmatprep.subr.mxu0 0.0
        %3813 = vmatpush1.msra.mxu0 0.0
        %3814 = vmatprep.subr.mxu0 0.0
        %3815 = vmatpush1.msra.mxu0 0.0
        %3816 = vmatprep.subr.mxu0 0.0
        %3817 = vmatpush1.msra.mxu0 0.0
        %3818 = vmatprep.subr.mxu0 0.0
        %3819 = vmatpush1.msra.mxu0 0.0
        %3820 = vmatprep.subr.mxu0 0.0
        %3821 = vmatpush1.msra.mxu0 0.0
        %3822 = vmatprep.subr.mxu0 0.0
        %3823 = vmatpush1.msra.mxu0 0.0
        %3824 = vmatprep.subr.mxu0 0.0
        %3825 = vmatpush1.msra.mxu0 0.0
        %3826 = vmatprep.subr.mxu0 0.0
        %3827 = vmatpush1.msra.mxu0 0.0
        %3828 = vmatprep.subr.mxu0 0.0
        %3829 = vmatpush1.msra.mxu0 0.0
        %3830 = vmatprep.subr.mxu0 0.0
        %3831 = vmatpush1.msra.mxu0 0.0
        %3832 = vmatprep.subr.mxu0 0.0
        %3833 = vmatpush1.msra.mxu0 0.0
        %3834 = vmatprep.subr.mxu0 0.0
        %3835 = vmatpush1.msra.mxu0 0.0
        %3836 = vmatprep.subr.mxu0 0.0
        %3837 = vmatpush1.msra.mxu0 0.0
        %3838 = vmatprep.subr.mxu0 0.0
        %3839 = vmatpush1.msra.mxu0 0.0
        %3840 = vmatprep.subr.mxu0 0.0
        %3841 = vmatpush1.msra.mxu0 %v3808
        %3842 = vmatprep.subr.mxu0 0.0
        %3843 = vmatpush2.msra.mxu0 0.0
        %3844 = vmatprep.subr.mxu0 0.0
        %3845 = vmatpush2.msra.mxu0 0.0
        %3846 = vmatprep.subr.mxu0 0.0
        %3847 = vmatpush2.msra.mxu0 0.0
        %3848 = vmatprep.subr.mxu0 0.0
        %3849 = vmatpush2.msra.mxu0 0.0
        %3850 = vmatprep.subr.mxu0 0.0
        %3851 = vmatpush2.msra.mxu0 0.0
        %3852 = vmatprep.subr.mxu0 0.0
        %3853 = vmatpush2.msra.mxu0 0.0
        %3854 = vmatprep.subr.mxu0 0.0
        %3855 = vmatpush2.msra.mxu0 0.0
        %3856 = vmatprep.subr.mxu0 0.0
        %3857 = vmatpush2.msra.mxu0 0.0
        %3858 = vmatprep.subr.mxu0 0.0
        %3859 = vmatpush2.msra.mxu0 0.0
        %3860 = vmatprep.subr.mxu0 0.0
        %3861 = vmatpush2.msra.mxu0 0.0
        %3862 = vmatprep.subr.mxu0 0.0
        %3863 = vmatpush2.msra.mxu0 0.0
        %3864 = vmatprep.subr.mxu0 0.0
        %3865 = vmatpush2.msra.mxu0 0.0
        %3866 = vmatprep.subr.mxu0 0.0
        %3867 = vmatpush2.msra.mxu0 0.0
        %3868 = vmatprep.subr.mxu0 0.0
        %3869 = vmatpush2.msra.mxu0 0.0
        %3870 = vmatprep.subr.mxu0 0.0
        %3871 = vmatpush2.msra.mxu0 0.0
        %3872 = vmatprep.subr.mxu0 0.0
        %3873 = vmatpush2.msra.mxu0 0.0
        %3874 = vmatprep.mubr.f32.mxu0 0.0
        %3875 = vmatmul.mubr.f32.gmra.mxu0 %v3712
        %v3876 = vpop.f32.mrf.mxu0
        %v3877 = vadd.f32 0.0, %v3876
        %v3878 = vpop.f32.mrf.mxu0
        %3879 = vmatprep.mubr.f32.mxu0 0.0
        %3880 = vmatmul.mubr.f32.gmra.mxu0 %v3715
        %v3881 = vpop.f32.mrf.mxu0
        %v3882 = vadd.f32 0.0, %v3881
        %v3883 = vpop.f32.mrf.mxu0
        %3884 = vmatprep.mubr.f32.mxu0 0.0
        %3885 = vmatmul.mubr.f32.gmra.mxu0 %v3718
        %v3886 = vpop.f32.mrf.mxu0
        %v3887 = vadd.f32 0.0, %v3886
        %v3888 = vpop.f32.mrf.mxu0
        %3889 = vmatprep.mubr.f32.mxu0 0.0
        %3890 = vmatmul.mubr.f32.gmra.mxu0 %v3721
        %v3891 = vpop.f32.mrf.mxu0
        %v3892 = vadd.f32 0.0, %v3891
        %v3893 = vpop.f32.mrf.mxu0
        %3894 = vmatprep.mubr.f32.mxu0 0.0
        %3895 = vmatmul.mubr.f32.gmra.mxu0 %v3724
        %v3896 = vpop.f32.mrf.mxu0
        %v3897 = vadd.f32 0.0, %v3896
        %v3898 = vpop.f32.mrf.mxu0
        %3899 = vmatprep.mubr.f32.mxu0 0.0
        %3900 = vmatmul.mubr.f32.gmra.mxu0 %v3727
        %v3901 = vpop.f32.mrf.mxu0
        %v3902 = vadd.f32 0.0, %v3901
        %v3903 = vpop.f32.mrf.mxu0
        %3904 = vmatprep.mubr.f32.mxu0 0.0
        %3905 = vmatmul.mubr.f32.gmra.mxu0 %v3730
        %v3906 = vpop.f32.mrf.mxu0
        %v3907 = vadd.f32 0.0, %v3906
        %v3908 = vpop.f32.mrf.mxu0
        %3909 = vmatprep.mubr.f32.mxu0 0.0
        %3910 = vmatmul.mubr.f32.gmra.mxu0 %v3733
        %v3911 = vpop.f32.mrf.mxu0
        %v3912 = vadd.f32 0.0, %v3911
        %v3913 = vpop.f32.mrf.mxu0
        %3914 = vmatprep.mubr.f32.mxu0 0.0
        %3915 = vmatmul.mubr.f32.gmra.mxu0 %v3736
        %v3916 = vpop.f32.mrf.mxu0
        %v3917 = vadd.f32 0.0, %v3916
        %v3918 = vpop.f32.mrf.mxu0
        %3919 = vmatprep.mubr.f32.mxu0 0.0
        %3920 = vmatmul.mubr.f32.gmra.mxu0 %v3739
        %v3921 = vpop.f32.mrf.mxu0
        %v3922 = vadd.f32 0.0, %v3921
        %v3923 = vpop.f32.mrf.mxu0
        %3924 = vmatprep.mubr.f32.mxu0 0.0
        %3925 = vmatmul.mubr.f32.gmra.mxu0 %v3742
        %v3926 = vpop.f32.mrf.mxu0
        %v3927 = vadd.f32 0.0, %v3926
        %v3928 = vpop.f32.mrf.mxu0
        %3929 = vmatprep.mubr.f32.mxu0 0.0
        %3930 = vmatmul.mubr.f32.gmra.mxu0 %v3745
        %v3931 = vpop.f32.mrf.mxu0
        %v3932 = vadd.f32 0.0, %v3931
        %v3933 = vpop.f32.mrf.mxu0
        %3934 = vmatprep.mubr.f32.mxu0 0.0
        %3935 = vmatmul.mubr.f32.gmra.mxu0 %v3748
        %v3936 = vpop.f32.mrf.mxu0
        %v3937 = vadd.f32 0.0, %v3936
        %v3938 = vpop.f32.mrf.mxu0
        %3939 = vmatprep.mubr.f32.mxu0 0.0
        %3940 = vmatmul.mubr.f32.gmra.mxu0 %v3751
        %v3941 = vpop.f32.mrf.mxu0
        %v3942 = vadd.f32 0.0, %v3941
        %v3943 = vpop.f32.mrf.mxu0
        %3944 = vmatprep.mubr.f32.mxu0 0.0
        %3945 = vmatmul.mubr.f32.gmra.mxu0 %v3754
        %v3946 = vpop.f32.mrf.mxu0
        %v3947 = vadd.f32 0.0, %v3946
        %v3948 = vpop.f32.mrf.mxu0
        %3949 = vmatprep.mubr.f32.mxu0 0.0
        %3950 = vmatmul.mubr.f32.gmra.mxu0 %v3757
        %v3951 = vpop.f32.mrf.mxu0
        %v3952 = vadd.f32 0.0, %v3951
        %v3953 = vpop.f32.mrf.mxu0
        %3954 = vmatprep.mubr.f32.mxu0 0.0
        %3955 = vmatmul.mubr.f32.gmra.mxu0 %v3760
        %v3956 = vpop.f32.mrf.mxu0
        %v3957 = vadd.f32 0.0, %v3956
        %v3958 = vpop.f32.mrf.mxu0
        %3959 = vmatprep.mubr.f32.mxu0 0.0
        %3960 = vmatmul.mubr.f32.gmra.mxu0 %v3763
        %v3961 = vpop.f32.mrf.mxu0
        %v3962 = vadd.f32 0.0, %v3961
        %v3963 = vpop.f32.mrf.mxu0
        %3964 = vmatprep.mubr.f32.mxu0 0.0
        %3965 = vmatmul.mubr.f32.gmra.mxu0 %v3766
        %v3966 = vpop.f32.mrf.mxu0
        %v3967 = vadd.f32 0.0, %v3966
        %v3968 = vpop.f32.mrf.mxu0
        %3969 = vmatprep.mubr.f32.mxu0 0.0
        %3970 = vmatmul.mubr.f32.gmra.mxu0 %v3769
        %v3971 = vpop.f32.mrf.mxu0
        %v3972 = vadd.f32 0.0, %v3971
        %v3973 = vpop.f32.mrf.mxu0
        %3974 = vmatprep.mubr.f32.mxu0 0.0
        %3975 = vmatmul.mubr.f32.gmra.mxu0 %v3772
        %v3976 = vpop.f32.mrf.mxu0
        %v3977 = vadd.f32 0.0, %v3976
        %v3978 = vpop.f32.mrf.mxu0
        %3979 = vmatprep.mubr.f32.mxu0 0.0
        %3980 = vmatmul.mubr.f32.gmra.mxu0 %v3775
        %v3981 = vpop.f32.mrf.mxu0
        %v3982 = vadd.f32 0.0, %v3981
        %v3983 = vpop.f32.mrf.mxu0
        %3984 = vmatprep.mubr.f32.mxu0 0.0
        %3985 = vmatmul.mubr.f32.gmra.mxu0 %v3778
        %v3986 = vpop.f32.mrf.mxu0
        %v3987 = vadd.f32 0.0, %v3986
        %v3988 = vpop.f32.mrf.mxu0
        %3989 = vmatprep.mubr.f32.mxu0 0.0
        %3990 = vmatmul.mubr.f32.gmra.mxu0 %v3781
        %v3991 = vpop.f32.mrf.mxu0
        %v3992 = vadd.f32 0.0, %v3991
        %v3993 = vpop.f32.mrf.mxu0
        %3994 = vmatprep.mubr.f32.mxu0 0.0
        %3995 = vmatmul.mubr.f32.gmra.mxu0 %v3784
        %v3996 = vpop.f32.mrf.mxu0
        %v3997 = vadd.f32 0.0, %v3996
        %v3998 = vpop.f32.mrf.mxu0
        %3999 = vmatprep.mubr.f32.mxu0 0.0
        %4000 = vmatmul.mubr.f32.gmra.mxu0 %v3787
        %v4001 = vpop.f32.mrf.mxu0
        %v4002 = vadd.f32 0.0, %v4001
        %v4003 = vpop.f32.mrf.mxu0
        %4004 = vmatprep.mubr.f32.mxu0 0.0
        %4005 = vmatmul.mubr.f32.gmra.mxu0 %v3790
        %v4006 = vpop.f32.mrf.mxu0
        %v4007 = vadd.f32 0.0, %v4006
        %v4008 = vpop.f32.mrf.mxu0
        %4009 = vmatprep.mubr.f32.mxu0 0.0
        %4010 = vmatmul.mubr.f32.gmra.mxu0 %v3793
        %v4011 = vpop.f32.mrf.mxu0
        %v4012 = vadd.f32 0.0, %v4011
        %v4013 = vpop.f32.mrf.mxu0
        %4014 = vmatprep.mubr.f32.mxu0 0.0
        %4015 = vmatmul.mubr.f32.gmra.mxu0 %v3796
        %v4016 = vpop.f32.mrf.mxu0
        %v4017 = vadd.f32 0.0, %v4016
        %v4018 = vpop.f32.mrf.mxu0
        %4019 = vmatprep.mubr.f32.mxu0 0.0
        %4020 = vmatmul.mubr.f32.gmra.mxu0 %v3799
        %v4021 = vpop.f32.mrf.mxu0
        %v4022 = vadd.f32 0.0, %v4021
        %v4023 = vpop.f32.mrf.mxu0
        %4024 = vmatprep.mubr.f32.mxu0 0.0
        %4025 = vmatmul.mubr.f32.gmra.mxu0 %v3802
        %v4026 = vpop.f32.mrf.mxu0
        %v4027 = vadd.f32 0.0, %v4026
        %v4028 = vpop.f32.mrf.mxu0
        %4029 = vmatprep.mubr.f32.mxu0 0.0
        %4030 = vmatmul.mubr.f32.gmra.mxu0 %v3805
        %v4031 = vpop.f32.mrf.mxu0
        %v4032 = vadd.f32 0.0, %v4031
        %v4033 = vpop.f32.mrf.mxu0
        %4034 = vdwg.mxu0
        %v4035 = vadd.f32 %v3645, %v3877
        %v4036 = vadd.f32 %v3646, %v3882
        %v4037 = vadd.f32 %v3647, %v3887
        %v4038 = vadd.f32 %v3648, %v3892
        %v4039 = vadd.f32 %v3649, %v3897
        %v4040 = vadd.f32 %v3650, %v3902
        %v4041 = vadd.f32 %v3651, %v3907
        %v4042 = vadd.f32 %v3652, %v3912
        %v4043 = vadd.f32 %v3653, %v3917
        %v4044 = vadd.f32 %v3654, %v3922
        %v4045 = vadd.f32 %v3655, %v3927
        %v4046 = vadd.f32 %v3656, %v3932
        %v4047 = vadd.f32 %v3657, %v3937
        %v4048 = vadd.f32 %v3658, %v3942
        %v4049 = vadd.f32 %v3659, %v3947
        %v4050 = vadd.f32 %v3660, %v3952
        %v4051 = vadd.f32 %v3661, %v3957
        %v4052 = vadd.f32 %v3662, %v3962
        %v4053 = vadd.f32 %v3663, %v3967
        %v4054 = vadd.f32 %v3664, %v3972
        %v4055 = vadd.f32 %v3665, %v3977
        %v4056 = vadd.f32 %v3666, %v3982
        %v4057 = vadd.f32 %v3667, %v3987
        %v4058 = vadd.f32 %v3668, %v3992
        %v4059 = vadd.f32 %v3669, %v3997
        %v4060 = vadd.f32 %v3670, %v4002
        %v4061 = vadd.f32 %v3671, %v4007
        %v4062 = vadd.f32 %v3672, %v4012
        %v4063 = vadd.f32 %v3673, %v4017
        %v4064 = vadd.f32 %v3674, %v4022
        %v4065 = vadd.f32 %v3675, %v4027
        %v4066 = vadd.f32 %v3676, %v4032
        %vm4067 = vcmp.gt.f32.partialorder %v4035, 0.0
        %vm4068 = vcmp.gt.f32.partialorder %v4036, 0.0
        %vm4069 = vcmp.gt.f32.partialorder %v4037, 0.0
        %vm4070 = vcmp.gt.f32.partialorder %v4038, 0.0
        %vm4071 = vcmp.gt.f32.partialorder %v4039, 0.0
        %vm4072 = vcmp.gt.f32.partialorder %v4040, 0.0
        %vm4073 = vcmp.gt.f32.partialorder %v4041, 0.0
        %vm4074 = vcmp.gt.f32.partialorder %v4042, 0.0
        %vm4075 = vcmp.gt.f32.partialorder %v4043, 0.0
        %vm4076 = vcmp.gt.f32.partialorder %v4044, 0.0
        %vm4077 = vcmp.gt.f32.partialorder %v4045, 0.0
        %vm4078 = vcmp.gt.f32.partialorder %v4046, 0.0
        %vm4079 = vcmp.gt.f32.partialorder %v4047, 0.0
        %vm4080 = vcmp.gt.f32.partialorder %v4048, 0.0
        %vm4081 = vcmp.gt.f32.partialorder %v4049, 0.0
        %vm4082 = vcmp.gt.f32.partialorder %v4050, 0.0
        %vm4083 = vcmp.gt.f32.partialorder %v4051, 0.0
        %vm4084 = vcmp.gt.f32.partialorder %v4052, 0.0
        %vm4085 = vcmp.gt.f32.partialorder %v4053, 0.0
        %vm4086 = vcmp.gt.f32.partialorder %v4054, 0.0
        %vm4087 = vcmp.gt.f32.partialorder %v4055, 0.0
        %vm4088 = vcmp.gt.f32.partialorder %v4056, 0.0
        %vm4089 = vcmp.gt.f32.partialorder %v4057, 0.0
        %vm4090 = vcmp.gt.f32.partialorder %v4058, 0.0
        %vm4091 = vcmp.gt.f32.partialorder %v4059, 0.0
        %vm4092 = vcmp.gt.f32.partialorder %v4060, 0.0
        %vm4093 = vcmp.gt.f32.partialorder %v4061, 0.0
        %vm4094 = vcmp.gt.f32.partialorder %v4062, 0.0
        %vm4095 = vcmp.gt.f32.partialorder %v4063, 0.0
        %vm4096 = vcmp.gt.f32.partialorder %v4064, 0.0
        %vm4097 = vcmp.gt.f32.partialorder %v4065, 0.0
        %vm4098 = vcmp.gt.f32.partialorder %v4066, 0.0
        %v4099 = vld [vmem:[%s4] sm:$0x1]
        %v4101 = vlaneseq
        %v4102 = vshrl.u32 %v4101, 7
        %v4103 = vsub.s32 0, %v4102
        %v4104 = vrot.slane %v4099, %v4103
        %v4106 = vmul.f32 %v4035, %v4104
        %v4107 = vmul.f32 %v4036, %v4104
        %v4108 = vmul.f32 %v4037, %v4104
        %v4109 = vmul.f32 %v4038, %v4104
        %v4110 = vmul.f32 %v4039, %v4104
        %v4111 = vmul.f32 %v4040, %v4104
        %v4112 = vmul.f32 %v4041, %v4104
        %v4113 = vmul.f32 %v4042, %v4104
        %v4114 = vmul.f32 %v4043, %v4104
        %v4115 = vmul.f32 %v4044, %v4104
        %v4116 = vmul.f32 %v4045, %v4104
        %v4117 = vmul.f32 %v4046, %v4104
        %v4118 = vmul.f32 %v4047, %v4104
        %v4119 = vmul.f32 %v4048, %v4104
        %v4120 = vmul.f32 %v4049, %v4104
        %v4121 = vmul.f32 %v4050, %v4104
        %v4122 = vmul.f32 %v4051, %v4104
        %v4123 = vmul.f32 %v4052, %v4104
        %v4124 = vmul.f32 %v4053, %v4104
        %v4125 = vmul.f32 %v4054, %v4104
        %v4126 = vmul.f32 %v4055, %v4104
        %v4127 = vmul.f32 %v4056, %v4104
        %v4128 = vmul.f32 %v4057, %v4104
        %v4129 = vmul.f32 %v4058, %v4104
        %v4130 = vmul.f32 %v4059, %v4104
        %v4131 = vmul.f32 %v4060, %v4104
        %v4132 = vmul.f32 %v4061, %v4104
        %v4133 = vmul.f32 %v4062, %v4104
        %v4134 = vmul.f32 %v4063, %v4104
        %v4135 = vmul.f32 %v4064, %v4104
        %v4136 = vmul.f32 %v4065, %v4104
        %v4137 = vmul.f32 %v4066, %v4104
        %v4138 = vsel %vm4067, %v4035, %v4106
        %v4139 = vsel %vm4068, %v4036, %v4107
        %v4140 = vsel %vm4069, %v4037, %v4108
        %v4141 = vsel %vm4070, %v4038, %v4109
        %v4142 = vsel %vm4071, %v4039, %v4110
        %v4143 = vsel %vm4072, %v4040, %v4111
        %v4144 = vsel %vm4073, %v4041, %v4112
        %v4145 = vsel %vm4074, %v4042, %v4113
        %v4146 = vsel %vm4075, %v4043, %v4114
        %v4147 = vsel %vm4076, %v4044, %v4115
        %v4148 = vsel %vm4077, %v4045, %v4116
        %v4149 = vsel %vm4078, %v4046, %v4117
        %v4150 = vsel %vm4079, %v4047, %v4118
        %v4151 = vsel %vm4080, %v4048, %v4119
        %v4152 = vsel %vm4081, %v4049, %v4120
        %v4153 = vsel %vm4082, %v4050, %v4121
        %v4154 = vsel %vm4083, %v4051, %v4122
        %v4155 = vsel %vm4084, %v4052, %v4123
        %v4156 = vsel %vm4085, %v4053, %v4124
        %v4157 = vsel %vm4086, %v4054, %v4125
        %v4158 = vsel %vm4087, %v4055, %v4126
        %v4159 = vsel %vm4088, %v4056, %v4127
        %v4160 = vsel %vm4089, %v4057, %v4128
        %v4161 = vsel %vm4090, %v4058, %v4129
        %v4162 = vsel %vm4091, %v4059, %v4130
        %v4163 = vsel %vm4092, %v4060, %v4131
        %v4164 = vsel %vm4093, %v4061, %v4132
        %v4165 = vsel %vm4094, %v4062, %v4133
        %v4166 = vsel %vm4095, %v4063, %v4134
        %v4167 = vsel %vm4096, %v4064, %v4135
        %v4168 = vsel %vm4097, %v4065, %v4136
        %v4169 = vsel %vm4098, %v4066, %v4137
        %s4170 = scalar_lea.vmem [#allocation3], 24
        %4171 = vst.msk [vmem:[%s4170 + $0x1] sm:$0xff] %vm431, %v4138
        %4172 = vst.msk [vmem:[%s4170 + $0x9] sm:$0xff] %vm431, %v4139
        %4173 = vst.msk [vmem:[%s4170 + $0x19] sm:$0xff] %vm431, %v4140
        %4174 = vst.msk [vmem:[%s4170 + $0x21] sm:$0xff] %vm431, %v4141
        %4175 = vst.msk [vmem:[%s4170 + $0x31] sm:$0xff] %vm431, %v4142
        %4176 = vst.msk [vmem:[%s4170 + $0x39] sm:$0xff] %vm431, %v4143
        %4177 = vst.msk [vmem:[%s4170 + $0x49] sm:$0xff] %vm431, %v4144
        %4178 = vst.msk [vmem:[%s4170 + $0x51] sm:$0xff] %vm431, %v4145
        %4179 = vst.msk [vmem:[%s4170 + $0x61] sm:$0xff] %vm431, %v4146
        %4180 = vst.msk [vmem:[%s4170 + $0x69] sm:$0xff] %vm431, %v4147
        %4181 = vst.msk [vmem:[%s4170 + $0x79] sm:$0xff] %vm431, %v4148
        %4182 = vst.msk [vmem:[%s4170 + $0x81] sm:$0xff] %vm431, %v4149
        %4183 = vst.msk [vmem:[%s4170 + $0x91] sm:$0xff] %vm431, %v4150
        %4184 = vst.msk [vmem:[%s4170 + $0x99] sm:$0xff] %vm431, %v4151
        %4185 = vst.msk [vmem:[%s4170 + $0xa9] sm:$0xff] %vm431, %v4152
        %4186 = vst.msk [vmem:[%s4170 + $0xb1] sm:$0xff] %vm431, %v4153
        %4187 = vst.msk [vmem:[%s4170 + $0xc1] sm:$0xff] %vm431, %v4154
        %4188 = vst.msk [vmem:[%s4170 + $0xc9] sm:$0xff] %vm431, %v4155
        %4189 = vst.msk [vmem:[%s4170 + $0xd9] sm:$0xff] %vm431, %v4156
        %4190 = vst.msk [vmem:[%s4170 + $0xe1] sm:$0xff] %vm431, %v4157
        %4191 = vst.msk [vmem:[%s4170 + $0xf1] sm:$0xff] %vm431, %v4158
        %4192 = vst.msk [vmem:[%s4170 + $0xf9] sm:$0xff] %vm431, %v4159
        %4193 = vst.msk [vmem:[%s4170 + $0x109] sm:$0xff] %vm431, %v4160
        %4194 = vst.msk [vmem:[%s4170 + $0x111] sm:$0xff] %vm431, %v4161
        %4195 = vst.msk [vmem:[%s4170 + $0x121] sm:$0xff] %vm431, %v4162
        %4196 = vst.msk [vmem:[%s4170 + $0x129] sm:$0xff] %vm431, %v4163
        %4197 = vst.msk [vmem:[%s4170 + $0x139] sm:$0xff] %vm431, %v4164
        %4198 = vst.msk [vmem:[%s4170 + $0x141] sm:$0xff] %vm431, %v4165
        %4199 = vst.msk [vmem:[%s4170 + $0x151] sm:$0xff] %vm431, %v4166
        %4200 = vst.msk [vmem:[%s4170 + $0x159] sm:$0xff] %vm431, %v4167
        %4201 = vst.msk [vmem:[%s4170 + $0x169] sm:$0xff] %vm431, %v4168
        %4202 = vst.msk [vmem:[%s4170 + $0x171] sm:$0xff] %vm431, %v4169
        %v4203 = vld [vmem:[#allocation3] ss:$2 sm:$0xff]
        %s4204 = scalar_lea.vmem [#allocation3], 48
        %v4205 = vld [vmem:[%s4204] ss:$2 sm:$0xff]
        %s4206 = scalar_lea.vmem [#allocation3], 96
        %v4207 = vld [vmem:[%s4206] ss:$2 sm:$0xff]
        %s4208 = scalar_lea.vmem [#allocation3], 144
        %v4209 = vld [vmem:[%s4208] ss:$2 sm:$0xff]
        %s4210 = scalar_lea.vmem [#allocation3], 192
        %v4211 = vld [vmem:[%s4210] ss:$2 sm:$0xff]
        %s4212 = scalar_lea.vmem [#allocation3], 240
        %v4213 = vld [vmem:[%s4212] ss:$2 sm:$0xff]
        %s4214 = scalar_lea.vmem [#allocation3], 288
        %v4215 = vld [vmem:[%s4214] ss:$2 sm:$0xff]
        %s4216 = scalar_lea.vmem [#allocation3], 336
        %v4217 = vld [vmem:[%s4216] ss:$2 sm:$0xff]
        %v4218 = vld [vmem:[%s5] sm:$0xff]
        %s4219 = scalar_lea.vmem [#allocation3], 1
        %v4220 = vld [vmem:[%s4219] ss:$2 sm:$0xff]
        %s4221 = scalar_lea.vmem [#allocation3], 49
        %v4222 = vld [vmem:[%s4221] ss:$2 sm:$0xff]
        %s4223 = scalar_lea.vmem [#allocation3], 97
        %v4224 = vld [vmem:[%s4223] ss:$2 sm:$0xff]
        %s4225 = scalar_lea.vmem [#allocation3], 145
        %v4226 = vld [vmem:[%s4225] ss:$2 sm:$0xff]
        %s4227 = scalar_lea.vmem [#allocation3], 193
        %v4228 = vld [vmem:[%s4227] ss:$2 sm:$0xff]
        %s4229 = scalar_lea.vmem [#allocation3], 241
        %v4230 = vld [vmem:[%s4229] ss:$2 sm:$0xff]
        %s4231 = scalar_lea.vmem [#allocation3], 289
        %v4232 = vld [vmem:[%s4231] ss:$2 sm:$0xff]
        %s4233 = scalar_lea.vmem [#allocation3], 337
        %v4234 = vld [vmem:[%s4233] ss:$2 sm:$0xff]
        %s4235 = scalar_lea.vmem %s5, 8
        %v4236 = vld [vmem:[%s4235] sm:$0xff]
        %v4238 = vsel %vm431, %v4220, 0
        %v4241 = vsel %vm431, %v4222, 0
        %v4244 = vsel %vm431, %v4224, 0
        %v4247 = vsel %vm431, %v4226, 0
        %v4250 = vsel %vm431, %v4228, 0
        %v4253 = vsel %vm431, %v4230, 0
        %v4256 = vsel %vm431, %v4232, 0
        %v4259 = vsel %vm431, %v4234, 0
        %4261 = vmatprep.subr.mxu0 0.0
        %4262 = vmatpush1.msra.mxu0 0.0
        %4263 = vmatprep.subr.mxu0 0.0
        %4264 = vmatpush1.msra.mxu0 0.0
        %4265 = vmatprep.subr.mxu0 0.0
        %4266 = vmatpush1.msra.mxu0 0.0
        %4267 = vmatprep.subr.mxu0 0.0
        %4268 = vmatpush1.msra.mxu0 0.0
        %4269 = vmatprep.subr.mxu0 0.0
        %4270 = vmatpush1.msra.mxu0 0.0
        %4271 = vmatprep.subr.mxu0 0.0
        %4272 = vmatpush1.msra.mxu0 0.0
        %4273 = vmatprep.subr.mxu0 0.0
        %4274 = vmatpush1.msra.mxu0 0.0
        %4275 = vmatprep.subr.mxu0 0.0
        %4276 = vmatpush1.msra.mxu0 0.0
        %4277 = vmatprep.subr.mxu0 0.0
        %4278 = vmatpush1.msra.mxu0 0.0
        %4279 = vmatprep.subr.mxu0 0.0
        %4280 = vmatpush1.msra.mxu0 0.0
        %4281 = vmatprep.subr.mxu0 0.0
        %4282 = vmatpush1.msra.mxu0 0.0
        %4283 = vmatprep.subr.mxu0 0.0
        %4284 = vmatpush1.msra.mxu0 0.0
        %4285 = vmatprep.subr.mxu0 0.0
        %4286 = vmatpush1.msra.mxu0 0.0
        %4287 = vmatprep.subr.mxu0 0.0
        %4288 = vmatpush1.msra.mxu0 0.0
        %4289 = vmatprep.subr.mxu0 0.0
        %4290 = vmatpush1.msra.mxu0 0.0
        %4291 = vmatprep.subr.mxu0 0.0
        %4292 = vmatpush1.msra.mxu0 %v4236
        %4293 = vmatprep.subr.mxu0 0.0
        %4294 = vmatpush2.msra.mxu0 0.0
        %4295 = vmatprep.subr.mxu0 0.0
        %4296 = vmatpush2.msra.mxu0 0.0
        %4297 = vmatprep.subr.mxu0 0.0
        %4298 = vmatpush2.msra.mxu0 0.0
        %4299 = vmatprep.subr.mxu0 0.0
        %4300 = vmatpush2.msra.mxu0 0.0
        %4301 = vmatprep.subr.mxu0 0.0
        %4302 = vmatpush2.msra.mxu0 0.0
        %4303 = vmatprep.subr.mxu0 0.0
        %4304 = vmatpush2.msra.mxu0 0.0
        %4305 = vmatprep.subr.mxu0 0.0
        %4306 = vmatpush2.msra.mxu0 0.0
        %4307 = vmatprep.subr.mxu0 0.0
        %4308 = vmatpush2.msra.mxu0 0.0
        %4309 = vmatprep.subr.mxu0 0.0
        %4310 = vmatpush2.msra.mxu0 0.0
        %4311 = vmatprep.subr.mxu0 0.0
        %4312 = vmatpush2.msra.mxu0 0.0
        %4313 = vmatprep.subr.mxu0 0.0
        %4314 = vmatpush2.msra.mxu0 0.0
        %4315 = vmatprep.subr.mxu0 0.0
        %4316 = vmatpush2.msra.mxu0 0.0
        %4317 = vmatprep.subr.mxu0 0.0
        %4318 = vmatpush2.msra.mxu0 0.0
        %4319 = vmatprep.subr.mxu0 0.0
        %4320 = vmatpush2.msra.mxu0 0.0
        %4321 = vmatprep.subr.mxu0 0.0
        %4322 = vmatpush2.msra.mxu0 0.0
        %4323 = vmatprep.subr.mxu0 0.0
        %4324 = vmatpush2.msra.mxu0 0.0
        %4325 = vmatprep.mubr.f32.mxu0 0.0
        %4326 = vmatmul.mubr.f32.gmra.mxu0 %v4238
        %v4327 = vpop.f32.mrf.mxu0
        %v4328 = vadd.f32 0.0, %v4327
        %v4329 = vpop.f32.mrf.mxu0
        %4330 = vmatprep.mubr.f32.mxu0 0.0
        %4331 = vmatmul.mubr.f32.gmra.mxu0 %v4241
        %v4332 = vpop.f32.mrf.mxu0
        %v4333 = vadd.f32 0.0, %v4332
        %v4334 = vpop.f32.mrf.mxu0
        %4335 = vmatprep.mubr.f32.mxu0 0.0
        %4336 = vmatmul.mubr.f32.gmra.mxu0 %v4244
        %v4337 = vpop.f32.mrf.mxu0
        %v4338 = vadd.f32 0.0, %v4337
        %v4339 = vpop.f32.mrf.mxu0
        %4340 = vmatprep.mubr.f32.mxu0 0.0
        %4341 = vmatmul.mubr.f32.gmra.mxu0 %v4247
        %v4342 = vpop.f32.mrf.mxu0
        %v4343 = vadd.f32 0.0, %v4342
        %v4344 = vpop.f32.mrf.mxu0
        %4345 = vmatprep.mubr.f32.mxu0 0.0
        %4346 = vmatmul.mubr.f32.gmra.mxu0 %v4250
        %v4347 = vpop.f32.mrf.mxu0
        %v4348 = vadd.f32 0.0, %v4347
        %v4349 = vpop.f32.mrf.mxu0
        %4350 = vmatprep.mubr.f32.mxu0 0.0
        %4351 = vmatmul.mubr.f32.gmra.mxu0 %v4253
        %v4352 = vpop.f32.mrf.mxu0
        %v4353 = vadd.f32 0.0, %v4352
        %v4354 = vpop.f32.mrf.mxu0
        %4355 = vmatprep.mubr.f32.mxu0 0.0
        %4356 = vmatmul.mubr.f32.gmra.mxu0 %v4256
        %v4357 = vpop.f32.mrf.mxu0
        %v4358 = vadd.f32 0.0, %v4357
        %v4359 = vpop.f32.mrf.mxu0
        %4360 = vmatprep.mubr.f32.mxu0 0.0
        %4361 = vmatmul.mubr.f32.gmra.mxu0 %v4259
        %v4362 = vpop.f32.mrf.mxu0
        %v4363 = vadd.f32 0.0, %v4362
        %v4364 = vpop.f32.mrf.mxu0
        %4365 = vdwg.mxu0
        %v4367 = vsel %vm431, %v4203, 0
        %v4370 = vsel %vm431, %v4205, 0
        %v4373 = vsel %vm431, %v4207, 0
        %v4376 = vsel %vm431, %v4209, 0
        %v4379 = vsel %vm431, %v4211, 0
        %v4382 = vsel %vm431, %v4213, 0
        %v4385 = vsel %vm431, %v4215, 0
        %v4388 = vsel %vm431, %v4217, 0
        %4390 = vmatprep.subr.mxu0 0.0
        %4391 = vmatpush1.msra.mxu0 0.0
        %4392 = vmatprep.subr.mxu0 0.0
        %4393 = vmatpush1.msra.mxu0 0.0
        %4394 = vmatprep.subr.mxu0 0.0
        %4395 = vmatpush1.msra.mxu0 0.0
        %4396 = vmatprep.subr.mxu0 0.0
        %4397 = vmatpush1.msra.mxu0 0.0
        %4398 = vmatprep.subr.mxu0 0.0
        %4399 = vmatpush1.msra.mxu0 0.0
        %4400 = vmatprep.subr.mxu0 0.0
        %4401 = vmatpush1.msra.mxu0 0.0
        %4402 = vmatprep.subr.mxu0 0.0
        %4403 = vmatpush1.msra.mxu0 0.0
        %4404 = vmatprep.subr.mxu0 0.0
        %4405 = vmatpush1.msra.mxu0 0.0
        %4406 = vmatprep.subr.mxu0 0.0
        %4407 = vmatpush1.msra.mxu0 0.0
        %4408 = vmatprep.subr.mxu0 0.0
        %4409 = vmatpush1.msra.mxu0 0.0
        %4410 = vmatprep.subr.mxu0 0.0
        %4411 = vmatpush1.msra.mxu0 0.0
        %4412 = vmatprep.subr.mxu0 0.0
        %4413 = vmatpush1.msra.mxu0 0.0
        %4414 = vmatprep.subr.mxu0 0.0
        %4415 = vmatpush1.msra.mxu0 0.0
        %4416 = vmatprep.subr.mxu0 0.0
        %4417 = vmatpush1.msra.mxu0 0.0
        %4418 = vmatprep.subr.mxu0 0.0
        %4419 = vmatpush1.msra.mxu0 0.0
        %4420 = vmatprep.subr.mxu0 0.0
        %4421 = vmatpush1.msra.mxu0 %v4218
        %4422 = vmatprep.subr.mxu0 0.0
        %4423 = vmatpush2.msra.mxu0 0.0
        %4424 = vmatprep.subr.mxu0 0.0
        %4425 = vmatpush2.msra.mxu0 0.0
        %4426 = vmatprep.subr.mxu0 0.0
        %4427 = vmatpush2.msra.mxu0 0.0
        %4428 = vmatprep.subr.mxu0 0.0
        %4429 = vmatpush2.msra.mxu0 0.0
        %4430 = vmatprep.subr.mxu0 0.0
        %4431 = vmatpush2.msra.mxu0 0.0
        %4432 = vmatprep.subr.mxu0 0.0
        %4433 = vmatpush2.msra.mxu0 0.0
        %4434 = vmatprep.subr.mxu0 0.0
        %4435 = vmatpush2.msra.mxu0 0.0
        %4436 = vmatprep.subr.mxu0 0.0
        %4437 = vmatpush2.msra.mxu0 0.0
        %4438 = vmatprep.subr.mxu0 0.0
        %4439 = vmatpush2.msra.mxu0 0.0
        %4440 = vmatprep.subr.mxu0 0.0
        %4441 = vmatpush2.msra.mxu0 0.0
        %4442 = vmatprep.subr.mxu0 0.0
        %4443 = vmatpush2.msra.mxu0 0.0
        %4444 = vmatprep.subr.mxu0 0.0
        %4445 = vmatpush2.msra.mxu0 0.0
        %4446 = vmatprep.subr.mxu0 0.0
        %4447 = vmatpush2.msra.mxu0 0.0
        %4448 = vmatprep.subr.mxu0 0.0
        %4449 = vmatpush2.msra.mxu0 0.0
        %4450 = vmatprep.subr.mxu0 0.0
        %4451 = vmatpush2.msra.mxu0 0.0
        %4452 = vmatprep.subr.mxu0 0.0
        %4453 = vmatpush2.msra.mxu0 0.0
        %4454 = vmatprep.mubr.f32.mxu0 0.0
        %4455 = vmatmul.mubr.f32.gmra.mxu0 %v4367
        %v4456 = vpop.f32.mrf.mxu0
        %v4457 = vadd.f32 %v4328, %v4456
        %v4458 = vpop.f32.mrf.mxu0
        %4459 = vmatprep.mubr.f32.mxu0 0.0
        %4460 = vmatmul.mubr.f32.gmra.mxu0 %v4370
        %v4461 = vpop.f32.mrf.mxu0
        %v4462 = vadd.f32 %v4333, %v4461
        %v4463 = vpop.f32.mrf.mxu0
        %4464 = vmatprep.mubr.f32.mxu0 0.0
        %4465 = vmatmul.mubr.f32.gmra.mxu0 %v4373
        %v4466 = vpop.f32.mrf.mxu0
        %v4467 = vadd.f32 %v4338, %v4466
        %v4468 = vpop.f32.mrf.mxu0
        %4469 = vmatprep.mubr.f32.mxu0 0.0
        %4470 = vmatmul.mubr.f32.gmra.mxu0 %v4376
        %v4471 = vpop.f32.mrf.mxu0
        %v4472 = vadd.f32 %v4343, %v4471
        %v4473 = vpop.f32.mrf.mxu0
        %4474 = vmatprep.mubr.f32.mxu0 0.0
        %4475 = vmatmul.mubr.f32.gmra.mxu0 %v4379
        %v4476 = vpop.f32.mrf.mxu0
        %v4477 = vadd.f32 %v4348, %v4476
        %v4478 = vpop.f32.mrf.mxu0
        %4479 = vmatprep.mubr.f32.mxu0 0.0
        %4480 = vmatmul.mubr.f32.gmra.mxu0 %v4382
        %v4481 = vpop.f32.mrf.mxu0
        %v4482 = vadd.f32 %v4353, %v4481
        %v4483 = vpop.f32.mrf.mxu0
        %4484 = vmatprep.mubr.f32.mxu0 0.0
        %4485 = vmatmul.mubr.f32.gmra.mxu0 %v4385
        %v4486 = vpop.f32.mrf.mxu0
        %v4487 = vadd.f32 %v4358, %v4486
        %v4488 = vpop.f32.mrf.mxu0
        %4489 = vmatprep.mubr.f32.mxu0 0.0
        %4490 = vmatmul.mubr.f32.gmra.mxu0 %v4388
        %v4491 = vpop.f32.mrf.mxu0
        %v4492 = vadd.f32 %v4363, %v4491
        %v4493 = vpop.f32.mrf.mxu0
        %4494 = vdwg.mxu0
        %s4495 = scalar_lea.vmem [#allocation3], 2
        %v4496 = vld [vmem:[%s4495] ss:$2 sm:$0xff]
        %s4497 = scalar_lea.vmem [#allocation3], 50
        %v4498 = vld [vmem:[%s4497] ss:$2 sm:$0xff]
        %s4499 = scalar_lea.vmem [#allocation3], 98
        %v4500 = vld [vmem:[%s4499] ss:$2 sm:$0xff]
        %s4501 = scalar_lea.vmem [#allocation3], 146
        %v4502 = vld [vmem:[%s4501] ss:$2 sm:$0xff]
        %s4503 = scalar_lea.vmem [#allocation3], 194
        %v4504 = vld [vmem:[%s4503] ss:$2 sm:$0xff]
        %s4505 = scalar_lea.vmem [#allocation3], 242
        %v4506 = vld [vmem:[%s4505] ss:$2 sm:$0xff]
        %s4507 = scalar_lea.vmem [#allocation3], 290
        %v4508 = vld [vmem:[%s4507] ss:$2 sm:$0xff]
        %s4509 = scalar_lea.vmem [#allocation3], 338
        %v4510 = vld [vmem:[%s4509] ss:$2 sm:$0xff]
        %s4511 = scalar_lea.vmem %s5, 16
        %v4512 = vld [vmem:[%s4511] sm:$0xff]
        %v4514 = vsel %vm431, %v4496, 0
        %v4517 = vsel %vm431, %v4498, 0
        %v4520 = vsel %vm431, %v4500, 0
        %v4523 = vsel %vm431, %v4502, 0
        %v4526 = vsel %vm431, %v4504, 0
        %v4529 = vsel %vm431, %v4506, 0
        %v4532 = vsel %vm431, %v4508, 0
        %v4535 = vsel %vm431, %v4510, 0
        %4537 = vmatprep.subr.mxu0 0.0
        %4538 = vmatpush1.msra.mxu0 0.0
        %4539 = vmatprep.subr.mxu0 0.0
        %4540 = vmatpush1.msra.mxu0 0.0
        %4541 = vmatprep.subr.mxu0 0.0
        %4542 = vmatpush1.msra.mxu0 0.0
        %4543 = vmatprep.subr.mxu0 0.0
        %4544 = vmatpush1.msra.mxu0 0.0
        %4545 = vmatprep.subr.mxu0 0.0
        %4546 = vmatpush1.msra.mxu0 0.0
        %4547 = vmatprep.subr.mxu0 0.0
        %4548 = vmatpush1.msra.mxu0 0.0
        %4549 = vmatprep.subr.mxu0 0.0
        %4550 = vmatpush1.msra.mxu0 0.0
        %4551 = vmatprep.subr.mxu0 0.0
        %4552 = vmatpush1.msra.mxu0 0.0
        %4553 = vmatprep.subr.mxu0 0.0
        %4554 = vmatpush1.msra.mxu0 0.0
        %4555 = vmatprep.subr.mxu0 0.0
        %4556 = vmatpush1.msra.mxu0 0.0
        %4557 = vmatprep.subr.mxu0 0.0
        %4558 = vmatpush1.msra.mxu0 0.0
        %4559 = vmatprep.subr.mxu0 0.0
        %4560 = vmatpush1.msra.mxu0 0.0
        %4561 = vmatprep.subr.mxu0 0.0
        %4562 = vmatpush1.msra.mxu0 0.0
        %4563 = vmatprep.subr.mxu0 0.0
        %4564 = vmatpush1.msra.mxu0 0.0
        %4565 = vmatprep.subr.mxu0 0.0
        %4566 = vmatpush1.msra.mxu0 0.0
        %4567 = vmatprep.subr.mxu0 0.0
        %4568 = vmatpush1.msra.mxu0 %v4512
        %4569 = vmatprep.subr.mxu0 0.0
        %4570 = vmatpush2.msra.mxu0 0.0
        %4571 = vmatprep.subr.mxu0 0.0
        %4572 = vmatpush2.msra.mxu0 0.0
        %4573 = vmatprep.subr.mxu0 0.0
        %4574 = vmatpush2.msra.mxu0 0.0
        %4575 = vmatprep.subr.mxu0 0.0
        %4576 = vmatpush2.msra.mxu0 0.0
        %4577 = vmatprep.subr.mxu0 0.0
        %4578 = vmatpush2.msra.mxu0 0.0
        %4579 = vmatprep.subr.mxu0 0.0
        %4580 = vmatpush2.msra.mxu0 0.0
        %4581 = vmatprep.subr.mxu0 0.0
        %4582 = vmatpush2.msra.mxu0 0.0
        %4583 = vmatprep.subr.mxu0 0.0
        %4584 = vmatpush2.msra.mxu0 0.0
        %4585 = vmatprep.subr.mxu0 0.0
        %4586 = vmatpush2.msra.mxu0 0.0
        %4587 = vmatprep.subr.mxu0 0.0
        %4588 = vmatpush2.msra.mxu0 0.0
        %4589 = vmatprep.subr.mxu0 0.0
        %4590 = vmatpush2.msra.mxu0 0.0
        %4591 = vmatprep.subr.mxu0 0.0
        %4592 = vmatpush2.msra.mxu0 0.0
        %4593 = vmatprep.subr.mxu0 0.0
        %4594 = vmatpush2.msra.mxu0 0.0
        %4595 = vmatprep.subr.mxu0 0.0
        %4596 = vmatpush2.msra.mxu0 0.0
        %4597 = vmatprep.subr.mxu0 0.0
        %4598 = vmatpush2.msra.mxu0 0.0
        %4599 = vmatprep.subr.mxu0 0.0
        %4600 = vmatpush2.msra.mxu0 0.0
        %4601 = vmatprep.mubr.f32.mxu0 0.0
        %4602 = vmatmul.mubr.f32.gmra.mxu0 %v4514
        %v4603 = vpop.f32.mrf.mxu0
        %v4604 = vadd.f32 0.0, %v4603
        %v4605 = vpop.f32.mrf.mxu0
        %4606 = vmatprep.mubr.f32.mxu0 0.0
        %4607 = vmatmul.mubr.f32.gmra.mxu0 %v4517
        %v4608 = vpop.f32.mrf.mxu0
        %v4609 = vadd.f32 0.0, %v4608
        %v4610 = vpop.f32.mrf.mxu0
        %4611 = vmatprep.mubr.f32.mxu0 0.0
        %4612 = vmatmul.mubr.f32.gmra.mxu0 %v4520
        %v4613 = vpop.f32.mrf.mxu0
        %v4614 = vadd.f32 0.0, %v4613
        %v4615 = vpop.f32.mrf.mxu0
        %4616 = vmatprep.mubr.f32.mxu0 0.0
        %4617 = vmatmul.mubr.f32.gmra.mxu0 %v4523
        %v4618 = vpop.f32.mrf.mxu0
        %v4619 = vadd.f32 0.0, %v4618
        %v4620 = vpop.f32.mrf.mxu0
        %4621 = vmatprep.mubr.f32.mxu0 0.0
        %4622 = vmatmul.mubr.f32.gmra.mxu0 %v4526
        %v4623 = vpop.f32.mrf.mxu0
        %v4624 = vadd.f32 0.0, %v4623
        %v4625 = vpop.f32.mrf.mxu0
        %4626 = vmatprep.mubr.f32.mxu0 0.0
        %4627 = vmatmul.mubr.f32.gmra.mxu0 %v4529
        %v4628 = vpop.f32.mrf.mxu0
        %v4629 = vadd.f32 0.0, %v4628
        %v4630 = vpop.f32.mrf.mxu0
        %4631 = vmatprep.mubr.f32.mxu0 0.0
        %4632 = vmatmul.mubr.f32.gmra.mxu0 %v4532
        %v4633 = vpop.f32.mrf.mxu0
        %v4634 = vadd.f32 0.0, %v4633
        %v4635 = vpop.f32.mrf.mxu0
        %4636 = vmatprep.mubr.f32.mxu0 0.0
        %4637 = vmatmul.mubr.f32.gmra.mxu0 %v4535
        %v4638 = vpop.f32.mrf.mxu0
        %v4639 = vadd.f32 0.0, %v4638
        %v4640 = vpop.f32.mrf.mxu0
        %4641 = vdwg.mxu0
        %v4642 = vadd.f32 %v4457, %v4604
        %v4643 = vadd.f32 %v4462, %v4609
        %v4644 = vadd.f32 %v4467, %v4614
        %v4645 = vadd.f32 %v4472, %v4619
        %v4646 = vadd.f32 %v4477, %v4624
        %v4647 = vadd.f32 %v4482, %v4629
        %v4648 = vadd.f32 %v4487, %v4634
        %v4649 = vadd.f32 %v4492, %v4639
        %v4650 = vld [vmem:[%s4170] ss:$2 sm:$0xff]
        %s4651 = scalar_lea.vmem %s4170, 48 [#allocation3]
        %v4652 = vld [vmem:[%s4651] ss:$2 sm:$0xff]
        %s4653 = scalar_lea.vmem %s4170, 96 [#allocation3]
        %v4654 = vld [vmem:[%s4653] ss:$2 sm:$0xff]
        %s4655 = scalar_lea.vmem %s4170, 144 [#allocation3]
        %v4656 = vld [vmem:[%s4655] ss:$2 sm:$0xff]
        %s4657 = scalar_lea.vmem %s4170, 192 [#allocation3]
        %v4658 = vld [vmem:[%s4657] ss:$2 sm:$0xff]
        %s4659 = scalar_lea.vmem %s4170, 240 [#allocation3]
        %v4660 = vld [vmem:[%s4659] ss:$2 sm:$0xff]
        %s4661 = scalar_lea.vmem %s4170, 288 [#allocation3]
        %v4662 = vld [vmem:[%s4661] ss:$2 sm:$0xff]
        %s4663 = scalar_lea.vmem %s4170, 336 [#allocation3]
        %v4664 = vld [vmem:[%s4663] ss:$2 sm:$0xff]
        %s4665 = scalar_lea.vmem %s5, 24
        %v4666 = vld [vmem:[%s4665] sm:$0xff]
        %v4668 = vsel %vm431, %v4650, 0
        %v4671 = vsel %vm431, %v4652, 0
        %v4674 = vsel %vm431, %v4654, 0
        %v4677 = vsel %vm431, %v4656, 0
        %v4680 = vsel %vm431, %v4658, 0
        %v4683 = vsel %vm431, %v4660, 0
        %v4686 = vsel %vm431, %v4662, 0
        %v4689 = vsel %vm431, %v4664, 0
        %4691 = vmatprep.subr.mxu0 0.0
        %4692 = vmatpush1.msra.mxu0 0.0
        %4693 = vmatprep.subr.mxu0 0.0
        %4694 = vmatpush1.msra.mxu0 0.0
        %4695 = vmatprep.subr.mxu0 0.0
        %4696 = vmatpush1.msra.mxu0 0.0
        %4697 = vmatprep.subr.mxu0 0.0
        %4698 = vmatpush1.msra.mxu0 0.0
        %4699 = vmatprep.subr.mxu0 0.0
        %4700 = vmatpush1.msra.mxu0 0.0
        %4701 = vmatprep.subr.mxu0 0.0
        %4702 = vmatpush1.msra.mxu0 0.0
        %4703 = vmatprep.subr.mxu0 0.0
        %4704 = vmatpush1.msra.mxu0 0.0
        %4705 = vmatprep.subr.mxu0 0.0
        %4706 = vmatpush1.msra.mxu0 0.0
        %4707 = vmatprep.subr.mxu0 0.0
        %4708 = vmatpush1.msra.mxu0 0.0
        %4709 = vmatprep.subr.mxu0 0.0
        %4710 = vmatpush1.msra.mxu0 0.0
        %4711 = vmatprep.subr.mxu0 0.0
        %4712 = vmatpush1.msra.mxu0 0.0
        %4713 = vmatprep.subr.mxu0 0.0
        %4714 = vmatpush1.msra.mxu0 0.0
        %4715 = vmatprep.subr.mxu0 0.0
        %4716 = vmatpush1.msra.mxu0 0.0
        %4717 = vmatprep.subr.mxu0 0.0
        %4718 = vmatpush1.msra.mxu0 0.0
        %4719 = vmatprep.subr.mxu0 0.0
        %4720 = vmatpush1.msra.mxu0 0.0
        %4721 = vmatprep.subr.mxu0 0.0
        %4722 = vmatpush1.msra.mxu0 %v4666
        %4723 = vmatprep.subr.mxu0 0.0
        %4724 = vmatpush2.msra.mxu0 0.0
        %4725 = vmatprep.subr.mxu0 0.0
        %4726 = vmatpush2.msra.mxu0 0.0
        %4727 = vmatprep.subr.mxu0 0.0
        %4728 = vmatpush2.msra.mxu0 0.0
        %4729 = vmatprep.subr.mxu0 0.0
        %4730 = vmatpush2.msra.mxu0 0.0
        %4731 = vmatprep.subr.mxu0 0.0
        %4732 = vmatpush2.msra.mxu0 0.0
        %4733 = vmatprep.subr.mxu0 0.0
        %4734 = vmatpush2.msra.mxu0 0.0
        %4735 = vmatprep.subr.mxu0 0.0
        %4736 = vmatpush2.msra.mxu0 0.0
        %4737 = vmatprep.subr.mxu0 0.0
        %4738 = vmatpush2.msra.mxu0 0.0
        %4739 = vmatprep.subr.mxu0 0.0
        %4740 = vmatpush2.msra.mxu0 0.0
        %4741 = vmatprep.subr.mxu0 0.0
        %4742 = vmatpush2.msra.mxu0 0.0
        %4743 = vmatprep.subr.mxu0 0.0
        %4744 = vmatpush2.msra.mxu0 0.0
        %4745 = vmatprep.subr.mxu0 0.0
        %4746 = vmatpush2.msra.mxu0 0.0
        %4747 = vmatprep.subr.mxu0 0.0
        %4748 = vmatpush2.msra.mxu0 0.0
        %4749 = vmatprep.subr.mxu0 0.0
        %4750 = vmatpush2.msra.mxu0 0.0
        %4751 = vmatprep.subr.mxu0 0.0
        %4752 = vmatpush2.msra.mxu0 0.0
        %4753 = vmatprep.subr.mxu0 0.0
        %4754 = vmatpush2.msra.mxu0 0.0
        %4755 = vmatprep.mubr.f32.mxu0 0.0
        %4756 = vmatmul.mubr.f32.gmra.mxu0 %v4668
        %v4757 = vpop.f32.mrf.mxu0
        %v4758 = vadd.f32 0.0, %v4757
        %v4759 = vpop.f32.mrf.mxu0
        %4760 = vmatprep.mubr.f32.mxu0 0.0
        %4761 = vmatmul.mubr.f32.gmra.mxu0 %v4671
        %v4762 = vpop.f32.mrf.mxu0
        %v4763 = vadd.f32 0.0, %v4762
        %v4764 = vpop.f32.mrf.mxu0
        %4765 = vmatprep.mubr.f32.mxu0 0.0
        %4766 = vmatmul.mubr.f32.gmra.mxu0 %v4674
        %v4767 = vpop.f32.mrf.mxu0
        %v4768 = vadd.f32 0.0, %v4767
        %v4769 = vpop.f32.mrf.mxu0
        %4770 = vmatprep.mubr.f32.mxu0 0.0
        %4771 = vmatmul.mubr.f32.gmra.mxu0 %v4677
        %v4772 = vpop.f32.mrf.mxu0
        %v4773 = vadd.f32 0.0, %v4772
        %v4774 = vpop.f32.mrf.mxu0
        %4775 = vmatprep.mubr.f32.mxu0 0.0
        %4776 = vmatmul.mubr.f32.gmra.mxu0 %v4680
        %v4777 = vpop.f32.mrf.mxu0
        %v4778 = vadd.f32 0.0, %v4777
        %v4779 = vpop.f32.mrf.mxu0
        %4780 = vmatprep.mubr.f32.mxu0 0.0
        %4781 = vmatmul.mubr.f32.gmra.mxu0 %v4683
        %v4782 = vpop.f32.mrf.mxu0
        %v4783 = vadd.f32 0.0, %v4782
        %v4784 = vpop.f32.mrf.mxu0
        %4785 = vmatprep.mubr.f32.mxu0 0.0
        %4786 = vmatmul.mubr.f32.gmra.mxu0 %v4686
        %v4787 = vpop.f32.mrf.mxu0
        %v4788 = vadd.f32 0.0, %v4787
        %v4789 = vpop.f32.mrf.mxu0
        %4790 = vmatprep.mubr.f32.mxu0 0.0
        %4791 = vmatmul.mubr.f32.gmra.mxu0 %v4689
        %v4792 = vpop.f32.mrf.mxu0
        %v4793 = vadd.f32 0.0, %v4792
        %v4794 = vpop.f32.mrf.mxu0
        %4795 = vdwg.mxu0
        %v4796 = vadd.f32 %v4642, %v4758
        %v4797 = vadd.f32 %v4643, %v4763
        %v4798 = vadd.f32 %v4644, %v4768
        %v4799 = vadd.f32 %v4645, %v4773
        %v4800 = vadd.f32 %v4646, %v4778
        %v4801 = vadd.f32 %v4647, %v4783
        %v4802 = vadd.f32 %v4648, %v4788
        %v4803 = vadd.f32 %v4649, %v4793
        %s4804 = scalar_lea.vmem %s4170, 1 [#allocation3]
        %v4805 = vld [vmem:[%s4804] ss:$2 sm:$0xff]
        %s4806 = scalar_lea.vmem %s4170, 49 [#allocation3]
        %v4807 = vld [vmem:[%s4806] ss:$2 sm:$0xff]
        %s4808 = scalar_lea.vmem %s4170, 97 [#allocation3]
        %v4809 = vld [vmem:[%s4808] ss:$2 sm:$0xff]
        %s4810 = scalar_lea.vmem %s4170, 145 [#allocation3]
        %v4811 = vld [vmem:[%s4810] ss:$2 sm:$0xff]
        %s4812 = scalar_lea.vmem %s4170, 193 [#allocation3]
        %v4813 = vld [vmem:[%s4812] ss:$2 sm:$0xff]
        %s4814 = scalar_lea.vmem %s4170, 241 [#allocation3]
        %v4815 = vld [vmem:[%s4814] ss:$2 sm:$0xff]
        %s4816 = scalar_lea.vmem %s4170, 289 [#allocation3]
        %v4817 = vld [vmem:[%s4816] ss:$2 sm:$0xff]
        %s4818 = scalar_lea.vmem %s4170, 337 [#allocation3]
        %v4819 = vld [vmem:[%s4818] ss:$2 sm:$0xff]
        %s4820 = scalar_lea.vmem %s5, 32
        %v4821 = vld [vmem:[%s4820] sm:$0xff]
        %v4823 = vsel %vm431, %v4805, 0
        %v4826 = vsel %vm431, %v4807, 0
        %v4829 = vsel %vm431, %v4809, 0
        %v4832 = vsel %vm431, %v4811, 0
        %v4835 = vsel %vm431, %v4813, 0
        %v4838 = vsel %vm431, %v4815, 0
        %v4841 = vsel %vm431, %v4817, 0
        %v4844 = vsel %vm431, %v4819, 0
        %4846 = vmatprep.subr.mxu0 0.0
        %4847 = vmatpush1.msra.mxu0 0.0
        %4848 = vmatprep.subr.mxu0 0.0
        %4849 = vmatpush1.msra.mxu0 0.0
        %4850 = vmatprep.subr.mxu0 0.0
        %4851 = vmatpush1.msra.mxu0 0.0
        %4852 = vmatprep.subr.mxu0 0.0
        %4853 = vmatpush1.msra.mxu0 0.0
        %4854 = vmatprep.subr.mxu0 0.0
        %4855 = vmatpush1.msra.mxu0 0.0
        %4856 = vmatprep.subr.mxu0 0.0
        %4857 = vmatpush1.msra.mxu0 0.0
        %4858 = vmatprep.subr.mxu0 0.0
        %4859 = vmatpush1.msra.mxu0 0.0
        %4860 = vmatprep.subr.mxu0 0.0
        %4861 = vmatpush1.msra.mxu0 0.0
        %4862 = vmatprep.subr.mxu0 0.0
        %4863 = vmatpush1.msra.mxu0 0.0
        %4864 = vmatprep.subr.mxu0 0.0
        %4865 = vmatpush1.msra.mxu0 0.0
        %4866 = vmatprep.subr.mxu0 0.0
        %4867 = vmatpush1.msra.mxu0 0.0
        %4868 = vmatprep.subr.mxu0 0.0
        %4869 = vmatpush1.msra.mxu0 0.0
        %4870 = vmatprep.subr.mxu0 0.0
        %4871 = vmatpush1.msra.mxu0 0.0
        %4872 = vmatprep.subr.mxu0 0.0
        %4873 = vmatpush1.msra.mxu0 0.0
        %4874 = vmatprep.subr.mxu0 0.0
        %4875 = vmatpush1.msra.mxu0 0.0
        %4876 = vmatprep.subr.mxu0 0.0
        %4877 = vmatpush1.msra.mxu0 %v4821
        %4878 = vmatprep.subr.mxu0 0.0
        %4879 = vmatpush2.msra.mxu0 0.0
        %4880 = vmatprep.subr.mxu0 0.0
        %4881 = vmatpush2.msra.mxu0 0.0
        %4882 = vmatprep.subr.mxu0 0.0
        %4883 = vmatpush2.msra.mxu0 0.0
        %4884 = vmatprep.subr.mxu0 0.0
        %4885 = vmatpush2.msra.mxu0 0.0
        %4886 = vmatprep.subr.mxu0 0.0
        %4887 = vmatpush2.msra.mxu0 0.0
        %4888 = vmatprep.subr.mxu0 0.0
        %4889 = vmatpush2.msra.mxu0 0.0
        %4890 = vmatprep.subr.mxu0 0.0
        %4891 = vmatpush2.msra.mxu0 0.0
        %4892 = vmatprep.subr.mxu0 0.0
        %4893 = vmatpush2.msra.mxu0 0.0
        %4894 = vmatprep.subr.mxu0 0.0
        %4895 = vmatpush2.msra.mxu0 0.0
        %4896 = vmatprep.subr.mxu0 0.0
        %4897 = vmatpush2.msra.mxu0 0.0
        %4898 = vmatprep.subr.mxu0 0.0
        %4899 = vmatpush2.msra.mxu0 0.0
        %4900 = vmatprep.subr.mxu0 0.0
        %4901 = vmatpush2.msra.mxu0 0.0
        %4902 = vmatprep.subr.mxu0 0.0
        %4903 = vmatpush2.msra.mxu0 0.0
        %4904 = vmatprep.subr.mxu0 0.0
        %4905 = vmatpush2.msra.mxu0 0.0
        %4906 = vmatprep.subr.mxu0 0.0
        %4907 = vmatpush2.msra.mxu0 0.0
        %4908 = vmatprep.subr.mxu0 0.0
        %4909 = vmatpush2.msra.mxu0 0.0
        %4910 = vmatprep.mubr.f32.mxu0 0.0
        %4911 = vmatmul.mubr.f32.gmra.mxu0 %v4823
        %v4912 = vpop.f32.mrf.mxu0
        %v4913 = vadd.f32 0.0, %v4912
        %v4914 = vpop.f32.mrf.mxu0
        %4915 = vmatprep.mubr.f32.mxu0 0.0
        %4916 = vmatmul.mubr.f32.gmra.mxu0 %v4826
        %v4917 = vpop.f32.mrf.mxu0
        %v4918 = vadd.f32 0.0, %v4917
        %v4919 = vpop.f32.mrf.mxu0
        %4920 = vmatprep.mubr.f32.mxu0 0.0
        %4921 = vmatmul.mubr.f32.gmra.mxu0 %v4829
        %v4922 = vpop.f32.mrf.mxu0
        %v4923 = vadd.f32 0.0, %v4922
        %v4924 = vpop.f32.mrf.mxu0
        %4925 = vmatprep.mubr.f32.mxu0 0.0
        %4926 = vmatmul.mubr.f32.gmra.mxu0 %v4832
        %v4927 = vpop.f32.mrf.mxu0
        %v4928 = vadd.f32 0.0, %v4927
        %v4929 = vpop.f32.mrf.mxu0
        %4930 = vmatprep.mubr.f32.mxu0 0.0
        %4931 = vmatmul.mubr.f32.gmra.mxu0 %v4835
        %v4932 = vpop.f32.mrf.mxu0
        %v4933 = vadd.f32 0.0, %v4932
        %v4934 = vpop.f32.mrf.mxu0
        %4935 = vmatprep.mubr.f32.mxu0 0.0
        %4936 = vmatmul.mubr.f32.gmra.mxu0 %v4838
        %v4937 = vpop.f32.mrf.mxu0
        %v4938 = vadd.f32 0.0, %v4937
        %v4939 = vpop.f32.mrf.mxu0
        %4940 = vmatprep.mubr.f32.mxu0 0.0
        %4941 = vmatmul.mubr.f32.gmra.mxu0 %v4841
        %v4942 = vpop.f32.mrf.mxu0
        %v4943 = vadd.f32 0.0, %v4942
        %v4944 = vpop.f32.mrf.mxu0
        %4945 = vmatprep.mubr.f32.mxu0 0.0
        %4946 = vmatmul.mubr.f32.gmra.mxu0 %v4844
        %v4947 = vpop.f32.mrf.mxu0
        %v4948 = vadd.f32 0.0, %v4947
        %v4949 = vpop.f32.mrf.mxu0
        %4950 = vdwg.mxu0
        %v4951 = vadd.f32 %v4796, %v4913
        %v4952 = vadd.f32 %v4797, %v4918
        %v4953 = vadd.f32 %v4798, %v4923
        %v4954 = vadd.f32 %v4799, %v4928
        %v4955 = vadd.f32 %v4800, %v4933
        %v4956 = vadd.f32 %v4801, %v4938
        %v4957 = vadd.f32 %v4802, %v4943
        %v4958 = vadd.f32 %v4803, %v4948
        %s4959 = scalar_lea.vmem %s4170, 2 [#allocation3]
        %v4960 = vld [vmem:[%s4959] ss:$2 sm:$0xff]
        %s4961 = scalar_lea.vmem %s4170, 50 [#allocation3]
        %v4962 = vld [vmem:[%s4961] ss:$2 sm:$0xff]
        %s4963 = scalar_lea.vmem %s4170, 98 [#allocation3]
        %v4964 = vld [vmem:[%s4963] ss:$2 sm:$0xff]
        %s4965 = scalar_lea.vmem %s4170, 146 [#allocation3]
        %v4966 = vld [vmem:[%s4965] ss:$2 sm:$0xff]
        %s4967 = scalar_lea.vmem %s4170, 194 [#allocation3]
        %v4968 = vld [vmem:[%s4967] ss:$2 sm:$0xff]
        %s4969 = scalar_lea.vmem %s4170, 242 [#allocation3]
        %v4970 = vld [vmem:[%s4969] ss:$2 sm:$0xff]
        %s4971 = scalar_lea.vmem %s4170, 290 [#allocation3]
        %v4972 = vld [vmem:[%s4971] ss:$2 sm:$0xff]
        %s4973 = scalar_lea.vmem %s4170, 338 [#allocation3]
        %v4974 = vld [vmem:[%s4973] ss:$2 sm:$0xff]
        %s4975 = scalar_lea.vmem %s5, 40
        %v4976 = vld [vmem:[%s4975] sm:$0xff]
        %v4978 = vsel %vm431, %v4960, 0
        %v4981 = vsel %vm431, %v4962, 0
        %v4984 = vsel %vm431, %v4964, 0
        %v4987 = vsel %vm431, %v4966, 0
        %v4990 = vsel %vm431, %v4968, 0
        %v4993 = vsel %vm431, %v4970, 0
        %v4996 = vsel %vm431, %v4972, 0
        %v4999 = vsel %vm431, %v4974, 0
        %5001 = vmatprep.subr.mxu0 0.0
        %5002 = vmatpush1.msra.mxu0 0.0
        %5003 = vmatprep.subr.mxu0 0.0
        %5004 = vmatpush1.msra.mxu0 0.0
        %5005 = vmatprep.subr.mxu0 0.0
        %5006 = vmatpush1.msra.mxu0 0.0
        %5007 = vmatprep.subr.mxu0 0.0
        %5008 = vmatpush1.msra.mxu0 0.0
        %5009 = vmatprep.subr.mxu0 0.0
        %5010 = vmatpush1.msra.mxu0 0.0
        %5011 = vmatprep.subr.mxu0 0.0
        %5012 = vmatpush1.msra.mxu0 0.0
        %5013 = vmatprep.subr.mxu0 0.0
        %5014 = vmatpush1.msra.mxu0 0.0
        %5015 = vmatprep.subr.mxu0 0.0
        %5016 = vmatpush1.msra.mxu0 0.0
        %5017 = vmatprep.subr.mxu0 0.0
        %5018 = vmatpush1.msra.mxu0 0.0
        %5019 = vmatprep.subr.mxu0 0.0
        %5020 = vmatpush1.msra.mxu0 0.0
        %5021 = vmatprep.subr.mxu0 0.0
        %5022 = vmatpush1.msra.mxu0 0.0
        %5023 = vmatprep.subr.mxu0 0.0
        %5024 = vmatpush1.msra.mxu0 0.0
        %5025 = vmatprep.subr.mxu0 0.0
        %5026 = vmatpush1.msra.mxu0 0.0
        %5027 = vmatprep.subr.mxu0 0.0
        %5028 = vmatpush1.msra.mxu0 0.0
        %5029 = vmatprep.subr.mxu0 0.0
        %5030 = vmatpush1.msra.mxu0 0.0
        %5031 = vmatprep.subr.mxu0 0.0
        %5032 = vmatpush1.msra.mxu0 %v4976
        %5033 = vmatprep.subr.mxu0 0.0
        %5034 = vmatpush2.msra.mxu0 0.0
        %5035 = vmatprep.subr.mxu0 0.0
        %5036 = vmatpush2.msra.mxu0 0.0
        %5037 = vmatprep.subr.mxu0 0.0
        %5038 = vmatpush2.msra.mxu0 0.0
        %5039 = vmatprep.subr.mxu0 0.0
        %5040 = vmatpush2.msra.mxu0 0.0
        %5041 = vmatprep.subr.mxu0 0.0
        %5042 = vmatpush2.msra.mxu0 0.0
        %5043 = vmatprep.subr.mxu0 0.0
        %5044 = vmatpush2.msra.mxu0 0.0
        %5045 = vmatprep.subr.mxu0 0.0
        %5046 = vmatpush2.msra.mxu0 0.0
        %5047 = vmatprep.subr.mxu0 0.0
        %5048 = vmatpush2.msra.mxu0 0.0
        %5049 = vmatprep.subr.mxu0 0.0
        %5050 = vmatpush2.msra.mxu0 0.0
        %5051 = vmatprep.subr.mxu0 0.0
        %5052 = vmatpush2.msra.mxu0 0.0
        %5053 = vmatprep.subr.mxu0 0.0
        %5054 = vmatpush2.msra.mxu0 0.0
        %5055 = vmatprep.subr.mxu0 0.0
        %5056 = vmatpush2.msra.mxu0 0.0
        %5057 = vmatprep.subr.mxu0 0.0
        %5058 = vmatpush2.msra.mxu0 0.0
        %5059 = vmatprep.subr.mxu0 0.0
        %5060 = vmatpush2.msra.mxu0 0.0
        %5061 = vmatprep.subr.mxu0 0.0
        %5062 = vmatpush2.msra.mxu0 0.0
        %5063 = vmatprep.subr.mxu0 0.0
        %5064 = vmatpush2.msra.mxu0 0.0
        %5065 = vmatprep.mubr.f32.mxu0 0.0
        %5066 = vmatmul.mubr.f32.gmra.mxu0 %v4978
        %v5067 = vpop.f32.mrf.mxu0
        %v5068 = vadd.f32 0.0, %v5067
        %v5069 = vpop.f32.mrf.mxu0
        %5070 = vmatprep.mubr.f32.mxu0 0.0
        %5071 = vmatmul.mubr.f32.gmra.mxu0 %v4981
        %v5072 = vpop.f32.mrf.mxu0
        %v5073 = vadd.f32 0.0, %v5072
        %v5074 = vpop.f32.mrf.mxu0
        %5075 = vmatprep.mubr.f32.mxu0 0.0
        %5076 = vmatmul.mubr.f32.gmra.mxu0 %v4984
        %v5077 = vpop.f32.mrf.mxu0
        %v5078 = vadd.f32 0.0, %v5077
        %v5079 = vpop.f32.mrf.mxu0
        %5080 = vmatprep.mubr.f32.mxu0 0.0
        %5081 = vmatmul.mubr.f32.gmra.mxu0 %v4987
        %v5082 = vpop.f32.mrf.mxu0
        %v5083 = vadd.f32 0.0, %v5082
        %v5084 = vpop.f32.mrf.mxu0
        %5085 = vmatprep.mubr.f32.mxu0 0.0
        %5086 = vmatmul.mubr.f32.gmra.mxu0 %v4990
        %v5087 = vpop.f32.mrf.mxu0
        %v5088 = vadd.f32 0.0, %v5087
        %v5089 = vpop.f32.mrf.mxu0
        %5090 = vmatprep.mubr.f32.mxu0 0.0
        %5091 = vmatmul.mubr.f32.gmra.mxu0 %v4993
        %v5092 = vpop.f32.mrf.mxu0
        %v5093 = vadd.f32 0.0, %v5092
        %v5094 = vpop.f32.mrf.mxu0
        %5095 = vmatprep.mubr.f32.mxu0 0.0
        %5096 = vmatmul.mubr.f32.gmra.mxu0 %v4996
        %v5097 = vpop.f32.mrf.mxu0
        %v5098 = vadd.f32 0.0, %v5097
        %v5099 = vpop.f32.mrf.mxu0
        %5100 = vmatprep.mubr.f32.mxu0 0.0
        %5101 = vmatmul.mubr.f32.gmra.mxu0 %v4999
        %v5102 = vpop.f32.mrf.mxu0
        %v5103 = vadd.f32 0.0, %v5102
        %v5104 = vpop.f32.mrf.mxu0
        %5105 = vdwg.mxu0
        %v5106 = vadd.f32 %v4951, %v5068
        %v5107 = vadd.f32 %v4952, %v5073
        %v5108 = vadd.f32 %v4953, %v5078
        %v5109 = vadd.f32 %v4954, %v5083
        %v5110 = vadd.f32 %v4955, %v5088
        %v5111 = vadd.f32 %v4956, %v5093
        %v5112 = vadd.f32 %v4957, %v5098
        %v5113 = vadd.f32 %v4958, %v5103
        %s5114 = scalar_lea.vmem [#allocation3], 48
        %v5115 = vld [vmem:[%s5114] ss:$2 sm:$0xff]
        %s5116 = scalar_lea.vmem %s5114, 48 [#allocation3]
        %v5117 = vld [vmem:[%s5116] ss:$2 sm:$0xff]
        %s5118 = scalar_lea.vmem %s5114, 96 [#allocation3]
        %v5119 = vld [vmem:[%s5118] ss:$2 sm:$0xff]
        %s5120 = scalar_lea.vmem %s5114, 144 [#allocation3]
        %v5121 = vld [vmem:[%s5120] ss:$2 sm:$0xff]
        %s5122 = scalar_lea.vmem %s5114, 192 [#allocation3]
        %v5123 = vld [vmem:[%s5122] ss:$2 sm:$0xff]
        %s5124 = scalar_lea.vmem %s5114, 240 [#allocation3]
        %v5125 = vld [vmem:[%s5124] ss:$2 sm:$0xff]
        %s5126 = scalar_lea.vmem %s5114, 288 [#allocation3]
        %v5127 = vld [vmem:[%s5126] ss:$2 sm:$0xff]
        %s5128 = scalar_lea.vmem %s5114, 336 [#allocation3]
        %v5129 = vld [vmem:[%s5128] ss:$2 sm:$0xff]
        %s5130 = scalar_lea.vmem %s5, 48
        %v5131 = vld [vmem:[%s5130] sm:$0xff]
        %v5133 = vsel %vm431, %v5115, 0
        %v5136 = vsel %vm431, %v5117, 0
        %v5139 = vsel %vm431, %v5119, 0
        %v5142 = vsel %vm431, %v5121, 0
        %v5145 = vsel %vm431, %v5123, 0
        %v5148 = vsel %vm431, %v5125, 0
        %v5151 = vsel %vm431, %v5127, 0
        %v5154 = vsel %vm431, %v5129, 0
        %5156 = vmatprep.subr.mxu0 0.0
        %5157 = vmatpush1.msra.mxu0 0.0
        %5158 = vmatprep.subr.mxu0 0.0
        %5159 = vmatpush1.msra.mxu0 0.0
        %5160 = vmatprep.subr.mxu0 0.0
        %5161 = vmatpush1.msra.mxu0 0.0
        %5162 = vmatprep.subr.mxu0 0.0
        %5163 = vmatpush1.msra.mxu0 0.0
        %5164 = vmatprep.subr.mxu0 0.0
        %5165 = vmatpush1.msra.mxu0 0.0
        %5166 = vmatprep.subr.mxu0 0.0
        %5167 = vmatpush1.msra.mxu0 0.0
        %5168 = vmatprep.subr.mxu0 0.0
        %5169 = vmatpush1.msra.mxu0 0.0
        %5170 = vmatprep.subr.mxu0 0.0
        %5171 = vmatpush1.msra.mxu0 0.0
        %5172 = vmatprep.subr.mxu0 0.0
        %5173 = vmatpush1.msra.mxu0 0.0
        %5174 = vmatprep.subr.mxu0 0.0
        %5175 = vmatpush1.msra.mxu0 0.0
        %5176 = vmatprep.subr.mxu0 0.0
        %5177 = vmatpush1.msra.mxu0 0.0
        %5178 = vmatprep.subr.mxu0 0.0
        %5179 = vmatpush1.msra.mxu0 0.0
        %5180 = vmatprep.subr.mxu0 0.0
        %5181 = vmatpush1.msra.mxu0 0.0
        %5182 = vmatprep.subr.mxu0 0.0
        %5183 = vmatpush1.msra.mxu0 0.0
        %5184 = vmatprep.subr.mxu0 0.0
        %5185 = vmatpush1.msra.mxu0 0.0
        %5186 = vmatprep.subr.mxu0 0.0
        %5187 = vmatpush1.msra.mxu0 %v5131
        %5188 = vmatprep.subr.mxu0 0.0
        %5189 = vmatpush2.msra.mxu0 0.0
        %5190 = vmatprep.subr.mxu0 0.0
        %5191 = vmatpush2.msra.mxu0 0.0
        %5192 = vmatprep.subr.mxu0 0.0
        %5193 = vmatpush2.msra.mxu0 0.0
        %5194 = vmatprep.subr.mxu0 0.0
        %5195 = vmatpush2.msra.mxu0 0.0
        %5196 = vmatprep.subr.mxu0 0.0
        %5197 = vmatpush2.msra.mxu0 0.0
        %5198 = vmatprep.subr.mxu0 0.0
        %5199 = vmatpush2.msra.mxu0 0.0
        %5200 = vmatprep.subr.mxu0 0.0
        %5201 = vmatpush2.msra.mxu0 0.0
        %5202 = vmatprep.subr.mxu0 0.0
        %5203 = vmatpush2.msra.mxu0 0.0
        %5204 = vmatprep.subr.mxu0 0.0
        %5205 = vmatpush2.msra.mxu0 0.0
        %5206 = vmatprep.subr.mxu0 0.0
        %5207 = vmatpush2.msra.mxu0 0.0
        %5208 = vmatprep.subr.mxu0 0.0
        %5209 = vmatpush2.msra.mxu0 0.0
        %5210 = vmatprep.subr.mxu0 0.0
        %5211 = vmatpush2.msra.mxu0 0.0
        %5212 = vmatprep.subr.mxu0 0.0
        %5213 = vmatpush2.msra.mxu0 0.0
        %5214 = vmatprep.subr.mxu0 0.0
        %5215 = vmatpush2.msra.mxu0 0.0
        %5216 = vmatprep.subr.mxu0 0.0
        %5217 = vmatpush2.msra.mxu0 0.0
        %5218 = vmatprep.subr.mxu0 0.0
        %5219 = vmatpush2.msra.mxu0 0.0
        %5220 = vmatprep.mubr.f32.mxu0 0.0
        %5221 = vmatmul.mubr.f32.gmra.mxu0 %v5133
        %v5222 = vpop.f32.mrf.mxu0
        %v5223 = vadd.f32 0.0, %v5222
        %v5224 = vpop.f32.mrf.mxu0
        %5225 = vmatprep.mubr.f32.mxu0 0.0
        %5226 = vmatmul.mubr.f32.gmra.mxu0 %v5136
        %v5227 = vpop.f32.mrf.mxu0
        %v5228 = vadd.f32 0.0, %v5227
        %v5229 = vpop.f32.mrf.mxu0
        %5230 = vmatprep.mubr.f32.mxu0 0.0
        %5231 = vmatmul.mubr.f32.gmra.mxu0 %v5139
        %v5232 = vpop.f32.mrf.mxu0
        %v5233 = vadd.f32 0.0, %v5232
        %v5234 = vpop.f32.mrf.mxu0
        %5235 = vmatprep.mubr.f32.mxu0 0.0
        %5236 = vmatmul.mubr.f32.gmra.mxu0 %v5142
        %v5237 = vpop.f32.mrf.mxu0
        %v5238 = vadd.f32 0.0, %v5237
        %v5239 = vpop.f32.mrf.mxu0
        %5240 = vmatprep.mubr.f32.mxu0 0.0
        %5241 = vmatmul.mubr.f32.gmra.mxu0 %v5145
        %v5242 = vpop.f32.mrf.mxu0
        %v5243 = vadd.f32 0.0, %v5242
        %v5244 = vpop.f32.mrf.mxu0
        %5245 = vmatprep.mubr.f32.mxu0 0.0
        %5246 = vmatmul.mubr.f32.gmra.mxu0 %v5148
        %v5247 = vpop.f32.mrf.mxu0
        %v5248 = vadd.f32 0.0, %v5247
        %v5249 = vpop.f32.mrf.mxu0
        %5250 = vmatprep.mubr.f32.mxu0 0.0
        %5251 = vmatmul.mubr.f32.gmra.mxu0 %v5151
        %v5252 = vpop.f32.mrf.mxu0
        %v5253 = vadd.f32 0.0, %v5252
        %v5254 = vpop.f32.mrf.mxu0
        %5255 = vmatprep.mubr.f32.mxu0 0.0
        %5256 = vmatmul.mubr.f32.gmra.mxu0 %v5154
        %v5257 = vpop.f32.mrf.mxu0
        %v5258 = vadd.f32 0.0, %v5257
        %v5259 = vpop.f32.mrf.mxu0
        %5260 = vdwg.mxu0
        %v5261 = vadd.f32 %v5106, %v5223
        %v5262 = vadd.f32 %v5107, %v5228
        %v5263 = vadd.f32 %v5108, %v5233
        %v5264 = vadd.f32 %v5109, %v5238
        %v5265 = vadd.f32 %v5110, %v5243
        %v5266 = vadd.f32 %v5111, %v5248
        %v5267 = vadd.f32 %v5112, %v5253
        %v5268 = vadd.f32 %v5113, %v5258
        %s5269 = scalar_lea.vmem %s5114, 1 [#allocation3]
        %v5270 = vld [vmem:[%s5269] ss:$2 sm:$0xff]
        %s5271 = scalar_lea.vmem %s5114, 49 [#allocation3]
        %v5272 = vld [vmem:[%s5271] ss:$2 sm:$0xff]
        %s5273 = scalar_lea.vmem %s5114, 97 [#allocation3]
        %v5274 = vld [vmem:[%s5273] ss:$2 sm:$0xff]
        %s5275 = scalar_lea.vmem %s5114, 145 [#allocation3]
        %v5276 = vld [vmem:[%s5275] ss:$2 sm:$0xff]
        %s5277 = scalar_lea.vmem %s5114, 193 [#allocation3]
        %v5278 = vld [vmem:[%s5277] ss:$2 sm:$0xff]
        %s5279 = scalar_lea.vmem %s5114, 241 [#allocation3]
        %v5280 = vld [vmem:[%s5279] ss:$2 sm:$0xff]
        %s5281 = scalar_lea.vmem %s5114, 289 [#allocation3]
        %v5282 = vld [vmem:[%s5281] ss:$2 sm:$0xff]
        %s5283 = scalar_lea.vmem %s5114, 337 [#allocation3]
        %v5284 = vld [vmem:[%s5283] ss:$2 sm:$0xff]
        %s5285 = scalar_lea.vmem %s5, 56
        %v5286 = vld [vmem:[%s5285] sm:$0xff]
        %v5288 = vsel %vm431, %v5270, 0
        %v5291 = vsel %vm431, %v5272, 0
        %v5294 = vsel %vm431, %v5274, 0
        %v5297 = vsel %vm431, %v5276, 0
        %v5300 = vsel %vm431, %v5278, 0
        %v5303 = vsel %vm431, %v5280, 0
        %v5306 = vsel %vm431, %v5282, 0
        %v5309 = vsel %vm431, %v5284, 0
        %5311 = vmatprep.subr.mxu0 0.0
        %5312 = vmatpush1.msra.mxu0 0.0
        %5313 = vmatprep.subr.mxu0 0.0
        %5314 = vmatpush1.msra.mxu0 0.0
        %5315 = vmatprep.subr.mxu0 0.0
        %5316 = vmatpush1.msra.mxu0 0.0
        %5317 = vmatprep.subr.mxu0 0.0
        %5318 = vmatpush1.msra.mxu0 0.0
        %5319 = vmatprep.subr.mxu0 0.0
        %5320 = vmatpush1.msra.mxu0 0.0
        %5321 = vmatprep.subr.mxu0 0.0
        %5322 = vmatpush1.msra.mxu0 0.0
        %5323 = vmatprep.subr.mxu0 0.0
        %5324 = vmatpush1.msra.mxu0 0.0
        %5325 = vmatprep.subr.mxu0 0.0
        %5326 = vmatpush1.msra.mxu0 0.0
        %5327 = vmatprep.subr.mxu0 0.0
        %5328 = vmatpush1.msra.mxu0 0.0
        %5329 = vmatprep.subr.mxu0 0.0
        %5330 = vmatpush1.msra.mxu0 0.0
        %5331 = vmatprep.subr.mxu0 0.0
        %5332 = vmatpush1.msra.mxu0 0.0
        %5333 = vmatprep.subr.mxu0 0.0
        %5334 = vmatpush1.msra.mxu0 0.0
        %5335 = vmatprep.subr.mxu0 0.0
        %5336 = vmatpush1.msra.mxu0 0.0
        %5337 = vmatprep.subr.mxu0 0.0
        %5338 = vmatpush1.msra.mxu0 0.0
        %5339 = vmatprep.subr.mxu0 0.0
        %5340 = vmatpush1.msra.mxu0 0.0
        %5341 = vmatprep.subr.mxu0 0.0
        %5342 = vmatpush1.msra.mxu0 %v5286
        %5343 = vmatprep.subr.mxu0 0.0
        %5344 = vmatpush2.msra.mxu0 0.0
        %5345 = vmatprep.subr.mxu0 0.0
        %5346 = vmatpush2.msra.mxu0 0.0
        %5347 = vmatprep.subr.mxu0 0.0
        %5348 = vmatpush2.msra.mxu0 0.0
        %5349 = vmatprep.subr.mxu0 0.0
        %5350 = vmatpush2.msra.mxu0 0.0
        %5351 = vmatprep.subr.mxu0 0.0
        %5352 = vmatpush2.msra.mxu0 0.0
        %5353 = vmatprep.subr.mxu0 0.0
        %5354 = vmatpush2.msra.mxu0 0.0
        %5355 = vmatprep.subr.mxu0 0.0
        %5356 = vmatpush2.msra.mxu0 0.0
        %5357 = vmatprep.subr.mxu0 0.0
        %5358 = vmatpush2.msra.mxu0 0.0
        %5359 = vmatprep.subr.mxu0 0.0
        %5360 = vmatpush2.msra.mxu0 0.0
        %5361 = vmatprep.subr.mxu0 0.0
        %5362 = vmatpush2.msra.mxu0 0.0
        %5363 = vmatprep.subr.mxu0 0.0
        %5364 = vmatpush2.msra.mxu0 0.0
        %5365 = vmatprep.subr.mxu0 0.0
        %5366 = vmatpush2.msra.mxu0 0.0
        %5367 = vmatprep.subr.mxu0 0.0
        %5368 = vmatpush2.msra.mxu0 0.0
        %5369 = vmatprep.subr.mxu0 0.0
        %5370 = vmatpush2.msra.mxu0 0.0
        %5371 = vmatprep.subr.mxu0 0.0
        %5372 = vmatpush2.msra.mxu0 0.0
        %5373 = vmatprep.subr.mxu0 0.0
        %5374 = vmatpush2.msra.mxu0 0.0
        %5375 = vmatprep.mubr.f32.mxu0 0.0
        %5376 = vmatmul.mubr.f32.gmra.mxu0 %v5288
        %v5377 = vpop.f32.mrf.mxu0
        %v5378 = vadd.f32 0.0, %v5377
        %v5379 = vpop.f32.mrf.mxu0
        %5380 = vmatprep.mubr.f32.mxu0 0.0
        %5381 = vmatmul.mubr.f32.gmra.mxu0 %v5291
        %v5382 = vpop.f32.mrf.mxu0
        %v5383 = vadd.f32 0.0, %v5382
        %v5384 = vpop.f32.mrf.mxu0
        %5385 = vmatprep.mubr.f32.mxu0 0.0
        %5386 = vmatmul.mubr.f32.gmra.mxu0 %v5294
        %v5387 = vpop.f32.mrf.mxu0
        %v5388 = vadd.f32 0.0, %v5387
        %v5389 = vpop.f32.mrf.mxu0
        %5390 = vmatprep.mubr.f32.mxu0 0.0
        %5391 = vmatmul.mubr.f32.gmra.mxu0 %v5297
        %v5392 = vpop.f32.mrf.mxu0
        %v5393 = vadd.f32 0.0, %v5392
        %v5394 = vpop.f32.mrf.mxu0
        %5395 = vmatprep.mubr.f32.mxu0 0.0
        %5396 = vmatmul.mubr.f32.gmra.mxu0 %v5300
        %v5397 = vpop.f32.mrf.mxu0
        %v5398 = vadd.f32 0.0, %v5397
        %v5399 = vpop.f32.mrf.mxu0
        %5400 = vmatprep.mubr.f32.mxu0 0.0
        %5401 = vmatmul.mubr.f32.gmra.mxu0 %v5303
        %v5402 = vpop.f32.mrf.mxu0
        %v5403 = vadd.f32 0.0, %v5402
        %v5404 = vpop.f32.mrf.mxu0
        %5405 = vmatprep.mubr.f32.mxu0 0.0
        %5406 = vmatmul.mubr.f32.gmra.mxu0 %v5306
        %v5407 = vpop.f32.mrf.mxu0
        %v5408 = vadd.f32 0.0, %v5407
        %v5409 = vpop.f32.mrf.mxu0
        %5410 = vmatprep.mubr.f32.mxu0 0.0
        %5411 = vmatmul.mubr.f32.gmra.mxu0 %v5309
        %v5412 = vpop.f32.mrf.mxu0
        %v5413 = vadd.f32 0.0, %v5412
        %v5414 = vpop.f32.mrf.mxu0
        %5415 = vdwg.mxu0
        %v5416 = vadd.f32 %v5261, %v5378
        %v5417 = vadd.f32 %v5262, %v5383
        %v5418 = vadd.f32 %v5263, %v5388
        %v5419 = vadd.f32 %v5264, %v5393
        %v5420 = vadd.f32 %v5265, %v5398
        %v5421 = vadd.f32 %v5266, %v5403
        %v5422 = vadd.f32 %v5267, %v5408
        %v5423 = vadd.f32 %v5268, %v5413
        %s5424 = scalar_lea.vmem %s5114, 2 [#allocation3]
        %v5425 = vld [vmem:[%s5424] ss:$2 sm:$0xff]
        %s5426 = scalar_lea.vmem %s5114, 50 [#allocation3]
        %v5427 = vld [vmem:[%s5426] ss:$2 sm:$0xff]
        %s5428 = scalar_lea.vmem %s5114, 98 [#allocation3]
        %v5429 = vld [vmem:[%s5428] ss:$2 sm:$0xff]
        %s5430 = scalar_lea.vmem %s5114, 146 [#allocation3]
        %v5431 = vld [vmem:[%s5430] ss:$2 sm:$0xff]
        %s5432 = scalar_lea.vmem %s5114, 194 [#allocation3]
        %v5433 = vld [vmem:[%s5432] ss:$2 sm:$0xff]
        %s5434 = scalar_lea.vmem %s5114, 242 [#allocation3]
        %v5435 = vld [vmem:[%s5434] ss:$2 sm:$0xff]
        %s5436 = scalar_lea.vmem %s5114, 290 [#allocation3]
        %v5437 = vld [vmem:[%s5436] ss:$2 sm:$0xff]
        %s5438 = scalar_lea.vmem %s5114, 338 [#allocation3]
        %v5439 = vld [vmem:[%s5438] ss:$2 sm:$0xff]
        %s5440 = scalar_lea.vmem %s5, 64
        %v5441 = vld [vmem:[%s5440] sm:$0xff]
        %v5443 = vsel %vm431, %v5425, 0
        %v5446 = vsel %vm431, %v5427, 0
        %v5449 = vsel %vm431, %v5429, 0
        %v5452 = vsel %vm431, %v5431, 0
        %v5455 = vsel %vm431, %v5433, 0
        %v5458 = vsel %vm431, %v5435, 0
        %v5461 = vsel %vm431, %v5437, 0
        %v5464 = vsel %vm431, %v5439, 0
        %5466 = vmatprep.subr.mxu0 0.0
        %5467 = vmatpush1.msra.mxu0 0.0
        %5468 = vmatprep.subr.mxu0 0.0
        %5469 = vmatpush1.msra.mxu0 0.0
        %5470 = vmatprep.subr.mxu0 0.0
        %5471 = vmatpush1.msra.mxu0 0.0
        %5472 = vmatprep.subr.mxu0 0.0
        %5473 = vmatpush1.msra.mxu0 0.0
        %5474 = vmatprep.subr.mxu0 0.0
        %5475 = vmatpush1.msra.mxu0 0.0
        %5476 = vmatprep.subr.mxu0 0.0
        %5477 = vmatpush1.msra.mxu0 0.0
        %5478 = vmatprep.subr.mxu0 0.0
        %5479 = vmatpush1.msra.mxu0 0.0
        %5480 = vmatprep.subr.mxu0 0.0
        %5481 = vmatpush1.msra.mxu0 0.0
        %5482 = vmatprep.subr.mxu0 0.0
        %5483 = vmatpush1.msra.mxu0 0.0
        %5484 = vmatprep.subr.mxu0 0.0
        %5485 = vmatpush1.msra.mxu0 0.0
        %5486 = vmatprep.subr.mxu0 0.0
        %5487 = vmatpush1.msra.mxu0 0.0
        %5488 = vmatprep.subr.mxu0 0.0
        %5489 = vmatpush1.msra.mxu0 0.0
        %5490 = vmatprep.subr.mxu0 0.0
        %5491 = vmatpush1.msra.mxu0 0.0
        %5492 = vmatprep.subr.mxu0 0.0
        %5493 = vmatpush1.msra.mxu0 0.0
        %5494 = vmatprep.subr.mxu0 0.0
        %5495 = vmatpush1.msra.mxu0 0.0
        %5496 = vmatprep.subr.mxu0 0.0
        %5497 = vmatpush1.msra.mxu0 %v5441
        %5498 = vmatprep.subr.mxu0 0.0
        %5499 = vmatpush2.msra.mxu0 0.0
        %5500 = vmatprep.subr.mxu0 0.0
        %5501 = vmatpush2.msra.mxu0 0.0
        %5502 = vmatprep.subr.mxu0 0.0
        %5503 = vmatpush2.msra.mxu0 0.0
        %5504 = vmatprep.subr.mxu0 0.0
        %5505 = vmatpush2.msra.mxu0 0.0
        %5506 = vmatprep.subr.mxu0 0.0
        %5507 = vmatpush2.msra.mxu0 0.0
        %5508 = vmatprep.subr.mxu0 0.0
        %5509 = vmatpush2.msra.mxu0 0.0
        %5510 = vmatprep.subr.mxu0 0.0
        %5511 = vmatpush2.msra.mxu0 0.0
        %5512 = vmatprep.subr.mxu0 0.0
        %5513 = vmatpush2.msra.mxu0 0.0
        %5514 = vmatprep.subr.mxu0 0.0
        %5515 = vmatpush2.msra.mxu0 0.0
        %5516 = vmatprep.subr.mxu0 0.0
        %5517 = vmatpush2.msra.mxu0 0.0
        %5518 = vmatprep.subr.mxu0 0.0
        %5519 = vmatpush2.msra.mxu0 0.0
        %5520 = vmatprep.subr.mxu0 0.0
        %5521 = vmatpush2.msra.mxu0 0.0
        %5522 = vmatprep.subr.mxu0 0.0
        %5523 = vmatpush2.msra.mxu0 0.0
        %5524 = vmatprep.subr.mxu0 0.0
        %5525 = vmatpush2.msra.mxu0 0.0
        %5526 = vmatprep.subr.mxu0 0.0
        %5527 = vmatpush2.msra.mxu0 0.0
        %5528 = vmatprep.subr.mxu0 0.0
        %5529 = vmatpush2.msra.mxu0 0.0
        %5530 = vmatprep.mubr.f32.mxu0 0.0
        %5531 = vmatmul.mubr.f32.gmra.mxu0 %v5443
        %v5532 = vpop.f32.mrf.mxu0
        %v5533 = vadd.f32 0.0, %v5532
        %v5534 = vpop.f32.mrf.mxu0
        %5535 = vmatprep.mubr.f32.mxu0 0.0
        %5536 = vmatmul.mubr.f32.gmra.mxu0 %v5446
        %v5537 = vpop.f32.mrf.mxu0
        %v5538 = vadd.f32 0.0, %v5537
        %v5539 = vpop.f32.mrf.mxu0
        %5540 = vmatprep.mubr.f32.mxu0 0.0
        %5541 = vmatmul.mubr.f32.gmra.mxu0 %v5449
        %v5542 = vpop.f32.mrf.mxu0
        %v5543 = vadd.f32 0.0, %v5542
        %v5544 = vpop.f32.mrf.mxu0
        %5545 = vmatprep.mubr.f32.mxu0 0.0
        %5546 = vmatmul.mubr.f32.gmra.mxu0 %v5452
        %v5547 = vpop.f32.mrf.mxu0
        %v5548 = vadd.f32 0.0, %v5547
        %v5549 = vpop.f32.mrf.mxu0
        %5550 = vmatprep.mubr.f32.mxu0 0.0
        %5551 = vmatmul.mubr.f32.gmra.mxu0 %v5455
        %v5552 = vpop.f32.mrf.mxu0
        %v5553 = vadd.f32 0.0, %v5552
        %v5554 = vpop.f32.mrf.mxu0
        %5555 = vmatprep.mubr.f32.mxu0 0.0
        %5556 = vmatmul.mubr.f32.gmra.mxu0 %v5458
        %v5557 = vpop.f32.mrf.mxu0
        %v5558 = vadd.f32 0.0, %v5557
        %v5559 = vpop.f32.mrf.mxu0
        %5560 = vmatprep.mubr.f32.mxu0 0.0
        %5561 = vmatmul.mubr.f32.gmra.mxu0 %v5461
        %v5562 = vpop.f32.mrf.mxu0
        %v5563 = vadd.f32 0.0, %v5562
        %v5564 = vpop.f32.mrf.mxu0
        %5565 = vmatprep.mubr.f32.mxu0 0.0
        %5566 = vmatmul.mubr.f32.gmra.mxu0 %v5464
        %v5567 = vpop.f32.mrf.mxu0
        %v5568 = vadd.f32 0.0, %v5567
        %v5569 = vpop.f32.mrf.mxu0
        %5570 = vdwg.mxu0
        %v5571 = vadd.f32 %v5416, %v5533
        %v5572 = vadd.f32 %v5417, %v5538
        %v5573 = vadd.f32 %v5418, %v5543
        %v5574 = vadd.f32 %v5419, %v5548
        %v5575 = vadd.f32 %v5420, %v5553
        %v5576 = vadd.f32 %v5421, %v5558
        %v5577 = vadd.f32 %v5422, %v5563
        %v5578 = vadd.f32 %v5423, %v5568
        %v5579 = vld [vmem:[%s6] sm:$0x1]
        %v5581 = vlaneseq
        %v5582 = vshrl.u32 %v5581, 7
        %v5583 = vsub.s32 0, %v5582
        %v5584 = vrot.slane %v5579, %v5583
        %v5586 = vmul.f32 %v5571, %v5584
        %v5587 = vmul.f32 %v5572, %v5584
        %v5588 = vmul.f32 %v5573, %v5584
        %v5589 = vmul.f32 %v5574, %v5584
        %v5590 = vmul.f32 %v5575, %v5584
        %v5591 = vmul.f32 %v5576, %v5584
        %v5592 = vmul.f32 %v5577, %v5584
        %v5593 = vmul.f32 %v5578, %v5584
        %v5594 = vld [vmem:[%s7] sm:$0x1]
        %v5596 = vlaneseq
        %v5597 = vshrl.u32 %v5596, 7
        %v5598 = vsub.s32 0, %v5597
        %v5599 = vrot.slane %v5594, %v5598
        %v5601 = vadd.f32 %v5586, %v5599
        %v5602 = vadd.f32 %v5587, %v5599
        %v5603 = vadd.f32 %v5588, %v5599
        %v5604 = vadd.f32 %v5589, %v5599
        %v5605 = vadd.f32 %v5590, %v5599
        %v5606 = vadd.f32 %v5591, %v5599
        %v5607 = vadd.f32 %v5592, %v5599
        %v5608 = vadd.f32 %v5593, %v5599
        %v5609 = vld [vmem:[%s384] ss:$2 sm:$0xff]
        %s5610 = scalar_lea.vmem %s384, 32
        %v5611 = vld [vmem:[%s5610] ss:$2 sm:$0xff]
        %s5612 = scalar_lea.vmem %s384, 64
        %v5613 = vld [vmem:[%s5612] ss:$2 sm:$0xff]
        %s5614 = scalar_lea.vmem %s384, 96
        %v5615 = vld [vmem:[%s5614] ss:$2 sm:$0xff]
        %s5616 = scalar_lea.vmem %s384, 128
        %v5617 = vld [vmem:[%s5616] ss:$2 sm:$0xff]
        %s5618 = scalar_lea.vmem %s384, 160
        %v5619 = vld [vmem:[%s5618] ss:$2 sm:$0xff]
        %s5620 = scalar_lea.vmem %s384, 192
        %v5621 = vld [vmem:[%s5620] ss:$2 sm:$0xff]
        %s5622 = scalar_lea.vmem %s384, 224
        %v5623 = vld [vmem:[%s5622] ss:$2 sm:$0xff]
        %v5624 = vld [vmem:[%s8] sm:$0xf]
        %v5626 = vsel %vm385, %v5609, 0
        %v5629 = vsel %vm385, %v5611, 0
        %v5632 = vsel %vm385, %v5613, 0
        %v5635 = vsel %vm385, %v5615, 0
        %v5638 = vsel %vm385, %v5617, 0
        %v5641 = vsel %vm385, %v5619, 0
        %v5644 = vsel %vm385, %v5621, 0
        %v5647 = vsel %vm385, %v5623, 0
        %v5650 = vsel %vm783, %v5624, 0
        %5652 = vmatprep.subr.mxu0 0.0
        %5653 = vmatpush1.msra.mxu0 0.0
        %5654 = vmatprep.subr.mxu0 0.0
        %5655 = vmatpush1.msra.mxu0 0.0
        %5656 = vmatprep.subr.mxu0 0.0
        %5657 = vmatpush1.msra.mxu0 0.0
        %5658 = vmatprep.subr.mxu0 0.0
        %5659 = vmatpush1.msra.mxu0 0.0
        %5660 = vmatprep.subr.mxu0 0.0
        %5661 = vmatpush1.msra.mxu0 0.0
        %5662 = vmatprep.subr.mxu0 0.0
        %5663 = vmatpush1.msra.mxu0 0.0
        %5664 = vmatprep.subr.mxu0 0.0
        %5665 = vmatpush1.msra.mxu0 0.0
        %5666 = vmatprep.subr.mxu0 0.0
        %5667 = vmatpush1.msra.mxu0 0.0
        %5668 = vmatprep.subr.mxu0 0.0
        %5669 = vmatpush1.msra.mxu0 0.0
        %5670 = vmatprep.subr.mxu0 0.0
        %5671 = vmatpush1.msra.mxu0 0.0
        %5672 = vmatprep.subr.mxu0 0.0
        %5673 = vmatpush1.msra.mxu0 0.0
        %5674 = vmatprep.subr.mxu0 0.0
        %5675 = vmatpush1.msra.mxu0 0.0
        %5676 = vmatprep.subr.mxu0 0.0
        %5677 = vmatpush1.msra.mxu0 0.0
        %5678 = vmatprep.subr.mxu0 0.0
        %5679 = vmatpush1.msra.mxu0 0.0
        %5680 = vmatprep.subr.mxu0 0.0
        %5681 = vmatpush1.msra.mxu0 0.0
        %5682 = vmatprep.subr.mxu0 0.0
        %5683 = vmatpush1.msra.mxu0 %v5650
        %5684 = vmatprep.subr.mxu0 0.0
        %5685 = vmatpush2.msra.mxu0 0.0
        %5686 = vmatprep.subr.mxu0 0.0
        %5687 = vmatpush2.msra.mxu0 0.0
        %5688 = vmatprep.subr.mxu0 0.0
        %5689 = vmatpush2.msra.mxu0 0.0
        %5690 = vmatprep.subr.mxu0 0.0
        %5691 = vmatpush2.msra.mxu0 0.0
        %5692 = vmatprep.subr.mxu0 0.0
        %5693 = vmatpush2.msra.mxu0 0.0
        %5694 = vmatprep.subr.mxu0 0.0
        %5695 = vmatpush2.msra.mxu0 0.0
        %5696 = vmatprep.subr.mxu0 0.0
        %5697 = vmatpush2.msra.mxu0 0.0
        %5698 = vmatprep.subr.mxu0 0.0
        %5699 = vmatpush2.msra.mxu0 0.0
        %5700 = vmatprep.subr.mxu0 0.0
        %5701 = vmatpush2.msra.mxu0 0.0
        %5702 = vmatprep.subr.mxu0 0.0
        %5703 = vmatpush2.msra.mxu0 0.0
        %5704 = vmatprep.subr.mxu0 0.0
        %5705 = vmatpush2.msra.mxu0 0.0
        %5706 = vmatprep.subr.mxu0 0.0
        %5707 = vmatpush2.msra.mxu0 0.0
        %5708 = vmatprep.subr.mxu0 0.0
        %5709 = vmatpush2.msra.mxu0 0.0
        %5710 = vmatprep.subr.mxu0 0.0
        %5711 = vmatpush2.msra.mxu0 0.0
        %5712 = vmatprep.subr.mxu0 0.0
        %5713 = vmatpush2.msra.mxu0 0.0
        %5714 = vmatprep.subr.mxu0 0.0
        %5715 = vmatpush2.msra.mxu0 0.0
        %5716 = vmatprep.mubr.f32.mxu0 0.0
        %5717 = vmatmul.mubr.f32.gmra.mxu0 %v5626
        %v5718 = vpop.f32.mrf.mxu0
        %v5719 = vadd.f32 0.0, %v5718
        %v5720 = vpop.f32.mrf.mxu0
        %5721 = vmatprep.mubr.f32.mxu0 0.0
        %5722 = vmatmul.mubr.f32.gmra.mxu0 %v5629
        %v5723 = vpop.f32.mrf.mxu0
        %v5724 = vadd.f32 0.0, %v5723
        %v5725 = vpop.f32.mrf.mxu0
        %5726 = vmatprep.mubr.f32.mxu0 0.0
        %5727 = vmatmul.mubr.f32.gmra.mxu0 %v5632
        %v5728 = vpop.f32.mrf.mxu0
        %v5729 = vadd.f32 0.0, %v5728
        %v5730 = vpop.f32.mrf.mxu0
        %5731 = vmatprep.mubr.f32.mxu0 0.0
        %5732 = vmatmul.mubr.f32.gmra.mxu0 %v5635
        %v5733 = vpop.f32.mrf.mxu0
        %v5734 = vadd.f32 0.0, %v5733
        %v5735 = vpop.f32.mrf.mxu0
        %5736 = vmatprep.mubr.f32.mxu0 0.0
        %5737 = vmatmul.mubr.f32.gmra.mxu0 %v5638
        %v5738 = vpop.f32.mrf.mxu0
        %v5739 = vadd.f32 0.0, %v5738
        %v5740 = vpop.f32.mrf.mxu0
        %5741 = vmatprep.mubr.f32.mxu0 0.0
        %5742 = vmatmul.mubr.f32.gmra.mxu0 %v5641
        %v5743 = vpop.f32.mrf.mxu0
        %v5744 = vadd.f32 0.0, %v5743
        %v5745 = vpop.f32.mrf.mxu0
        %5746 = vmatprep.mubr.f32.mxu0 0.0
        %5747 = vmatmul.mubr.f32.gmra.mxu0 %v5644
        %v5748 = vpop.f32.mrf.mxu0
        %v5749 = vadd.f32 0.0, %v5748
        %v5750 = vpop.f32.mrf.mxu0
        %5751 = vmatprep.mubr.f32.mxu0 0.0
        %5752 = vmatmul.mubr.f32.gmra.mxu0 %v5647
        %v5753 = vpop.f32.mrf.mxu0
        %v5754 = vadd.f32 0.0, %v5753
        %v5755 = vpop.f32.mrf.mxu0
        %5756 = vdwg.mxu0
        %v5757 = vld [vmem:[%s9] sm:$0x1]
        %v5759 = vlaneseq
        %v5760 = vshrl.u32 %v5759, 7
        %v5761 = vsub.s32 0, %v5760
        %v5762 = vrot.slane %v5757, %v5761
        %v5764 = vmul.f32 %v5719, %v5762
        %v5765 = vmul.f32 %v5724, %v5762
        %v5766 = vmul.f32 %v5729, %v5762
        %v5767 = vmul.f32 %v5734, %v5762
        %v5768 = vmul.f32 %v5739, %v5762
        %v5769 = vmul.f32 %v5744, %v5762
        %v5770 = vmul.f32 %v5749, %v5762
        %v5771 = vmul.f32 %v5754, %v5762
        %v5772 = vld [vmem:[%s10] sm:$0x1]
        %v5774 = vlaneseq
        %v5775 = vshrl.u32 %v5774, 7
        %v5776 = vsub.s32 0, %v5775
        %v5777 = vrot.slane %v5772, %v5776
        %v5779 = vadd.f32 %v5764, %v5777
        %v5780 = vadd.f32 %v5765, %v5777
        %v5781 = vadd.f32 %v5766, %v5777
        %v5782 = vadd.f32 %v5767, %v5777
        %v5783 = vadd.f32 %v5768, %v5777
        %v5784 = vadd.f32 %v5769, %v5777
        %v5785 = vadd.f32 %v5770, %v5777
        %v5786 = vadd.f32 %v5771, %v5777
        %v5787 = vadd.f32 %v5601, %v5779
        %v5788 = vadd.f32 %v5602, %v5780
        %v5789 = vadd.f32 %v5603, %v5781
        %v5790 = vadd.f32 %v5604, %v5782
        %v5791 = vadd.f32 %v5605, %v5783
        %v5792 = vadd.f32 %v5606, %v5784
        %v5793 = vadd.f32 %v5607, %v5785
        %v5794 = vadd.f32 %v5608, %v5786
        %5795 = vst.msk [vmem:[%s379] sm:$0xff] %vm431, %v5787
        %5796 = vst.msk [vmem:[%s379 + $0x8] sm:$0xff] %vm431, %v5788
        %5797 = vst.msk [vmem:[%s379 + $0x10] sm:$0xff] %vm431, %v5789
        %5798 = vst.msk [vmem:[%s379 + $0x18] sm:$0xff] %vm431, %v5790
        %5799 = vst.msk [vmem:[%s379 + $0x20] sm:$0xff] %vm431, %v5791
        %5800 = vst.msk [vmem:[%s379 + $0x28] sm:$0xff] %vm431, %v5792
        %5801 = vst.msk [vmem:[%s379 + $0x30] sm:$0xff] %vm431, %v5793
        %5802 = vst.msk [vmem:[%s379 + $0x38] sm:$0xff] %vm431, %v5794
        %s5803 = sand.u32 %s269, 1
        %s5804 = scalar_lea.sflag [#allocation5], %s5803
        %s5805 = sand.u32 %s269, 1
        %s5806 = smul.addr %s5805, 64
        %s5807 = scalar_lea.vmem [#allocation4], %s5806
        // Predicated region
        $region65: #{tpu_custom_call.1} parent=63 // pred_check
          %p5808 = pneg %p279
        $region66: #{tpu_custom_call.1} parent=63 // pred_check_branch
          %5810 = sbr.rel (%p5808) target = $region68
        $region67: #{tpu_custom_call.1} parent=63 // pred_region
          %s5812 = ssub.s32 1024, 1024
          %5813 = vsyncadd %s5804, %s5812
          %s5814 = smul.addr %s25, 8
          %s5815 = smul.addr %s5814, 128
          %s5816 = scalar_lea.hbm %s11, %s5815
          %s5817 = sshll.u32 %s5807, 4
          %s5818 = int_to_ptr.vmem [resolvable:$true] %s5817
          %5823 = dma.vmem_to_hbm [thread:$0]  %s5818, 1024, %s5816, %s5804, 128, 128, 8
        $region68: #{tpu_custom_call.1} parent=63 // pred_fallthru
          _
      $region64: #{tpu_custom_call.1} parent=5 // pred_fallthru
        _
      %p5824 = scmp.le.s32.totalorder 2, %s20
      // Predicated region
      $region69: #{tpu_custom_call.1} parent=5 // pred_check
        %p5825 = pneg %p5824
      $region70: #{tpu_custom_call.1} parent=5 // pred_check_branch
        %5827 = sbr.rel (%p5825) target = $region72
      $region71: #{tpu_custom_call.1} parent=5 // pred_region
        %s5828 = ssub.s32 %s20, 2
        // Predicated region
        $region73: #{tpu_custom_call.1} parent=71 // pred_check
          %p5829 = pneg %p285
        $region74: #{tpu_custom_call.1} parent=71 // pred_check_branch
          %5831 = sbr.rel (%p5829) target = $region76
        $region75: #{tpu_custom_call.1} parent=71 // pred_region
          %s5832 = sand.u32 %s270, 1
          %s5833 = scalar_lea.sflag [#allocation5], %s5832
          %s5834 = sand.u32 %s270, 1
          %s5835 = smul.addr %s5834, 64
          %s5836 = scalar_lea.vmem [#allocation4], %s5835
          %5837 = dma.done %s5833, 1024
        $region76: #{tpu_custom_call.1} parent=71 // pred_fallthru
          _
      $region72: #{tpu_custom_call.1} parent=5 // pred_fallthru
        _
    $region6: #{tpu_custom_call.1} parent=1 // loop_footer
      %s24 = sadd.s32 1, %s20
    $region7: #{tpu_custom_call.1} parent=1 // loop_footer_branch
      %19 = sbr.rel target = $region3
    $region8: #{tpu_custom_call.1} parent=1 // loop_exit
      _
    %5838 = vsyncpa [#allocation5], 1
    %s5839 = scalar_lea.sflag [#allocation5], 1
    %5840 = vsyncpa %s5839, 1

</llo_original>
